<compile_context>
chip_gen: v5e
topology: v5e:2x2
jax: 0.10.0
libtpu: 0.0.40
codegen_flags: <defaults>
</compile_context>

<pallas_src>
import numpy as np
import jax
import jax.numpy as jnp
from jax.experimental import pallas as pl
from jax.experimental.pallas import tpu as pltpu

N = 2          # batch
H = W = 16     # input spatial size
CIN = 20       # Conv2d(20, 10) input channels
C1 = 10        # hidden channels
C2 = 1         # output channels of second conv
OUT = 100      # AdaptiveMaxPool2d target size
EPS = 1e-5     # BatchNorm2d eps

H1 = H - 1     # 15 : spatial after first MaxPool2d(2, stride=1)
H2 = H1 - 1    # 14 : spatial after second MaxPool2d(2, stride=1)
WP = W + 2     # 18 : padded input width
LC1 = W * C1   # 160 : conv1 output lanes  (w, cout)
LP1 = H1 * C1  # 150 : pooled lanes        (w in 0..14, c)
R1 = N * H     # 32  : conv1 output rows   (n, h)
RP = N * H1    # 30  : pooled rows         (n, h in 0..14)
OPAD = 128     # lane-padded output width


def decoder_kernel(xp_ref, w1b_ref, b1_ref, tsh_ref, comp_ref, amat_ref,
                   gam_ref, bet_ref, w2b_ref, sdn_ref, sup_ref, b2_ref,
                   tw1_ref, se_ref, set2_ref, out_ref):
    # xp_ref   : (N, 18, 360)   zero-padded input, lanes = (w_in, cin)
    # w1b_ref  : (3, 360, 160)  banded conv1 weights (one band per dy)
    # b1_ref   : (1, 160)       conv1 bias tiled over w
    # tsh_ref  : (160, 150)     lane shift-by-C1 selector (maxpool1, w direction)
    # comp_ref : (30, 31)       row compaction (drop the invalid h=15 rows)
    # amat_ref : (150, 150)     per-channel averaging matrix (includes /450)
    # gam/bet  : (1, 150)       BatchNorm affine params tiled over w
    # w2b_ref  : (3, 150, 15)   banded conv2 weights (one band per dy)
    # sdn/sup  : (30, 30)       conv2 row-shift matrices (dy=0 / dy=2 taps)
    # b2_ref   : (1, 1)         conv2 bias
    # tw1_ref  : (15, 14)       lane shift-by-1 selector (maxpool2, w direction)
    # se_ref   : (200, 14)      stacked start|end row selectors (adaptive pool)
    # set2_ref : (14, 256)      stacked start|end column selectors, lane padded
    # out_ref  : (N, 100, 128)  lane-dense output
    xp = xp_ref[...]                                             # (2, 18, 360)

    # ---- Conv2d(20 -> 10, 3x3, pad=1): 3 banded MXU matmuls (K=360) -----------
    acc = jnp.zeros((R1, LC1), jnp.float32)
    for dy in range(3):
        slab = xp[:, dy:dy + H, :].reshape(R1, WP * CIN)         # (32, 360)
        acc = acc + jnp.dot(slab, w1b_ref[dy],
                            preferred_element_type=jnp.float32)
    y1 = acc + b1_ref[...]                                       # (32, 160)

    # ---- MaxPool2d(2x2, stride=1): h via sublane slices, w via lane-shift
    #      matmul, then an MXU row-compaction drops the invalid h=15 rows -------
    hm = jnp.maximum(y1[0:R1 - 1, :], y1[1:R1, :])               # (31, 160)
    wm = jnp.maximum(
        hm[:, 0:LP1],
        jnp.dot(hm, tsh_ref[...], preferred_element_type=jnp.float32))
    p1 = jnp.dot(comp_ref[...], wm,
                 preferred_element_type=jnp.float32)             # (30, 150)

    # ---- BatchNorm2d(10), training-mode batch stats, computed on the MXU ------
    ones_r = jnp.ones((1, RP), jnp.float32)
    rs1 = jnp.dot(ones_r, p1, preferred_element_type=jnp.float32)         # (1,150)
    rs2 = jnp.dot(ones_r, p1 * p1, preferred_element_type=jnp.float32)    # (1,150)
    mean_l = jnp.dot(rs1, amat_ref[...], preferred_element_type=jnp.float32)
    ex2_l = jnp.dot(rs2, amat_ref[...], preferred_element_type=jnp.float32)
    var_l = ex2_l - mean_l * mean_l                              # biased variance
    scale_l = gam_ref[...] * jax.lax.rsqrt(var_l + EPS)
    bias_l = bet_ref[...] - mean_l * scale_l
    r1 = jnp.maximum(p1 * scale_l + bias_l, 0.0)                 # ReLU, (30, 150)

    # ---- Conv2d(10 -> 1, 3x3, pad=1): banded matmuls + MXU row shifts ---------
    y_a = jnp.dot(r1, w2b_ref[0], preferred_element_type=jnp.float32)     # dy=0
    y_b = jnp.dot(r1, w2b_ref[1], preferred_element_type=jnp.float32)     # dy=1
    y_c = jnp.dot(r1, w2b_ref[2], preferred_element_type=jnp.float32)     # dy=2
    y2 = (jnp.dot(sdn_ref[...], y_a, preferred_element_type=jnp.float32)
          + y_b
          + jnp.dot(sup_ref[...], y_c, preferred_element_type=jnp.float32)
          + b2_ref[...])                                         # (30, 15)

    # ---- MaxPool2d(2x2, stride=1) + ReLU --------------------------------------
    hm2 = jnp.maximum(y2[0:RP - 1, :], y2[1:RP, :])              # (29, 15)
    p2 = jnp.maximum(
        hm2[:, 0:H2],
        jnp.dot(hm2, tw1_ref[...], preferred_element_type=jnp.float32))
    p2 = jnp.maximum(p2, 0.0)                                    # (29, 14)

    # ---- AdaptiveMaxPool2d((100,100)) from 14x14: every adaptive window has
    #      size <= 2 per axis, so the window max equals the max over its 4
    #      corners; realised as 2 selector matmuls per batch + quadrant max.
    #      Output lanes are padded to 128 so every store is a full vst. ---------
    se = se_ref[...]
    set2 = set2_ref[...]
    for n in range(N):
        pn = p2[n * H1:n * H1 + H2, :]                           # (14, 14)
        u = jnp.dot(pn, set2, preferred_element_type=jnp.float32)     # (14, 256)
        v = jnp.dot(se, u, preferred_element_type=jnp.float32)        # (200, 256)
        q = jnp.maximum(
            jnp.maximum(v[0:OUT, 0:OPAD], v[0:OUT, OPAD:2 * OPAD]),
            jnp.maximum(v[OUT:2 * OUT, 0:OPAD], v[OUT:2 * OUT, OPAD:2 * OPAD]))
        out_ref[n] = q                                           # lane-dense (100,128)


def _adaptive_selectors(hin, hout):
    idx = np.arange(hout)
    start = np.floor(idx * hin / hout).astype(np.int64)
    end = (np.ceil((idx + 1) * hin / hout) - 1).astype(np.int64)
    return start, end


def _static_constants():
    # lane shift-by-C1 selector (maxpool1 w direction): shifted[., j] = x[., j+10]
    tsh = np.zeros((LC1, LP1), np.float32)
    tsh[np.arange(LP1) + C1, np.arange(LP1)] = 1.0
    # row compaction: (n*15+h) <- (n*16+h), h in 0..14
    comp = np.zeros((RP, R1 - 1), np.float32)
    for n in range(N):
        for h in range(H1):
            comp[n * H1 + h, n * H + h] = 1.0
    # per-channel averaging matrix over (w, c) lanes, includes 1/450
    lane_c = np.arange(LP1) % C1
    amat = (lane_c[:, None] == lane_c[None, :]).astype(np.float32) / float(N * H1 * H1)
    # conv2 row-shift matrices (zero-pad at batch-internal h borders)
    r = np.arange(RP)
    sdn = np.zeros((RP, RP), np.float32)
    m = r % H1 != 0
    sdn[r[m], r[m] - 1] = 1.0
    sup = np.zeros((RP, RP), np.float32)
    m = r % H1 != H1 - 1
    sup[r[m], r[m] + 1] = 1.0
    # lane shift-by-1 selector (maxpool2 w direction)
    tw1 = np.zeros((H1, H2), np.float32)
    tw1[np.arange(H2) + 1, np.arange(H2)] = 1.0
    # adaptive-pool one-hot selectors (start & end stacked; columns lane-padded)
    start, end = _adaptive_selectors(H2, OUT)
    se = np.zeros((2 * OUT, H2), np.float32)
    se[np.arange(OUT), start] = 1.0
    se[OUT + np.arange(OUT), end] = 1.0
    set2 = np.zeros((H2, 2 * OPAD), np.float32)
    set2[start, np.arange(OUT)] = 1.0
    set2[end, OPAD + np.arange(OUT)] = 1.0
    # band placement tensors for the convolution weights
    m1 = np.zeros((3, WP, W), np.float32)        # conv1: w_in == w_out + dx
    for dx in range(3):
        m1[dx, np.arange(W) + dx, np.arange(W)] = 1.0
    m2 = np.zeros((3, H1, H1), np.float32)       # conv2: w_in == w_out + dx - 1
    for dx in range(3):
        wo = np.arange(H1)
        wi = wo + dx - 1
        ok = (wi >= 0) & (wi < H1)
        m2[dx, wi[ok], wo[ok]] = 1.0
    return tsh, comp, amat, sdn, sup, tw1, se, set2, m1, m2


_CONSTS = _static_constants()


def decoder_forward(x_nchw, w1_oihw, b1, gamma, beta, w2_oihw, b2):
    """Pallas forward: x (N,20,H,W) float32 -> (N,1,100,100) float32."""
    tsh, comp, amat, sdn, sup, tw1, se, set2, m1, m2 = _CONSTS

    x = jnp.transpose(x_nchw, (0, 2, 3, 1)).astype(jnp.float32)       # NHWC
    xp = jnp.pad(x, ((0, 0), (1, 1), (1, 1), (0, 0)))                 # (2,18,18,20)
    xp_flat = xp.reshape(N, H + 2, WP * CIN)                          # (2,18,360)

    # banded conv1 weights: w1b[dy, w_in*CIN+c, w_out*C1+k] = w1[dy, w_in-w_out, c, k]
    w1_t = jnp.transpose(w1_oihw, (2, 3, 1, 0)).astype(jnp.float32)   # (3,3,20,10)
    w1b = jnp.einsum('xio,dxck->dicok', jnp.asarray(m1), w1_t)
    w1b = w1b.reshape(3, WP * CIN, W * C1)                            # (3,360,160)

    # banded conv2 weights: w2b[dy, w_in*C1+c, w_out] = w2[dy, w_in-w_out+1, c]
    w2_t = jnp.transpose(w2_oihw[0], (1, 2, 0)).astype(jnp.float32)   # (3,3,10)
    w2b = jnp.einsum('xio,dxc->dico', jnp.asarray(m2), w2_t)
    w2b = w2b.reshape(3, LP1, H1)                                     # (3,150,15)

    b1t = jnp.tile(b1.astype(jnp.float32), W).reshape(1, LC1)         # (1,160)
    gam = jnp.tile(gamma.astype(jnp.float32), H1).reshape(1, LP1)     # (1,150)
    bet = jnp.tile(beta.astype(jnp.float32), H1).reshape(1, LP1)      # (1,150)
    b2r = b2.astype(jnp.float32).reshape(1, 1)

    vmem = pl.BlockSpec(memory_space=pltpu.MemorySpace.VMEM)
    out = pl.pallas_call(
        decoder_kernel,
        out_shape=jax.ShapeDtypeStruct((N, OUT, OPAD), jnp.float32),
        in_specs=[vmem] * 15,
        out_specs=vmem,
    )(xp_flat, w1b, b1t,
      jnp.asarray(tsh), jnp.asarray(comp), jnp.asarray(amat),
      gam, bet, w2b, jnp.asarray(sdn), jnp.asarray(sup), b2r,
      jnp.asarray(tw1), jnp.asarray(se), jnp.asarray(set2))
    # drop the lane padding and restore the PyTorch (N, 1, 100, 100) layout
    return out[:, :, :OUT].reshape(N, C2, OUT, OUT)


def reference_forward(x, w1_oihw, b1, gamma, beta, w2_oihw, b2):
    """Pure-JAX reference mirroring the PyTorch forward (NCHW)."""
    dn = ('NCHW', 'OIHW', 'NCHW')
    y = jax.lax.conv_general_dilated(x, w1_oihw, (1, 1), ((1, 1), (1, 1)),
                                     dimension_numbers=dn)
    y = y + b1.reshape(1, C1, 1, 1)
    y = jax.lax.reduce_window(y, -jnp.inf, jax.lax.max,
                              (1, 1, 2, 2), (1, 1, 1, 1), 'VALID')
    mean = jnp.mean(y, axis=(0, 2, 3), keepdims=True)
    var = jnp.mean((y - mean) ** 2, axis=(0, 2, 3), keepdims=True)
    y = (y - mean) / jnp.sqrt(var + EPS)
    y = y * gamma.reshape(1, C1, 1, 1) + beta.reshape(1, C1, 1, 1)
    y = jnp.maximum(y, 0.0)
    y = jax.lax.conv_general_dilated(y, w2_oihw, (1, 1), ((1, 1), (1, 1)),
                                     dimension_numbers=dn)
    y = y + b2.reshape(1, C2, 1, 1)
    y = jax.lax.reduce_window(y, -jnp.inf, jax.lax.max,
                              (1, 1, 2, 2), (1, 1, 1, 1), 'VALID')
    y = jnp.maximum(y, 0.0)                                   # (N, 1, 14, 14)
    start, end = _adaptive_selectors(H2, OUT)
    ys = y[:, :, start, :]
    ye = y[:, :, end, :]
    return jnp.maximum(
        jnp.maximum(ys[:, :, :, start], ys[:, :, :, end]),
        jnp.maximum(ye[:, :, :, start], ye[:, :, :, end]))


if __name__ == "__main__":
    key = jax.random.PRNGKey(0)
    kx, k1, kb1, kg, kb, k2, kb2 = jax.random.split(key, 7)

    # Input (PyTorch NCHW convention), small shapes implied by the module.
    x = jax.random.normal(kx, (N, CIN, H, W), jnp.float32)

    # Deterministic synthetic parameters (shapes follow the module's __init__).
    w1 = jax.random.normal(k1, (C1, CIN, 3, 3), jnp.float32) * (1.0 / np.sqrt(CIN * 9))
    b1 = jax.random.normal(kb1, (C1,), jnp.float32) * 0.05
    gamma = 1.0 + 0.1 * jax.random.normal(kg, (C1,), jnp.float32)
    beta = 0.1 * jax.random.normal(kb, (C1,), jnp.float32)
    w2 = jax.random.normal(k2, (C2, C1, 3, 3), jnp.float32) * (1.0 / np.sqrt(C1 * 9))
    b2 = jax.random.normal(kb2, (C2,), jnp.float32) * 0.05

    out = decoder_forward(x, w1, b1, gamma, beta, w2, b2)
    out = jax.block_until_ready(out)

    ref = reference_forward(x, w1, b1, gamma, beta, w2, b2)
    ref = jax.block_until_ready(ref)

    assert out.shape == (N, C2, OUT, OUT)
    np.testing.assert_allclose(np.asarray(out), np.asarray(ref), rtol=2e-4, atol=2e-4)
    print("KERNEL_OK")
</pallas_src>

<mosaic_0001>
module attributes {stable_mosaic.version = 11 : i64} {
  func.func @decoder_kernel(%arg0: memref<2x18x360xf32, #tpu.memory_space<vmem>>, %arg1: memref<3x360x160xf32, #tpu.memory_space<vmem>>, %arg2: memref<1x160xf32, #tpu.memory_space<vmem>>, %arg3: memref<160x150xf32, #tpu.memory_space<vmem>>, %arg4: memref<30x31xf32, #tpu.memory_space<vmem>>, %arg5: memref<150x150xf32, #tpu.memory_space<vmem>>, %arg6: memref<1x150xf32, #tpu.memory_space<vmem>>, %arg7: memref<1x150xf32, #tpu.memory_space<vmem>>, %arg8: memref<3x150x15xf32, #tpu.memory_space<vmem>>, %arg9: memref<30x30xf32, #tpu.memory_space<vmem>>, %arg10: memref<30x30xf32, #tpu.memory_space<vmem>>, %arg11: memref<1x1xf32, #tpu.memory_space<vmem>>, %arg12: memref<15x14xf32, #tpu.memory_space<vmem>>, %arg13: memref<200x14xf32, #tpu.memory_space<vmem>>, %arg14: memref<14x256xf32, #tpu.memory_space<vmem>>, %arg15: memref<2x100x128xf32, #tpu.memory_space<vmem>>) attributes {dimension_semantics = [], scalar_prefetch = 0 : i64, scratch_operands = 0 : i64, tpu.core_type = #tpu.core_type<tc>} {
    %c0 = arith.constant 0 : index
    %c0_0 = arith.constant 0 : index
    %c0_1 = arith.constant 0 : index
    %0 = vector.load %arg0[%c0, %c0_0, %c0_1] : memref<2x18x360xf32, #tpu.memory_space<vmem>>, vector<2x18x360xf32>
    %cst = arith.constant 0.000000e+00 : f32
    %1 = vector.broadcast %cst : f32 to vector<32x160xf32>
    %2 = vector.extract_strided_slice %0 {offsets = [0, 0, 0], sizes = [2, 16, 360], strides = [1, 1, 1]} : vector<2x18x360xf32> to vector<2x16x360xf32>
    %3 = vector.shape_cast %2 : vector<2x16x360xf32> to vector<32x360xf32>
    %c0_2 = arith.constant 0 : index
    %c0_3 = arith.constant 0 : index
    %c0_4 = arith.constant 0 : index
    %4 = vector.load %arg1[%c0_2, %c0_3, %c0_4] : memref<3x360x160xf32, #tpu.memory_space<vmem>>, vector<1x360x160xf32>
    %5 = vector.shape_cast %4 : vector<1x360x160xf32> to vector<360x160xf32>
    %cst_5 = arith.constant dense<0.000000e+00> : vector<32x160xf32>
    %6 = tpu.matmul %3, %5, %cst_5 {dimension_numbers = #tpu.dot_dimension_numbers<[1], [0], [0], [1], [0, 0, 1, 1], [], []>} : vector<32x360xf32>, vector<360x160xf32>, vector<32x160xf32> -> vector<32x160xf32>
    %7 = arith.addf %1, %6 : vector<32x160xf32>
    %8 = vector.extract_strided_slice %0 {offsets = [0, 1, 0], sizes = [2, 16, 360], strides = [1, 1, 1]} : vector<2x18x360xf32> to vector<2x16x360xf32>
    %9 = vector.shape_cast %8 : vector<2x16x360xf32> to vector<32x360xf32>
    %c1 = arith.constant 1 : index
    %c0_6 = arith.constant 0 : index
    %c0_7 = arith.constant 0 : index
    %10 = vector.load %arg1[%c1, %c0_6, %c0_7] : memref<3x360x160xf32, #tpu.memory_space<vmem>>, vector<1x360x160xf32>
    %11 = vector.shape_cast %10 : vector<1x360x160xf32> to vector<360x160xf32>
    %cst_8 = arith.constant dense<0.000000e+00> : vector<32x160xf32>
    %12 = tpu.matmul %9, %11, %cst_8 {dimension_numbers = #tpu.dot_dimension_numbers<[1], [0], [0], [1], [0, 0, 1, 1], [], []>} : vector<32x360xf32>, vector<360x160xf32>, vector<32x160xf32> -> vector<32x160xf32>
    %13 = arith.addf %7, %12 : vector<32x160xf32>
    %14 = vector.extract_strided_slice %0 {offsets = [0, 2, 0], sizes = [2, 16, 360], strides = [1, 1, 1]} : vector<2x18x360xf32> to vector<2x16x360xf32>
    %15 = vector.shape_cast %14 : vector<2x16x360xf32> to vector<32x360xf32>
    %c2 = arith.constant 2 : index
    %c0_9 = arith.constant 0 : index
    %c0_10 = arith.constant 0 : index
    %16 = vector.load %arg1[%c2, %c0_9, %c0_10] : memref<3x360x160xf32, #tpu.memory_space<vmem>>, vector<1x360x160xf32>
    %17 = vector.shape_cast %16 : vector<1x360x160xf32> to vector<360x160xf32>
    %cst_11 = arith.constant dense<0.000000e+00> : vector<32x160xf32>
    %18 = tpu.matmul %15, %17, %cst_11 {dimension_numbers = #tpu.dot_dimension_numbers<[1], [0], [0], [1], [0, 0, 1, 1], [], []>} : vector<32x360xf32>, vector<360x160xf32>, vector<32x160xf32> -> vector<32x160xf32>
    %19 = arith.addf %13, %18 : vector<32x160xf32>
    %c0_12 = arith.constant 0 : index
    %c0_13 = arith.constant 0 : index
    %20 = vector.load %arg2[%c0_12, %c0_13] : memref<1x160xf32, #tpu.memory_space<vmem>>, vector<1x160xf32>
    %21 = vector.broadcast %20 : vector<1x160xf32> to vector<32x160xf32>
    %22 = arith.addf %19, %21 : vector<32x160xf32>
    %23 = vector.extract_strided_slice %22 {offsets = [0, 0], sizes = [31, 160], strides = [1, 1]} : vector<32x160xf32> to vector<31x160xf32>
    %24 = vector.extract_strided_slice %22 {offsets = [1, 0], sizes = [31, 160], strides = [1, 1]} : vector<32x160xf32> to vector<31x160xf32>
    %25 = arith.maximumf %23, %24 : vector<31x160xf32>
    %26 = vector.extract_strided_slice %25 {offsets = [0, 0], sizes = [31, 150], strides = [1, 1]} : vector<31x160xf32> to vector<31x150xf32>
    %c0_14 = arith.constant 0 : index
    %c0_15 = arith.constant 0 : index
    %27 = vector.load %arg3[%c0_14, %c0_15] : memref<160x150xf32, #tpu.memory_space<vmem>>, vector<160x150xf32>
    %cst_16 = arith.constant dense<0.000000e+00> : vector<31x150xf32>
    %28 = tpu.matmul %25, %27, %cst_16 {dimension_numbers = #tpu.dot_dimension_numbers<[1], [0], [0], [1], [0, 0, 1, 1], [], []>} : vector<31x160xf32>, vector<160x150xf32>, vector<31x150xf32> -> vector<31x150xf32>
    %29 = arith.maximumf %26, %28 : vector<31x150xf32>
    %c0_17 = arith.constant 0 : index
    %c0_18 = arith.constant 0 : index
    %30 = vector.load %arg4[%c0_17, %c0_18] : memref<30x31xf32, #tpu.memory_space<vmem>>, vector<30x31xf32>
    %cst_19 = arith.constant dense<0.000000e+00> : vector<30x150xf32>
    %31 = tpu.matmul %30, %29, %cst_19 {dimension_numbers = #tpu.dot_dimension_numbers<[1], [0], [0], [1], [0, 0, 1, 1], [], []>} : vector<30x31xf32>, vector<31x150xf32>, vector<30x150xf32> -> vector<30x150xf32>
    %cst_20 = arith.constant 1.000000e+00 : f32
    %32 = vector.broadcast %cst_20 : f32 to vector<1x30xf32>
    %cst_21 = arith.constant dense<0.000000e+00> : vector<1x150xf32>
    %33 = tpu.matmul %32, %31, %cst_21 {dimension_numbers = #tpu.dot_dimension_numbers<[1], [0], [0], [1], [0, 0, 1, 1], [], []>} : vector<1x30xf32>, vector<30x150xf32>, vector<1x150xf32> -> vector<1x150xf32>
    %34 = arith.mulf %31, %31 : vector<30x150xf32>
    %cst_22 = arith.constant dense<0.000000e+00> : vector<1x150xf32>
    %35 = tpu.matmul %32, %34, %cst_22 {dimension_numbers = #tpu.dot_dimension_numbers<[1], [0], [0], [1], [0, 0, 1, 1], [], []>} : vector<1x30xf32>, vector<30x150xf32>, vector<1x150xf32> -> vector<1x150xf32>
    %c0_23 = arith.constant 0 : index
    %c0_24 = arith.constant 0 : index
    %36 = vector.load %arg5[%c0_23, %c0_24] : memref<150x150xf32, #tpu.memory_space<vmem>>, vector<150x150xf32>
    %cst_25 = arith.constant dense<0.000000e+00> : vector<1x150xf32>
    %37 = tpu.matmul %33, %36, %cst_25 {dimension_numbers = #tpu.dot_dimension_numbers<[1], [0], [0], [1], [0, 0, 1, 1], [], []>} : vector<1x150xf32>, vector<150x150xf32>, vector<1x150xf32> -> vector<1x150xf32>
    %c0_26 = arith.constant 0 : index
    %c0_27 = arith.constant 0 : index
    %38 = vector.load %arg5[%c0_26, %c0_27] : memref<150x150xf32, #tpu.memory_space<vmem>>, vector<150x150xf32>
    %cst_28 = arith.constant dense<0.000000e+00> : vector<1x150xf32>
    %39 = tpu.matmul %35, %38, %cst_28 {dimension_numbers = #tpu.dot_dimension_numbers<[1], [0], [0], [1], [0, 0, 1, 1], [], []>} : vector<1x150xf32>, vector<150x150xf32>, vector<1x150xf32> -> vector<1x150xf32>
    %40 = arith.mulf %37, %37 : vector<1x150xf32>
    %41 = arith.subf %39, %40 : vector<1x150xf32>
    %c0_29 = arith.constant 0 : index
    %c0_30 = arith.constant 0 : index
    %42 = vector.load %arg6[%c0_29, %c0_30] : memref<1x150xf32, #tpu.memory_space<vmem>>, vector<1x150xf32>
    %cst_31 = arith.constant 9.99999974E-6 : f32
    %43 = vector.broadcast %cst_31 : f32 to vector<1x150xf32>
    %44 = arith.addf %41, %43 : vector<1x150xf32>
    %45 = math.rsqrt %44 : vector<1x150xf32>
    %46 = arith.mulf %42, %45 : vector<1x150xf32>
    %c0_32 = arith.constant 0 : index
    %c0_33 = arith.constant 0 : index
    %47 = vector.load %arg7[%c0_32, %c0_33] : memref<1x150xf32, #tpu.memory_space<vmem>>, vector<1x150xf32>
    %48 = arith.mulf %37, %46 : vector<1x150xf32>
    %49 = arith.subf %47, %48 : vector<1x150xf32>
    %50 = vector.broadcast %46 : vector<1x150xf32> to vector<30x150xf32>
    %51 = arith.mulf %31, %50 : vector<30x150xf32>
    %52 = vector.broadcast %49 : vector<1x150xf32> to vector<30x150xf32>
    %53 = arith.addf %51, %52 : vector<30x150xf32>
    %cst_34 = arith.constant 0.000000e+00 : f32
    %54 = vector.broadcast %cst_34 : f32 to vector<30x150xf32>
    %55 = arith.maximumf %53, %54 : vector<30x150xf32>
    %c0_35 = arith.constant 0 : index
    %c0_36 = arith.constant 0 : index
    %c0_37 = arith.constant 0 : index
    %56 = vector.load %arg8[%c0_35, %c0_36, %c0_37] : memref<3x150x15xf32, #tpu.memory_space<vmem>>, vector<1x150x15xf32>
    %57 = vector.shape_cast %56 : vector<1x150x15xf32> to vector<150x15xf32>
    %cst_38 = arith.constant dense<0.000000e+00> : vector<30x15xf32>
    %58 = tpu.matmul %55, %57, %cst_38 {dimension_numbers = #tpu.dot_dimension_numbers<[1], [0], [0], [1], [0, 0, 1, 1], [], []>} : vector<30x150xf32>, vector<150x15xf32>, vector<30x15xf32> -> vector<30x15xf32>
    %c1_39 = arith.constant 1 : index
    %c0_40 = arith.constant 0 : index
    %c0_41 = arith.constant 0 : index
    %59 = vector.load %arg8[%c1_39, %c0_40, %c0_41] : memref<3x150x15xf32, #tpu.memory_space<vmem>>, vector<1x150x15xf32>
    %60 = vector.shape_cast %59 : vector<1x150x15xf32> to vector<150x15xf32>
    %cst_42 = arith.constant dense<0.000000e+00> : vector<30x15xf32>
    %61 = tpu.matmul %55, %60, %cst_42 {dimension_numbers = #tpu.dot_dimension_numbers<[1], [0], [0], [1], [0, 0, 1, 1], [], []>} : vector<30x150xf32>, vector<150x15xf32>, vector<30x15xf32> -> vector<30x15xf32>
    %c2_43 = arith.constant 2 : index
    %c0_44 = arith.constant 0 : index
    %c0_45 = arith.constant 0 : index
    %62 = vector.load %arg8[%c2_43, %c0_44, %c0_45] : memref<3x150x15xf32, #tpu.memory_space<vmem>>, vector<1x150x15xf32>
    %63 = vector.shape_cast %62 : vector<1x150x15xf32> to vector<150x15xf32>
    %cst_46 = arith.constant dense<0.000000e+00> : vector<30x15xf32>
    %64 = tpu.matmul %55, %63, %cst_46 {dimension_numbers = #tpu.dot_dimension_numbers<[1], [0], [0], [1], [0, 0, 1, 1], [], []>} : vector<30x150xf32>, vector<150x15xf32>, vector<30x15xf32> -> vector<30x15xf32>
    %c0_47 = arith.constant 0 : index
    %c0_48 = arith.constant 0 : index
    %65 = vector.load %arg9[%c0_47, %c0_48] : memref<30x30xf32, #tpu.memory_space<vmem>>, vector<30x30xf32>
    %cst_49 = arith.constant dense<0.000000e+00> : vector<30x15xf32>
    %66 = tpu.matmul %65, %58, %cst_49 {dimension_numbers = #tpu.dot_dimension_numbers<[1], [0], [0], [1], [0, 0, 1, 1], [], []>} : vector<30x30xf32>, vector<30x15xf32>, vector<30x15xf32> -> vector<30x15xf32>
    %67 = arith.addf %66, %61 : vector<30x15xf32>
    %c0_50 = arith.constant 0 : index
    %c0_51 = arith.constant 0 : index
    %68 = vector.load %arg10[%c0_50, %c0_51] : memref<30x30xf32, #tpu.memory_space<vmem>>, vector<30x30xf32>
    %cst_52 = arith.constant dense<0.000000e+00> : vector<30x15xf32>
    %69 = tpu.matmul %68, %64, %cst_52 {dimension_numbers = #tpu.dot_dimension_numbers<[1], [0], [0], [1], [0, 0, 1, 1], [], []>} : vector<30x30xf32>, vector<30x15xf32>, vector<30x15xf32> -> vector<30x15xf32>
    %70 = arith.addf %67, %69 : vector<30x15xf32>
    %c0_53 = arith.constant 0 : index
    %c0_54 = arith.constant 0 : index
    %71 = vector.load %arg11[%c0_53, %c0_54] : memref<1x1xf32, #tpu.memory_space<vmem>>, vector<1x1xf32>
    %72 = vector.broadcast %71 : vector<1x1xf32> to vector<30x15xf32>
    %73 = arith.addf %70, %72 : vector<30x15xf32>
    %74 = vector.extract_strided_slice %73 {offsets = [0, 0], sizes = [29, 15], strides = [1, 1]} : vector<30x15xf32> to vector<29x15xf32>
    %75 = vector.extract_strided_slice %73 {offsets = [1, 0], sizes = [29, 15], strides = [1, 1]} : vector<30x15xf32> to vector<29x15xf32>
    %76 = arith.maximumf %74, %75 : vector<29x15xf32>
    %77 = vector.extract_strided_slice %76 {offsets = [0, 0], sizes = [29, 14], strides = [1, 1]} : vector<29x15xf32> to vector<29x14xf32>
    %c0_55 = arith.constant 0 : index
    %c0_56 = arith.constant 0 : index
    %78 = vector.load %arg12[%c0_55, %c0_56] : memref<15x14xf32, #tpu.memory_space<vmem>>, vector<15x14xf32>
    %cst_57 = arith.constant dense<0.000000e+00> : vector<29x14xf32>
    %79 = tpu.matmul %76, %78, %cst_57 {dimension_numbers = #tpu.dot_dimension_numbers<[1], [0], [0], [1], [0, 0, 1, 1], [], []>} : vector<29x15xf32>, vector<15x14xf32>, vector<29x14xf32> -> vector<29x14xf32>
    %80 = arith.maximumf %77, %79 : vector<29x14xf32>
    %cst_58 = arith.constant 0.000000e+00 : f32
    %81 = vector.broadcast %cst_58 : f32 to vector<29x14xf32>
    %82 = arith.maximumf %80, %81 : vector<29x14xf32>
    %c0_59 = arith.constant 0 : index
    %c0_60 = arith.constant 0 : index
    %83 = vector.load %arg13[%c0_59, %c0_60] : memref<200x14xf32, #tpu.memory_space<vmem>>, vector<200x14xf32>
    %c0_61 = arith.constant 0 : index
    %c0_62 = arith.constant 0 : index
    %84 = vector.load %arg14[%c0_61, %c0_62] : memref<14x256xf32, #tpu.memory_space<vmem>>, vector<14x256xf32>
    %85 = vector.extract_strided_slice %82 {offsets = [0, 0], sizes = [14, 14], strides = [1, 1]} : vector<29x14xf32> to vector<14x14xf32>
    %cst_63 = arith.constant dense<0.000000e+00> : vector<14x256xf32>
    %86 = tpu.matmul %85, %84, %cst_63 {dimension_numbers = #tpu.dot_dimension_numbers<[1], [0], [0], [1], [0, 0, 1, 1], [], []>} : vector<14x14xf32>, vector<14x256xf32>, vector<14x256xf32> -> vector<14x256xf32>
    %cst_64 = arith.constant dense<0.000000e+00> : vector<200x256xf32>
    %87 = tpu.matmul %83, %86, %cst_64 {dimension_numbers = #tpu.dot_dimension_numbers<[1], [0], [0], [1], [0, 0, 1, 1], [], []>} : vector<200x14xf32>, vector<14x256xf32>, vector<200x256xf32> -> vector<200x256xf32>
    %88 = vector.extract_strided_slice %87 {offsets = [0, 0], sizes = [100, 128], strides = [1, 1]} : vector<200x256xf32> to vector<100x128xf32>
    %89 = vector.extract_strided_slice %87 {offsets = [0, 128], sizes = [100, 128], strides = [1, 1]} : vector<200x256xf32> to vector<100x128xf32>
    %90 = arith.maximumf %88, %89 : vector<100x128xf32>
    %91 = vector.extract_strided_slice %87 {offsets = [100, 0], sizes = [100, 128], strides = [1, 1]} : vector<200x256xf32> to vector<100x128xf32>
    %92 = vector.extract_strided_slice %87 {offsets = [100, 128], sizes = [100, 128], strides = [1, 1]} : vector<200x256xf32> to vector<100x128xf32>
    %93 = arith.maximumf %91, %92 : vector<100x128xf32>
    %94 = arith.maximumf %90, %93 : vector<100x128xf32>
    %c0_65 = arith.constant 0 : index
    %c0_66 = arith.constant 0 : index
    %c0_67 = arith.constant 0 : index
    %95 = vector.load %arg15[%c0_65, %c0_66, %c0_67] : memref<2x100x128xf32, #tpu.memory_space<vmem>>, vector<1x100x128xf32>
    %96 = vector.shape_cast %95 : vector<1x100x128xf32> to vector<100x128xf32>
    %97 = vector.shape_cast %94 : vector<100x128xf32> to vector<1x100x128xf32>
    tpu.vector_store %arg15[%c0_65, %c0_66, %c0_67], %97 {strides = array<i32>} : memref<2x100x128xf32, #tpu.memory_space<vmem>>, vector<1x100x128xf32>,
    %98 = vector.extract_strided_slice %82 {offsets = [15, 0], sizes = [14, 14], strides = [1, 1]} : vector<29x14xf32> to vector<14x14xf32>
    %cst_68 = arith.constant dense<0.000000e+00> : vector<14x256xf32>
    %99 = tpu.matmul %98, %84, %cst_68 {dimension_numbers = #tpu.dot_dimension_numbers<[1], [0], [0], [1], [0, 0, 1, 1], [], []>} : vector<14x14xf32>, vector<14x256xf32>, vector<14x256xf32> -> vector<14x256xf32>
    %cst_69 = arith.constant dense<0.000000e+00> : vector<200x256xf32>
    %100 = tpu.matmul %83, %99, %cst_69 {dimension_numbers = #tpu.dot_dimension_numbers<[1], [0], [0], [1], [0, 0, 1, 1], [], []>} : vector<200x14xf32>, vector<14x256xf32>, vector<200x256xf32> -> vector<200x256xf32>
    %101 = vector.extract_strided_slice %100 {offsets = [0, 0], sizes = [100, 128], strides = [1, 1]} : vector<200x256xf32> to vector<100x128xf32>
    %102 = vector.extract_strided_slice %100 {offsets = [0, 128], sizes = [100, 128], strides = [1, 1]} : vector<200x256xf32> to vector<100x128xf32>
    %103 = arith.maximumf %101, %102 : vector<100x128xf32>
    %104 = vector.extract_strided_slice %100 {offsets = [100, 0], sizes = [100, 128], strides = [1, 1]} : vector<200x256xf32> to vector<100x128xf32>
    %105 = vector.extract_strided_slice %100 {offsets = [100, 128], sizes = [100, 128], strides = [1, 1]} : vector<200x256xf32> to vector<100x128xf32>
    %106 = arith.maximumf %104, %105 : vector<100x128xf32>
    %107 = arith.maximumf %103, %106 : vector<100x128xf32>
    %c1_70 = arith.constant 1 : index
    %c0_71 = arith.constant 0 : index
    %c0_72 = arith.constant 0 : index
    %108 = vector.load %arg15[%c1_70, %c0_71, %c0_72] : memref<2x100x128xf32, #tpu.memory_space<vmem>>, vector<1x100x128xf32>
    %109 = vector.shape_cast %108 : vector<1x100x128xf32> to vector<100x128xf32>
    %110 = vector.shape_cast %107 : vector<100x128xf32> to vector<1x100x128xf32>
    tpu.vector_store %arg15[%c1_70, %c0_71, %c0_72], %110 {strides = array<i32>} : memref<2x100x128xf32, #tpu.memory_space<vmem>>, vector<1x100x128xf32>,
    return
  }
}

</mosaic_0001>

<llo_original>
// kernel: tpu_custom_call.1
$region0: #{tpu_custom_call.1}
  #allocation0 [shape = 'u32[]', space=smem, size = 0x4, offset = 0x4, fixed_abs, tag = 'smem constant byte address 0x4 - core index']
  #allocation1 [shape = 'u32[72,128]{1,0:T(1,128)}', space=vmem, size = 0x9000, scoped, tag = 'internal scratch']
  #allocation2 [shape = 'f32[1,1]{1,0:T(1,128)S(1)}', space=vmem, size = 0x200, scoped, tag = 'scoped memory for tpu_custom_call.1']
  %s0 = inlined_call_operand.vmem [shape: f32[2,18,360], index: 0, kind: input, shape index: {}]
  %s1 = inlined_call_operand.vmem [shape: f32[3,360,160], index: 1, kind: input, shape index: {}]
  %s2 = inlined_call_operand.vmem [shape: f32[1,160], index: 2, kind: input, shape index: {}]
  %s3 = inlined_call_operand.vmem [shape: f32[160,150], index: 3, kind: input, shape index: {}]
  %s4 = inlined_call_operand.vmem [shape: f32[30,31], index: 4, kind: input, shape index: {}]
  %s5 = inlined_call_operand.vmem [shape: f32[150,150], index: 5, kind: input, shape index: {}]
  %s6 = inlined_call_operand.vmem [shape: f32[1,150], index: 6, kind: input, shape index: {}]
  %s7 = inlined_call_operand.vmem [shape: f32[1,150], index: 7, kind: input, shape index: {}]
  %s8 = inlined_call_operand.vmem [shape: f32[3,150,15], index: 8, kind: input, shape index: {}]
  %s9 = inlined_call_operand.vmem [shape: f32[30,30], index: 9, kind: input, shape index: {}]
  %s10 = inlined_call_operand.vmem [shape: f32[30,30], index: 10, kind: input, shape index: {}]
  %s11 = inlined_call_operand.<no memory space> [shape: f32[1,1], index: 11, kind: input, shape index: {}]
  %s12 = inlined_call_operand.vmem [shape: f32[15,14], index: 12, kind: input, shape index: {}]
  %s13 = inlined_call_operand.vmem [shape: f32[200,14], index: 13, kind: input, shape index: {}]
  %s14 = inlined_call_operand.vmem [shape: f32[14,256], index: 14, kind: input, shape index: {}]
  %s15 = inlined_call_operand.vmem [shape: f32[2,100,128], index: 15, kind: output, shape index: {}]
  %s16 = sld [smem:[#allocation0]]
  $region70: #{tpu_custom_call.1} parent=0
    _
  %s18 = ssub.s32 1, %s16
  %s19 = scalar_select 0, %s18, %s16
  %v20 = vstv %s11
  %21 = vst [vmem:[#allocation2] sm:$0x1] %v20
  // Predicated region
  $region2: #{tpu_custom_call.1} parent=0 // pred_check
    _
  $region3: #{tpu_custom_call.1} parent=0 // pred_check_branch
    %23 = sbr.rel (0) target = $region5
  $region4: #{tpu_custom_call.1} parent=0 // pred_region
    _
  $region5: #{tpu_custom_call.1} parent=0 // pred_fallthru
    _
  // Predicated region
  $region6: #{tpu_custom_call.1} parent=0 // pred_check
    _
  $region7: #{tpu_custom_call.1} parent=0 // pred_check_branch
    %25 = sbr.rel (0) target = $region9
  $region8: #{tpu_custom_call.1} parent=0 // pred_region
    _
  $region9: #{tpu_custom_call.1} parent=0 // pred_fallthru
    _
  // Predicated region
  $region10: #{tpu_custom_call.1} parent=0 // pred_check
    _
  $region11: #{tpu_custom_call.1} parent=0 // pred_check_branch
    %27 = sbr.rel (0) target = $region13
  $region12: #{tpu_custom_call.1} parent=0 // pred_region
    _
  $region13: #{tpu_custom_call.1} parent=0 // pred_fallthru
    _
  // Predicated region
  $region14: #{tpu_custom_call.1} parent=0 // pred_check
    _
  $region15: #{tpu_custom_call.1} parent=0 // pred_check_branch
    %29 = sbr.rel (0) target = $region17
  $region16: #{tpu_custom_call.1} parent=0 // pred_region
    _
  $region17: #{tpu_custom_call.1} parent=0 // pred_fallthru
    _
  // Predicated region
  $region18: #{tpu_custom_call.1} parent=0 // pred_check
    _
  $region19: #{tpu_custom_call.1} parent=0 // pred_check_branch
    %31 = sbr.rel (0) target = $region21
  $region20: #{tpu_custom_call.1} parent=0 // pred_region
    _
  $region21: #{tpu_custom_call.1} parent=0 // pred_fallthru
    _
  // Predicated region
  $region22: #{tpu_custom_call.1} parent=0 // pred_check
    _
  $region23: #{tpu_custom_call.1} parent=0 // pred_check_branch
    %33 = sbr.rel (0) target = $region25
  $region24: #{tpu_custom_call.1} parent=0 // pred_region
    _
  $region25: #{tpu_custom_call.1} parent=0 // pred_fallthru
    _
  // Predicated region
  $region26: #{tpu_custom_call.1} parent=0 // pred_check
    _
  $region27: #{tpu_custom_call.1} parent=0 // pred_check_branch
    %35 = sbr.rel (0) target = $region29
  $region28: #{tpu_custom_call.1} parent=0 // pred_region
    _
  $region29: #{tpu_custom_call.1} parent=0 // pred_fallthru
    _
  // Predicated region
  $region30: #{tpu_custom_call.1} parent=0 // pred_check
    _
  $region31: #{tpu_custom_call.1} parent=0 // pred_check_branch
    %37 = sbr.rel (0) target = $region33
  $region32: #{tpu_custom_call.1} parent=0 // pred_region
    _
  $region33: #{tpu_custom_call.1} parent=0 // pred_fallthru
    _
  // Predicated region
  $region34: #{tpu_custom_call.1} parent=0 // pred_check
    _
  $region35: #{tpu_custom_call.1} parent=0 // pred_check_branch
    %39 = sbr.rel (0) target = $region37
  $region36: #{tpu_custom_call.1} parent=0 // pred_region
    _
  $region37: #{tpu_custom_call.1} parent=0 // pred_fallthru
    _
  // Predicated region
  $region38: #{tpu_custom_call.1} parent=0 // pred_check
    _
  $region39: #{tpu_custom_call.1} parent=0 // pred_check_branch
    %41 = sbr.rel (0) target = $region41
  $region40: #{tpu_custom_call.1} parent=0 // pred_region
    _
  $region41: #{tpu_custom_call.1} parent=0 // pred_fallthru
    _
  // Predicated region
  $region42: #{tpu_custom_call.1} parent=0 // pred_check
    _
  $region43: #{tpu_custom_call.1} parent=0 // pred_check_branch
    %43 = sbr.rel (0) target = $region45
  $region44: #{tpu_custom_call.1} parent=0 // pred_region
    _
  $region45: #{tpu_custom_call.1} parent=0 // pred_fallthru
    _
  // Predicated region
  $region46: #{tpu_custom_call.1} parent=0 // pred_check
    _
  $region47: #{tpu_custom_call.1} parent=0 // pred_check_branch
    %45 = sbr.rel (0) target = $region49
  $region48: #{tpu_custom_call.1} parent=0 // pred_region
    _
  $region49: #{tpu_custom_call.1} parent=0 // pred_fallthru
    _
  // Predicated region
  $region50: #{tpu_custom_call.1} parent=0 // pred_check
    _
  $region51: #{tpu_custom_call.1} parent=0 // pred_check_branch
    %47 = sbr.rel (0) target = $region53
  $region52: #{tpu_custom_call.1} parent=0 // pred_region
    _
  $region53: #{tpu_custom_call.1} parent=0 // pred_fallthru
    _
  // Predicated region
  $region54: #{tpu_custom_call.1} parent=0 // pred_check
    _
  $region55: #{tpu_custom_call.1} parent=0 // pred_check_branch
    %49 = sbr.rel (0) target = $region57
  $region56: #{tpu_custom_call.1} parent=0 // pred_region
    _
  $region57: #{tpu_custom_call.1} parent=0 // pred_fallthru
    _
  // Predicated region
  $region58: #{tpu_custom_call.1} parent=0 // pred_check
    _
  $region59: #{tpu_custom_call.1} parent=0 // pred_check_branch
    %51 = sbr.rel (0) target = $region61
  $region60: #{tpu_custom_call.1} parent=0 // pred_region
    _
  $region61: #{tpu_custom_call.1} parent=0 // pred_fallthru
    _
  %v52 = vld [vmem:[%s0] sm:$0xff]
  %v53 = vld [vmem:[%s0 + $0x8] sm:$0xff]
  %v54 = vld [vmem:[%s0 + $0x10] sm:$0xff]
  %v55 = vld [vmem:[%s0 + $0x18] sm:$0xff]
  %v56 = vld [vmem:[%s0 + $0x20] sm:$0xff]
  %v57 = vld [vmem:[%s0 + $0x28] sm:$0xff]
  %v58 = vld [vmem:[%s0 + $0x30] sm:$0x3]
  %v59 = vld [vmem:[%s0 + $0x38] sm:$0x3]
  %v60 = vld [vmem:[%s0 + $0x40] sm:$0x3]
  %v61 = vld [vmem:[%s0 + $0x48] sm:$0xff]
  %v62 = vld [vmem:[%s0 + $0x50] sm:$0xff]
  %v63 = vld [vmem:[%s0 + $0x58] sm:$0xff]
  %v64 = vld [vmem:[%s0 + $0x60] sm:$0xff]
  %v65 = vld [vmem:[%s0 + $0x68] sm:$0xff]
  %v66 = vld [vmem:[%s0 + $0x70] sm:$0xff]
  %v67 = vld [vmem:[%s0 + $0x78] sm:$0x3]
  %v68 = vld [vmem:[%s0 + $0x80] sm:$0x3]
  %v69 = vld [vmem:[%s0 + $0x88] sm:$0x3]
  %v70 = vld [vmem:[%s1] sm:$0xff]
  %v71 = vld [vmem:[%s1 + $0x8] sm:$0xff]
  %v72 = vld [vmem:[%s1 + $0x10] sm:$0xff]
  %v73 = vld [vmem:[%s1 + $0x18] sm:$0xff]
  %v74 = vld [vmem:[%s1 + $0x20] sm:$0xff]
  %v75 = vld [vmem:[%s1 + $0x28] sm:$0xff]
  %v76 = vld [vmem:[%s1 + $0x30] sm:$0xff]
  %v77 = vld [vmem:[%s1 + $0x38] sm:$0xff]
  %v78 = vld [vmem:[%s1 + $0x40] sm:$0xff]
  %v79 = vld [vmem:[%s1 + $0x48] sm:$0xff]
  %v80 = vld [vmem:[%s1 + $0x50] sm:$0xff]
  %v81 = vld [vmem:[%s1 + $0x58] sm:$0xff]
  %v82 = vld [vmem:[%s1 + $0x60] sm:$0xff]
  %v83 = vld [vmem:[%s1 + $0x68] sm:$0xff]
  %v84 = vld [vmem:[%s1 + $0x70] sm:$0xff]
  %v85 = vld [vmem:[%s1 + $0x78] sm:$0xff]
  %v86 = vld [vmem:[%s1 + $0x80] sm:$0xff]
  %v87 = vld [vmem:[%s1 + $0x88] sm:$0xff]
  %v88 = vld [vmem:[%s1 + $0x90] sm:$0xff]
  %v89 = vld [vmem:[%s1 + $0x98] sm:$0xff]
  %v90 = vld [vmem:[%s1 + $0xa0] sm:$0xff]
  %v91 = vld [vmem:[%s1 + $0xa8] sm:$0xff]
  %v92 = vld [vmem:[%s1 + $0xb0] sm:$0xff]
  %v93 = vld [vmem:[%s1 + $0xb8] sm:$0xff]
  %v94 = vld [vmem:[%s1 + $0xc0] sm:$0xff]
  %v95 = vld [vmem:[%s1 + $0xc8] sm:$0xff]
  %v96 = vld [vmem:[%s1 + $0xd0] sm:$0xff]
  %v97 = vld [vmem:[%s1 + $0xd8] sm:$0xff]
  %v98 = vld [vmem:[%s1 + $0xe0] sm:$0xff]
  %v99 = vld [vmem:[%s1 + $0xe8] sm:$0xff]
  %v100 = vld [vmem:[%s1 + $0xf0] sm:$0xff]
  %v101 = vld [vmem:[%s1 + $0xf8] sm:$0xff]
  %v102 = vld [vmem:[%s1 + $0x100] sm:$0xff]
  %v103 = vld [vmem:[%s1 + $0x108] sm:$0xff]
  %v104 = vld [vmem:[%s1 + $0x110] sm:$0xff]
  %v105 = vld [vmem:[%s1 + $0x118] sm:$0xff]
  %v106 = vld [vmem:[%s1 + $0x120] sm:$0xff]
  %v107 = vld [vmem:[%s1 + $0x128] sm:$0xff]
  %v108 = vld [vmem:[%s1 + $0x130] sm:$0xff]
  %v109 = vld [vmem:[%s1 + $0x138] sm:$0xff]
  %v110 = vld [vmem:[%s1 + $0x140] sm:$0xff]
  %v111 = vld [vmem:[%s1 + $0x148] sm:$0xff]
  %v112 = vld [vmem:[%s1 + $0x150] sm:$0xff]
  %v113 = vld [vmem:[%s1 + $0x158] sm:$0xff]
  %v114 = vld [vmem:[%s1 + $0x160] sm:$0xff]
  %v115 = vld [vmem:[%s1 + $0x168] sm:$0xff]
  %v116 = vld [vmem:[%s1 + $0x170] sm:$0xff]
  %v117 = vld [vmem:[%s1 + $0x178] sm:$0xff]
  %v118 = vld [vmem:[%s1 + $0x180] sm:$0xff]
  %v119 = vld [vmem:[%s1 + $0x188] sm:$0xff]
  %v120 = vld [vmem:[%s1 + $0x190] sm:$0xff]
  %v121 = vld [vmem:[%s1 + $0x198] sm:$0xff]
  %v122 = vld [vmem:[%s1 + $0x1a0] sm:$0xff]
  %v123 = vld [vmem:[%s1 + $0x1a8] sm:$0xff]
  %v124 = vld [vmem:[%s1 + $0x1b0] sm:$0xff]
  %v125 = vld [vmem:[%s1 + $0x1b8] sm:$0xff]
  %v126 = vld [vmem:[%s1 + $0x1c0] sm:$0xff]
  %v127 = vld [vmem:[%s1 + $0x1c8] sm:$0xff]
  %v128 = vld [vmem:[%s1 + $0x1d0] sm:$0xff]
  %v129 = vld [vmem:[%s1 + $0x1d8] sm:$0xff]
  %v130 = vld [vmem:[%s1 + $0x1e0] sm:$0xff]
  %v131 = vld [vmem:[%s1 + $0x1e8] sm:$0xff]
  %v132 = vld [vmem:[%s1 + $0x1f0] sm:$0xff]
  %v133 = vld [vmem:[%s1 + $0x1f8] sm:$0xff]
  %v134 = vld [vmem:[%s1 + $0x200] sm:$0xff]
  %v135 = vld [vmem:[%s1 + $0x208] sm:$0xff]
  %v136 = vld [vmem:[%s1 + $0x210] sm:$0xff]
  %v137 = vld [vmem:[%s1 + $0x218] sm:$0xff]
  %v138 = vld [vmem:[%s1 + $0x220] sm:$0xff]
  %v139 = vld [vmem:[%s1 + $0x228] sm:$0xff]
  %v140 = vld [vmem:[%s1 + $0x230] sm:$0xff]
  %v141 = vld [vmem:[%s1 + $0x238] sm:$0xff]
  %v142 = vld [vmem:[%s1 + $0x240] sm:$0xff]
  %v143 = vld [vmem:[%s1 + $0x248] sm:$0xff]
  %v144 = vld [vmem:[%s1 + $0x250] sm:$0xff]
  %v145 = vld [vmem:[%s1 + $0x258] sm:$0xff]
  %v146 = vld [vmem:[%s1 + $0x260] sm:$0xff]
  %v147 = vld [vmem:[%s1 + $0x268] sm:$0xff]
  %v148 = vld [vmem:[%s1 + $0x270] sm:$0xff]
  %v149 = vld [vmem:[%s1 + $0x278] sm:$0xff]
  %v150 = vld [vmem:[%s1 + $0x280] sm:$0xff]
  %v151 = vld [vmem:[%s1 + $0x288] sm:$0xff]
  %v152 = vld [vmem:[%s1 + $0x290] sm:$0xff]
  %v153 = vld [vmem:[%s1 + $0x298] sm:$0xff]
  %v154 = vld [vmem:[%s1 + $0x2a0] sm:$0xff]
  %v155 = vld [vmem:[%s1 + $0x2a8] sm:$0xff]
  %v156 = vld [vmem:[%s1 + $0x2b0] sm:$0xff]
  %v157 = vld [vmem:[%s1 + $0x2b8] sm:$0xff]
  %v158 = vld [vmem:[%s1 + $0x2c0] sm:$0xff]
  %v159 = vld [vmem:[%s1 + $0x2c8] sm:$0xff]
  %vm178 = vcmask 1046528
  %v179 = vrot.slane %v52, 1
  %v180 = vrot.slane %v55, 1
  %v181 = vsel %vm178, %v179, %v180
  %v182 = vrot.slane %v53, 1
  %v183 = vrot.slane %v56, 1
  %v184 = vsel %vm178, %v182, %v183
  %v185 = vrot.slane %v54, 1
  %v186 = vrot.slane %v57, 1
  %v187 = vsel %vm178, %v185, %v186
  %v188 = vrot.slane %v58, 1
  %v189 = vsel %vm178, %v180, %v188
  %v190 = vrot.slane %v59, 1
  %v191 = vsel %vm178, %v183, %v190
  %v192 = vrot.slane %v60, 1
  %v193 = vsel %vm178, %v186, %v192
  %v194 = vrot.slane %v61, 1
  %v195 = vrot.slane %v64, 1
  %v196 = vsel %vm178, %v194, %v195
  %v197 = vrot.slane %v62, 1
  %v198 = vrot.slane %v65, 1
  %v199 = vsel %vm178, %v197, %v198
  %v200 = vrot.slane %v63, 1
  %v201 = vrot.slane %v66, 1
  %v202 = vsel %vm178, %v200, %v201
  %v203 = vrot.slane %v67, 1
  %v204 = vsel %vm178, %v195, %v203
  %v205 = vrot.slane %v68, 1
  %v206 = vsel %vm178, %v198, %v205
  %v207 = vrot.slane %v69, 1
  %v208 = vsel %vm178, %v201, %v207
  %s217 = scalar_lea.vmem %s1, 720
  %v218 = vld [vmem:[%s217] sm:$0xff]
  %v219 = vld [vmem:[%s217 + $0x8] sm:$0xff]
  %v220 = vld [vmem:[%s217 + $0x10] sm:$0xff]
  %v221 = vld [vmem:[%s217 + $0x18] sm:$0xff]
  %v222 = vld [vmem:[%s217 + $0x20] sm:$0xff]
  %v223 = vld [vmem:[%s217 + $0x28] sm:$0xff]
  %v224 = vld [vmem:[%s217 + $0x30] sm:$0xff]
  %v225 = vld [vmem:[%s217 + $0x38] sm:$0xff]
  %v226 = vld [vmem:[%s217 + $0x40] sm:$0xff]
  %v227 = vld [vmem:[%s217 + $0x48] sm:$0xff]
  %v228 = vld [vmem:[%s217 + $0x50] sm:$0xff]
  %v229 = vld [vmem:[%s217 + $0x58] sm:$0xff]
  %v230 = vld [vmem:[%s217 + $0x60] sm:$0xff]
  %v231 = vld [vmem:[%s217 + $0x68] sm:$0xff]
  %v232 = vld [vmem:[%s217 + $0x70] sm:$0xff]
  %v233 = vld [vmem:[%s217 + $0x78] sm:$0xff]
  %v234 = vld [vmem:[%s217 + $0x80] sm:$0xff]
  %v235 = vld [vmem:[%s217 + $0x88] sm:$0xff]
  %v236 = vld [vmem:[%s217 + $0x90] sm:$0xff]
  %v237 = vld [vmem:[%s217 + $0x98] sm:$0xff]
  %v238 = vld [vmem:[%s217 + $0xa0] sm:$0xff]
  %v239 = vld [vmem:[%s217 + $0xa8] sm:$0xff]
  %v240 = vld [vmem:[%s217 + $0xb0] sm:$0xff]
  %v241 = vld [vmem:[%s217 + $0xb8] sm:$0xff]
  %v242 = vld [vmem:[%s217 + $0xc0] sm:$0xff]
  %v243 = vld [vmem:[%s217 + $0xc8] sm:$0xff]
  %v244 = vld [vmem:[%s217 + $0xd0] sm:$0xff]
  %v245 = vld [vmem:[%s217 + $0xd8] sm:$0xff]
  %v246 = vld [vmem:[%s217 + $0xe0] sm:$0xff]
  %v247 = vld [vmem:[%s217 + $0xe8] sm:$0xff]
  %v248 = vld [vmem:[%s217 + $0xf0] sm:$0xff]
  %v249 = vld [vmem:[%s217 + $0xf8] sm:$0xff]
  %v250 = vld [vmem:[%s217 + $0x100] sm:$0xff]
  %v251 = vld [vmem:[%s217 + $0x108] sm:$0xff]
  %v252 = vld [vmem:[%s217 + $0x110] sm:$0xff]
  %v253 = vld [vmem:[%s217 + $0x118] sm:$0xff]
  %v254 = vld [vmem:[%s217 + $0x120] sm:$0xff]
  %v255 = vld [vmem:[%s217 + $0x128] sm:$0xff]
  %v256 = vld [vmem:[%s217 + $0x130] sm:$0xff]
  %v257 = vld [vmem:[%s217 + $0x138] sm:$0xff]
  %v258 = vld [vmem:[%s217 + $0x140] sm:$0xff]
  %v259 = vld [vmem:[%s217 + $0x148] sm:$0xff]
  %v260 = vld [vmem:[%s217 + $0x150] sm:$0xff]
  %v261 = vld [vmem:[%s217 + $0x158] sm:$0xff]
  %v262 = vld [vmem:[%s217 + $0x160] sm:$0xff]
  %v263 = vld [vmem:[%s217 + $0x168] sm:$0xff]
  %v264 = vld [vmem:[%s217 + $0x170] sm:$0xff]
  %v265 = vld [vmem:[%s217 + $0x178] sm:$0xff]
  %v266 = vld [vmem:[%s217 + $0x180] sm:$0xff]
  %v267 = vld [vmem:[%s217 + $0x188] sm:$0xff]
  %v268 = vld [vmem:[%s217 + $0x190] sm:$0xff]
  %v269 = vld [vmem:[%s217 + $0x198] sm:$0xff]
  %v270 = vld [vmem:[%s217 + $0x1a0] sm:$0xff]
  %v271 = vld [vmem:[%s217 + $0x1a8] sm:$0xff]
  %v272 = vld [vmem:[%s217 + $0x1b0] sm:$0xff]
  %v273 = vld [vmem:[%s217 + $0x1b8] sm:$0xff]
  %v274 = vld [vmem:[%s217 + $0x1c0] sm:$0xff]
  %v275 = vld [vmem:[%s217 + $0x1c8] sm:$0xff]
  %v276 = vld [vmem:[%s217 + $0x1d0] sm:$0xff]
  %v277 = vld [vmem:[%s217 + $0x1d8] sm:$0xff]
  %v278 = vld [vmem:[%s217 + $0x1e0] sm:$0xff]
  %v279 = vld [vmem:[%s217 + $0x1e8] sm:$0xff]
  %v280 = vld [vmem:[%s217 + $0x1f0] sm:$0xff]
  %v281 = vld [vmem:[%s217 + $0x1f8] sm:$0xff]
  %v282 = vld [vmem:[%s217 + $0x200] sm:$0xff]
  %v283 = vld [vmem:[%s217 + $0x208] sm:$0xff]
  %v284 = vld [vmem:[%s217 + $0x210] sm:$0xff]
  %v285 = vld [vmem:[%s217 + $0x218] sm:$0xff]
  %v286 = vld [vmem:[%s217 + $0x220] sm:$0xff]
  %v287 = vld [vmem:[%s217 + $0x228] sm:$0xff]
  %v288 = vld [vmem:[%s217 + $0x230] sm:$0xff]
  %v289 = vld [vmem:[%s217 + $0x238] sm:$0xff]
  %v290 = vld [vmem:[%s217 + $0x240] sm:$0xff]
  %v291 = vld [vmem:[%s217 + $0x248] sm:$0xff]
  %v292 = vld [vmem:[%s217 + $0x250] sm:$0xff]
  %v293 = vld [vmem:[%s217 + $0x258] sm:$0xff]
  %v294 = vld [vmem:[%s217 + $0x260] sm:$0xff]
  %v295 = vld [vmem:[%s217 + $0x268] sm:$0xff]
  %v296 = vld [vmem:[%s217 + $0x270] sm:$0xff]
  %v297 = vld [vmem:[%s217 + $0x278] sm:$0xff]
  %v298 = vld [vmem:[%s217 + $0x280] sm:$0xff]
  %v299 = vld [vmem:[%s217 + $0x288] sm:$0xff]
  %v300 = vld [vmem:[%s217 + $0x290] sm:$0xff]
  %v301 = vld [vmem:[%s217 + $0x298] sm:$0xff]
  %v302 = vld [vmem:[%s217 + $0x2a0] sm:$0xff]
  %v303 = vld [vmem:[%s217 + $0x2a8] sm:$0xff]
  %v304 = vld [vmem:[%s217 + $0x2b0] sm:$0xff]
  %v305 = vld [vmem:[%s217 + $0x2b8] sm:$0xff]
  %v306 = vld [vmem:[%s217 + $0x2c0] sm:$0xff]
  %v307 = vld [vmem:[%s217 + $0x2c8] sm:$0xff]
  %vm308 = vcmask 850944
  %v309 = vsel %vm308, %v187, 0
  %v311 = vsel %vm308, %v193, 0
  %v313 = vsel %vm308, %v202, 0
  %v315 = vsel %vm308, %v208, 0
  %317 = vmatpush.msra.mxu0 %v248
  %318 = vmatpush.msra.mxu0 %v246
  %319 = vmatpush.msra.mxu0 %v244
  %320 = vmatpush.msra.mxu0 %v242
  %321 = vmatpush.msra.mxu0 %v240
  %322 = vmatpush.msra.mxu0 %v238
  %323 = vmatpush.msra.mxu0 %v236
  %324 = vmatpush.msra.mxu0 %v234
  %325 = vmatpush.msra.mxu0 %v232
  %326 = vmatpush.msra.mxu0 %v230
  %327 = vmatpush.msra.mxu0 %v228
  %328 = vmatpush.msra.mxu0 %v226
  %329 = vmatpush.msra.mxu0 %v224
  %330 = vmatpush.msra.mxu0 %v222
  %331 = vmatpush.msra.mxu0 %v220
  %332 = vmatpush.msra.mxu0 %v218
  %333 = vmatmul.f32.gmra.mxu0 %v181
  %v334 = vpop.f32.mrf.mxu0
  %v335 = vadd.f32 0.0, %v334
  %336 = vmatmul.f32.gmra.mxu0 %v189
  %v337 = vpop.f32.mrf.mxu0
  %v338 = vadd.f32 0.0, %v337
  %339 = vmatmul.f32.gmra.mxu0 %v196
  %v340 = vpop.f32.mrf.mxu0
  %v341 = vadd.f32 0.0, %v340
  %342 = vmatmul.f32.gmra.mxu0 %v204
  %v343 = vpop.f32.mrf.mxu0
  %v344 = vadd.f32 0.0, %v343
  %345 = vdwg.mxu0
  %346 = vmatpush.msra.mxu0 %v280
  %347 = vmatpush.msra.mxu0 %v278
  %348 = vmatpush.msra.mxu0 %v276
  %349 = vmatpush.msra.mxu0 %v274
  %350 = vmatpush.msra.mxu0 %v272
  %351 = vmatpush.msra.mxu0 %v270
  %352 = vmatpush.msra.mxu0 %v268
  %353 = vmatpush.msra.mxu0 %v266
  %354 = vmatpush.msra.mxu0 %v264
  %355 = vmatpush.msra.mxu0 %v262
  %356 = vmatpush.msra.mxu0 %v260
  %357 = vmatpush.msra.mxu0 %v258
  %358 = vmatpush.msra.mxu0 %v256
  %359 = vmatpush.msra.mxu0 %v254
  %360 = vmatpush.msra.mxu0 %v252
  %361 = vmatpush.msra.mxu0 %v250
  %362 = vmatmul.f32.gmra.mxu0 %v184
  %v363 = vpop.f32.mrf.mxu0
  %v364 = vadd.f32 %v335, %v363
  %365 = vmatmul.f32.gmra.mxu0 %v191
  %v366 = vpop.f32.mrf.mxu0
  %v367 = vadd.f32 %v338, %v366
  %368 = vmatmul.f32.gmra.mxu0 %v199
  %v369 = vpop.f32.mrf.mxu0
  %v370 = vadd.f32 %v341, %v369
  %371 = vmatmul.f32.gmra.mxu0 %v206
  %v372 = vpop.f32.mrf.mxu0
  %v373 = vadd.f32 %v344, %v372
  %374 = vdwg.mxu0
  %375 = vmatpush.msra.mxu0 0.0
  %376 = vmatpush.msra.mxu0 0.0
  %377 = vmatpush.msra.mxu0 0.0
  %378 = vmatpush.msra.mxu0 %v306
  %379 = vmatpush.msra.mxu0 %v304
  %380 = vmatpush.msra.mxu0 %v302
  %381 = vmatpush.msra.mxu0 %v300
  %382 = vmatpush.msra.mxu0 %v298
  %383 = vmatpush.msra.mxu0 %v296
  %384 = vmatpush.msra.mxu0 %v294
  %385 = vmatpush.msra.mxu0 %v292
  %386 = vmatpush.msra.mxu0 %v290
  %387 = vmatpush.msra.mxu0 %v288
  %388 = vmatpush.msra.mxu0 %v286
  %389 = vmatpush.msra.mxu0 %v284
  %390 = vmatpush.msra.mxu0 %v282
  %391 = vmatmul.f32.gmra.mxu0 %v309
  %v392 = vpop.f32.mrf.mxu0
  %v393 = vadd.f32 %v364, %v392
  %394 = vmatmul.f32.gmra.mxu0 %v311
  %v395 = vpop.f32.mrf.mxu0
  %v396 = vadd.f32 %v367, %v395
  %397 = vmatmul.f32.gmra.mxu0 %v313
  %v398 = vpop.f32.mrf.mxu0
  %v399 = vadd.f32 %v370, %v398
  %400 = vmatmul.f32.gmra.mxu0 %v315
  %v401 = vpop.f32.mrf.mxu0
  %v402 = vadd.f32 %v373, %v401
  %403 = vdwg.mxu0
  %404 = vmatpush.msra.mxu0 %v249
  %405 = vmatpush.msra.mxu0 %v247
  %406 = vmatpush.msra.mxu0 %v245
  %407 = vmatpush.msra.mxu0 %v243
  %408 = vmatpush.msra.mxu0 %v241
  %409 = vmatpush.msra.mxu0 %v239
  %410 = vmatpush.msra.mxu0 %v237
  %411 = vmatpush.msra.mxu0 %v235
  %412 = vmatpush.msra.mxu0 %v233
  %413 = vmatpush.msra.mxu0 %v231
  %414 = vmatpush.msra.mxu0 %v229
  %415 = vmatpush.msra.mxu0 %v227
  %416 = vmatpush.msra.mxu0 %v225
  %417 = vmatpush.msra.mxu0 %v223
  %418 = vmatpush.msra.mxu0 %v221
  %419 = vmatpush.msra.mxu0 %v219
  %420 = vmatmul.f32.gmra.mxu0 %v181
  %v421 = vpop.f32.mrf.mxu0
  %v422 = vadd.f32 0.0, %v421
  %423 = vmatmul.f32.gmra.mxu0 %v189
  %v424 = vpop.f32.mrf.mxu0
  %v425 = vadd.f32 0.0, %v424
  %426 = vmatmul.f32.gmra.mxu0 %v196
  %v427 = vpop.f32.mrf.mxu0
  %v428 = vadd.f32 0.0, %v427
  %429 = vmatmul.f32.gmra.mxu0 %v204
  %v430 = vpop.f32.mrf.mxu0
  %v431 = vadd.f32 0.0, %v430
  %432 = vdwg.mxu0
  %433 = vmatpush.msra.mxu0 %v281
  %434 = vmatpush.msra.mxu0 %v279
  %435 = vmatpush.msra.mxu0 %v277
  %436 = vmatpush.msra.mxu0 %v275
  %437 = vmatpush.msra.mxu0 %v273
  %438 = vmatpush.msra.mxu0 %v271
  %439 = vmatpush.msra.mxu0 %v269
  %440 = vmatpush.msra.mxu0 %v267
  %441 = vmatpush.msra.mxu0 %v265
  %442 = vmatpush.msra.mxu0 %v263
  %443 = vmatpush.msra.mxu0 %v261
  %444 = vmatpush.msra.mxu0 %v259
  %445 = vmatpush.msra.mxu0 %v257
  %446 = vmatpush.msra.mxu0 %v255
  %447 = vmatpush.msra.mxu0 %v253
  %448 = vmatpush.msra.mxu0 %v251
  %449 = vmatmul.f32.gmra.mxu0 %v184
  %v450 = vpop.f32.mrf.mxu0
  %v451 = vadd.f32 %v422, %v450
  %452 = vmatmul.f32.gmra.mxu0 %v191
  %v453 = vpop.f32.mrf.mxu0
  %v454 = vadd.f32 %v425, %v453
  %455 = vmatmul.f32.gmra.mxu0 %v199
  %v456 = vpop.f32.mrf.mxu0
  %v457 = vadd.f32 %v428, %v456
  %458 = vmatmul.f32.gmra.mxu0 %v206
  %v459 = vpop.f32.mrf.mxu0
  %v460 = vadd.f32 %v431, %v459
  %461 = vdwg.mxu0
  %462 = vmatpush.msra.mxu0 0.0
  %463 = vmatpush.msra.mxu0 0.0
  %464 = vmatpush.msra.mxu0 0.0
  %465 = vmatpush.msra.mxu0 %v307
  %466 = vmatpush.msra.mxu0 %v305
  %467 = vmatpush.msra.mxu0 %v303
  %468 = vmatpush.msra.mxu0 %v301
  %469 = vmatpush.msra.mxu0 %v299
  %470 = vmatpush.msra.mxu0 %v297
  %471 = vmatpush.msra.mxu0 %v295
  %472 = vmatpush.msra.mxu0 %v293
  %473 = vmatpush.msra.mxu0 %v291
  %474 = vmatpush.msra.mxu0 %v289
  %475 = vmatpush.msra.mxu0 %v287
  %476 = vmatpush.msra.mxu0 %v285
  %477 = vmatpush.msra.mxu0 %v283
  %478 = vmatmul.f32.gmra.mxu0 %v309
  %v479 = vpop.f32.mrf.mxu0
  %v480 = vadd.f32 %v451, %v479
  %481 = vmatmul.f32.gmra.mxu0 %v311
  %v482 = vpop.f32.mrf.mxu0
  %v483 = vadd.f32 %v454, %v482
  %484 = vmatmul.f32.gmra.mxu0 %v313
  %v485 = vpop.f32.mrf.mxu0
  %v486 = vadd.f32 %v457, %v485
  %487 = vmatmul.f32.gmra.mxu0 %v315
  %v488 = vpop.f32.mrf.mxu0
  %v489 = vadd.f32 %v460, %v488
  %490 = vdwg.mxu0
  %v491 = vsel %vm308, %v54, 0
  %v493 = vsel %vm308, %v57, 0
  %v495 = vsel %vm308, %v63, 0
  %v497 = vsel %vm308, %v66, 0
  %499 = vmatpush.msra.mxu0 %v100
  %500 = vmatpush.msra.mxu0 %v98
  %501 = vmatpush.msra.mxu0 %v96
  %502 = vmatpush.msra.mxu0 %v94
  %503 = vmatpush.msra.mxu0 %v92
  %504 = vmatpush.msra.mxu0 %v90
  %505 = vmatpush.msra.mxu0 %v88
  %506 = vmatpush.msra.mxu0 %v86
  %507 = vmatpush.msra.mxu0 %v84
  %508 = vmatpush.msra.mxu0 %v82
  %509 = vmatpush.msra.mxu0 %v80
  %510 = vmatpush.msra.mxu0 %v78
  %511 = vmatpush.msra.mxu0 %v76
  %512 = vmatpush.msra.mxu0 %v74
  %513 = vmatpush.msra.mxu0 %v72
  %514 = vmatpush.msra.mxu0 %v70
  %515 = vmatmul.f32.gmra.mxu0 %v52
  %v516 = vpop.f32.mrf.mxu0
  %v517 = vadd.f32 %v393, %v516
  %518 = vmatmul.f32.gmra.mxu0 %v55
  %v519 = vpop.f32.mrf.mxu0
  %v520 = vadd.f32 %v396, %v519
  %521 = vmatmul.f32.gmra.mxu0 %v61
  %v522 = vpop.f32.mrf.mxu0
  %v523 = vadd.f32 %v399, %v522
  %524 = vmatmul.f32.gmra.mxu0 %v64
  %v525 = vpop.f32.mrf.mxu0
  %v526 = vadd.f32 %v402, %v525
  %527 = vdwg.mxu0
  %528 = vmatpush.msra.mxu0 %v132
  %529 = vmatpush.msra.mxu0 %v130
  %530 = vmatpush.msra.mxu0 %v128
  %531 = vmatpush.msra.mxu0 %v126
  %532 = vmatpush.msra.mxu0 %v124
  %533 = vmatpush.msra.mxu0 %v122
  %534 = vmatpush.msra.mxu0 %v120
  %535 = vmatpush.msra.mxu0 %v118
  %536 = vmatpush.msra.mxu0 %v116
  %537 = vmatpush.msra.mxu0 %v114
  %538 = vmatpush.msra.mxu0 %v112
  %539 = vmatpush.msra.mxu0 %v110
  %540 = vmatpush.msra.mxu0 %v108
  %541 = vmatpush.msra.mxu0 %v106
  %542 = vmatpush.msra.mxu0 %v104
  %543 = vmatpush.msra.mxu0 %v102
  %544 = vmatmul.f32.gmra.mxu0 %v53
  %v545 = vpop.f32.mrf.mxu0
  %v546 = vadd.f32 %v517, %v545
  %547 = vmatmul.f32.gmra.mxu0 %v56
  %v548 = vpop.f32.mrf.mxu0
  %v549 = vadd.f32 %v520, %v548
  %550 = vmatmul.f32.gmra.mxu0 %v62
  %v551 = vpop.f32.mrf.mxu0
  %v552 = vadd.f32 %v523, %v551
  %553 = vmatmul.f32.gmra.mxu0 %v65
  %v554 = vpop.f32.mrf.mxu0
  %v555 = vadd.f32 %v526, %v554
  %556 = vdwg.mxu0
  %557 = vmatpush.msra.mxu0 0.0
  %558 = vmatpush.msra.mxu0 0.0
  %559 = vmatpush.msra.mxu0 0.0
  %560 = vmatpush.msra.mxu0 %v158
  %561 = vmatpush.msra.mxu0 %v156
  %562 = vmatpush.msra.mxu0 %v154
  %563 = vmatpush.msra.mxu0 %v152
  %564 = vmatpush.msra.mxu0 %v150
  %565 = vmatpush.msra.mxu0 %v148
  %566 = vmatpush.msra.mxu0 %v146
  %567 = vmatpush.msra.mxu0 %v144
  %568 = vmatpush.msra.mxu0 %v142
  %569 = vmatpush.msra.mxu0 %v140
  %570 = vmatpush.msra.mxu0 %v138
  %571 = vmatpush.msra.mxu0 %v136
  %572 = vmatpush.msra.mxu0 %v134
  %573 = vmatmul.f32.gmra.mxu0 %v491
  %v574 = vpop.f32.mrf.mxu0
  %v575 = vadd.f32 %v546, %v574
  %576 = vmatmul.f32.gmra.mxu0 %v493
  %v577 = vpop.f32.mrf.mxu0
  %v578 = vadd.f32 %v549, %v577
  %579 = vmatmul.f32.gmra.mxu0 %v495
  %v580 = vpop.f32.mrf.mxu0
  %v581 = vadd.f32 %v552, %v580
  %582 = vmatmul.f32.gmra.mxu0 %v497
  %v583 = vpop.f32.mrf.mxu0
  %v584 = vadd.f32 %v555, %v583
  %585 = vdwg.mxu0
  %586 = vmatpush.msra.mxu0 %v101
  %587 = vmatpush.msra.mxu0 %v99
  %588 = vmatpush.msra.mxu0 %v97
  %589 = vmatpush.msra.mxu0 %v95
  %590 = vmatpush.msra.mxu0 %v93
  %591 = vmatpush.msra.mxu0 %v91
  %592 = vmatpush.msra.mxu0 %v89
  %593 = vmatpush.msra.mxu0 %v87
  %594 = vmatpush.msra.mxu0 %v85
  %595 = vmatpush.msra.mxu0 %v83
  %596 = vmatpush.msra.mxu0 %v81
  %597 = vmatpush.msra.mxu0 %v79
  %598 = vmatpush.msra.mxu0 %v77
  %599 = vmatpush.msra.mxu0 %v75
  %600 = vmatpush.msra.mxu0 %v73
  %601 = vmatpush.msra.mxu0 %v71
  %602 = vmatmul.f32.gmra.mxu0 %v52
  %v603 = vpop.f32.mrf.mxu0
  %v604 = vadd.f32 %v480, %v603
  %605 = vmatmul.f32.gmra.mxu0 %v55
  %v606 = vpop.f32.mrf.mxu0
  %v607 = vadd.f32 %v483, %v606
  %608 = vmatmul.f32.gmra.mxu0 %v61
  %v609 = vpop.f32.mrf.mxu0
  %v610 = vadd.f32 %v486, %v609
  %611 = vmatmul.f32.gmra.mxu0 %v64
  %v612 = vpop.f32.mrf.mxu0
  %v613 = vadd.f32 %v489, %v612
  %614 = vdwg.mxu0
  %615 = vmatpush.msra.mxu0 %v133
  %616 = vmatpush.msra.mxu0 %v131
  %617 = vmatpush.msra.mxu0 %v129
  %618 = vmatpush.msra.mxu0 %v127
  %619 = vmatpush.msra.mxu0 %v125
  %620 = vmatpush.msra.mxu0 %v123
  %621 = vmatpush.msra.mxu0 %v121
  %622 = vmatpush.msra.mxu0 %v119
  %623 = vmatpush.msra.mxu0 %v117
  %624 = vmatpush.msra.mxu0 %v115
  %625 = vmatpush.msra.mxu0 %v113
  %626 = vmatpush.msra.mxu0 %v111
  %627 = vmatpush.msra.mxu0 %v109
  %628 = vmatpush.msra.mxu0 %v107
  %629 = vmatpush.msra.mxu0 %v105
  %630 = vmatpush.msra.mxu0 %v103
  %631 = vmatmul.f32.gmra.mxu0 %v53
  %v632 = vpop.f32.mrf.mxu0
  %v633 = vadd.f32 %v604, %v632
  %634 = vmatmul.f32.gmra.mxu0 %v56
  %v635 = vpop.f32.mrf.mxu0
  %v636 = vadd.f32 %v607, %v635
  %637 = vmatmul.f32.gmra.mxu0 %v62
  %v638 = vpop.f32.mrf.mxu0
  %v639 = vadd.f32 %v610, %v638
  %640 = vmatmul.f32.gmra.mxu0 %v65
  %v641 = vpop.f32.mrf.mxu0
  %v642 = vadd.f32 %v613, %v641
  %643 = vdwg.mxu0
  %644 = vmatpush.msra.mxu0 0.0
  %645 = vmatpush.msra.mxu0 0.0
  %646 = vmatpush.msra.mxu0 0.0
  %647 = vmatpush.msra.mxu0 %v159
  %648 = vmatpush.msra.mxu0 %v157
  %649 = vmatpush.msra.mxu0 %v155
  %650 = vmatpush.msra.mxu0 %v153
  %651 = vmatpush.msra.mxu0 %v151
  %652 = vmatpush.msra.mxu0 %v149
  %653 = vmatpush.msra.mxu0 %v147
  %654 = vmatpush.msra.mxu0 %v145
  %655 = vmatpush.msra.mxu0 %v143
  %656 = vmatpush.msra.mxu0 %v141
  %657 = vmatpush.msra.mxu0 %v139
  %658 = vmatpush.msra.mxu0 %v137
  %659 = vmatpush.msra.mxu0 %v135
  %660 = vmatmul.f32.gmra.mxu0 %v491
  %v661 = vpop.f32.mrf.mxu0
  %v662 = vadd.f32 %v633, %v661
  %663 = vmatmul.f32.gmra.mxu0 %v493
  %v664 = vpop.f32.mrf.mxu0
  %v665 = vadd.f32 %v636, %v664
  %666 = vmatmul.f32.gmra.mxu0 %v495
  %v667 = vpop.f32.mrf.mxu0
  %v668 = vadd.f32 %v639, %v667
  %669 = vmatmul.f32.gmra.mxu0 %v497
  %v670 = vpop.f32.mrf.mxu0
  %v671 = vadd.f32 %v642, %v670
  %672 = vdwg.mxu0
  %vm673 = vcmask 1045504
  %v674 = vrot.slane %v52, 2
  %v675 = vrot.slane %v55, 2
  %v676 = vsel %vm673, %v674, %v675
  %v677 = vrot.slane %v53, 2
  %v678 = vrot.slane %v56, 2
  %v679 = vsel %vm673, %v677, %v678
  %v680 = vrot.slane %v54, 2
  %v681 = vrot.slane %v57, 2
  %v682 = vsel %vm673, %v680, %v681
  %v683 = vrot.slane %v58, 2
  %v684 = vsel %vm673, %v675, %v683
  %v685 = vrot.slane %v59, 2
  %v686 = vsel %vm673, %v678, %v685
  %v687 = vrot.slane %v60, 2
  %v688 = vsel %vm673, %v681, %v687
  %v689 = vrot.slane %v61, 2
  %v690 = vrot.slane %v64, 2
  %v691 = vsel %vm673, %v689, %v690
  %v692 = vrot.slane %v62, 2
  %v693 = vrot.slane %v65, 2
  %v694 = vsel %vm673, %v692, %v693
  %v695 = vrot.slane %v63, 2
  %v696 = vrot.slane %v66, 2
  %v697 = vsel %vm673, %v695, %v696
  %v698 = vrot.slane %v67, 2
  %v699 = vsel %vm673, %v690, %v698
  %v700 = vrot.slane %v68, 2
  %v701 = vsel %vm673, %v693, %v700
  %v702 = vrot.slane %v69, 2
  %v703 = vsel %vm673, %v696, %v702
  %s712 = scalar_lea.vmem %s1, 1440
  %v713 = vld [vmem:[%s712] sm:$0xff]
  %v714 = vld [vmem:[%s712 + $0x8] sm:$0xff]
  %v715 = vld [vmem:[%s712 + $0x10] sm:$0xff]
  %v716 = vld [vmem:[%s712 + $0x18] sm:$0xff]
  %v717 = vld [vmem:[%s712 + $0x20] sm:$0xff]
  %v718 = vld [vmem:[%s712 + $0x28] sm:$0xff]
  %v719 = vld [vmem:[%s712 + $0x30] sm:$0xff]
  %v720 = vld [vmem:[%s712 + $0x38] sm:$0xff]
  %v721 = vld [vmem:[%s712 + $0x40] sm:$0xff]
  %v722 = vld [vmem:[%s712 + $0x48] sm:$0xff]
  %v723 = vld [vmem:[%s712 + $0x50] sm:$0xff]
  %v724 = vld [vmem:[%s712 + $0x58] sm:$0xff]
  %v725 = vld [vmem:[%s712 + $0x60] sm:$0xff]
  %v726 = vld [vmem:[%s712 + $0x68] sm:$0xff]
  %v727 = vld [vmem:[%s712 + $0x70] sm:$0xff]
  %v728 = vld [vmem:[%s712 + $0x78] sm:$0xff]
  %v729 = vld [vmem:[%s712 + $0x80] sm:$0xff]
  %v730 = vld [vmem:[%s712 + $0x88] sm:$0xff]
  %v731 = vld [vmem:[%s712 + $0x90] sm:$0xff]
  %v732 = vld [vmem:[%s712 + $0x98] sm:$0xff]
  %v733 = vld [vmem:[%s712 + $0xa0] sm:$0xff]
  %v734 = vld [vmem:[%s712 + $0xa8] sm:$0xff]
  %v735 = vld [vmem:[%s712 + $0xb0] sm:$0xff]
  %v736 = vld [vmem:[%s712 + $0xb8] sm:$0xff]
  %v737 = vld [vmem:[%s712 + $0xc0] sm:$0xff]
  %v738 = vld [vmem:[%s712 + $0xc8] sm:$0xff]
  %v739 = vld [vmem:[%s712 + $0xd0] sm:$0xff]
  %v740 = vld [vmem:[%s712 + $0xd8] sm:$0xff]
  %v741 = vld [vmem:[%s712 + $0xe0] sm:$0xff]
  %v742 = vld [vmem:[%s712 + $0xe8] sm:$0xff]
  %v743 = vld [vmem:[%s712 + $0xf0] sm:$0xff]
  %v744 = vld [vmem:[%s712 + $0xf8] sm:$0xff]
  %v745 = vld [vmem:[%s712 + $0x100] sm:$0xff]
  %v746 = vld [vmem:[%s712 + $0x108] sm:$0xff]
  %v747 = vld [vmem:[%s712 + $0x110] sm:$0xff]
  %v748 = vld [vmem:[%s712 + $0x118] sm:$0xff]
  %v749 = vld [vmem:[%s712 + $0x120] sm:$0xff]
  %v750 = vld [vmem:[%s712 + $0x128] sm:$0xff]
  %v751 = vld [vmem:[%s712 + $0x130] sm:$0xff]
  %v752 = vld [vmem:[%s712 + $0x138] sm:$0xff]
  %v753 = vld [vmem:[%s712 + $0x140] sm:$0xff]
  %v754 = vld [vmem:[%s712 + $0x148] sm:$0xff]
  %v755 = vld [vmem:[%s712 + $0x150] sm:$0xff]
  %v756 = vld [vmem:[%s712 + $0x158] sm:$0xff]
  %v757 = vld [vmem:[%s712 + $0x160] sm:$0xff]
  %v758 = vld [vmem:[%s712 + $0x168] sm:$0xff]
  %v759 = vld [vmem:[%s712 + $0x170] sm:$0xff]
  %v760 = vld [vmem:[%s712 + $0x178] sm:$0xff]
  %v761 = vld [vmem:[%s712 + $0x180] sm:$0xff]
  %v762 = vld [vmem:[%s712 + $0x188] sm:$0xff]
  %v763 = vld [vmem:[%s712 + $0x190] sm:$0xff]
  %v764 = vld [vmem:[%s712 + $0x198] sm:$0xff]
  %v765 = vld [vmem:[%s712 + $0x1a0] sm:$0xff]
  %v766 = vld [vmem:[%s712 + $0x1a8] sm:$0xff]
  %v767 = vld [vmem:[%s712 + $0x1b0] sm:$0xff]
  %v768 = vld [vmem:[%s712 + $0x1b8] sm:$0xff]
  %v769 = vld [vmem:[%s712 + $0x1c0] sm:$0xff]
  %v770 = vld [vmem:[%s712 + $0x1c8] sm:$0xff]
  %v771 = vld [vmem:[%s712 + $0x1d0] sm:$0xff]
  %v772 = vld [vmem:[%s712 + $0x1d8] sm:$0xff]
  %v773 = vld [vmem:[%s712 + $0x1e0] sm:$0xff]
  %v774 = vld [vmem:[%s712 + $0x1e8] sm:$0xff]
  %v775 = vld [vmem:[%s712 + $0x1f0] sm:$0xff]
  %v776 = vld [vmem:[%s712 + $0x1f8] sm:$0xff]
  %v777 = vld [vmem:[%s712 + $0x200] sm:$0xff]
  %v778 = vld [vmem:[%s712 + $0x208] sm:$0xff]
  %v779 = vld [vmem:[%s712 + $0x210] sm:$0xff]
  %v780 = vld [vmem:[%s712 + $0x218] sm:$0xff]
  %v781 = vld [vmem:[%s712 + $0x220] sm:$0xff]
  %v782 = vld [vmem:[%s712 + $0x228] sm:$0xff]
  %v783 = vld [vmem:[%s712 + $0x230] sm:$0xff]
  %v784 = vld [vmem:[%s712 + $0x238] sm:$0xff]
  %v785 = vld [vmem:[%s712 + $0x240] sm:$0xff]
  %v786 = vld [vmem:[%s712 + $0x248] sm:$0xff]
  %v787 = vld [vmem:[%s712 + $0x250] sm:$0xff]
  %v788 = vld [vmem:[%s712 + $0x258] sm:$0xff]
  %v789 = vld [vmem:[%s712 + $0x260] sm:$0xff]
  %v790 = vld [vmem:[%s712 + $0x268] sm:$0xff]
  %v791 = vld [vmem:[%s712 + $0x270] sm:$0xff]
  %v792 = vld [vmem:[%s712 + $0x278] sm:$0xff]
  %v793 = vld [vmem:[%s712 + $0x280] sm:$0xff]
  %v794 = vld [vmem:[%s712 + $0x288] sm:$0xff]
  %v795 = vld [vmem:[%s712 + $0x290] sm:$0xff]
  %v796 = vld [vmem:[%s712 + $0x298] sm:$0xff]
  %v797 = vld [vmem:[%s712 + $0x2a0] sm:$0xff]
  %v798 = vld [vmem:[%s712 + $0x2a8] sm:$0xff]
  %v799 = vld [vmem:[%s712 + $0x2b0] sm:$0xff]
  %v800 = vld [vmem:[%s712 + $0x2b8] sm:$0xff]
  %v801 = vld [vmem:[%s712 + $0x2c0] sm:$0xff]
  %v802 = vld [vmem:[%s712 + $0x2c8] sm:$0xff]
  %v803 = vsel %vm308, %v682, 0
  %v805 = vsel %vm308, %v688, 0
  %v807 = vsel %vm308, %v697, 0
  %v809 = vsel %vm308, %v703, 0
  %811 = vmatpush.msra.mxu0 %v743
  %812 = vmatpush.msra.mxu0 %v741
  %813 = vmatpush.msra.mxu0 %v739
  %814 = vmatpush.msra.mxu0 %v737
  %815 = vmatpush.msra.mxu0 %v735
  %816 = vmatpush.msra.mxu0 %v733
  %817 = vmatpush.msra.mxu0 %v731
  %818 = vmatpush.msra.mxu0 %v729
  %819 = vmatpush.msra.mxu0 %v727
  %820 = vmatpush.msra.mxu0 %v725
  %821 = vmatpush.msra.mxu0 %v723
  %822 = vmatpush.msra.mxu0 %v721
  %823 = vmatpush.msra.mxu0 %v719
  %824 = vmatpush.msra.mxu0 %v717
  %825 = vmatpush.msra.mxu0 %v715
  %826 = vmatpush.msra.mxu0 %v713
  %827 = vmatmul.f32.gmra.mxu0 %v676
  %v828 = vpop.f32.mrf.mxu0
  %v829 = vadd.f32 0.0, %v828
  %830 = vmatmul.f32.gmra.mxu0 %v684
  %v831 = vpop.f32.mrf.mxu0
  %v832 = vadd.f32 0.0, %v831
  %833 = vmatmul.f32.gmra.mxu0 %v691
  %v834 = vpop.f32.mrf.mxu0
  %v835 = vadd.f32 0.0, %v834
  %836 = vmatmul.f32.gmra.mxu0 %v699
  %v837 = vpop.f32.mrf.mxu0
  %v838 = vadd.f32 0.0, %v837
  %839 = vdwg.mxu0
  %840 = vmatpush.msra.mxu0 %v775
  %841 = vmatpush.msra.mxu0 %v773
  %842 = vmatpush.msra.mxu0 %v771
  %843 = vmatpush.msra.mxu0 %v769
  %844 = vmatpush.msra.mxu0 %v767
  %845 = vmatpush.msra.mxu0 %v765
  %846 = vmatpush.msra.mxu0 %v763
  %847 = vmatpush.msra.mxu0 %v761
  %848 = vmatpush.msra.mxu0 %v759
  %849 = vmatpush.msra.mxu0 %v757
  %850 = vmatpush.msra.mxu0 %v755
  %851 = vmatpush.msra.mxu0 %v753
  %852 = vmatpush.msra.mxu0 %v751
  %853 = vmatpush.msra.mxu0 %v749
  %854 = vmatpush.msra.mxu0 %v747
  %855 = vmatpush.msra.mxu0 %v745
  %856 = vmatmul.f32.gmra.mxu0 %v679
  %v857 = vpop.f32.mrf.mxu0
  %v858 = vadd.f32 %v829, %v857
  %859 = vmatmul.f32.gmra.mxu0 %v686
  %v860 = vpop.f32.mrf.mxu0
  %v861 = vadd.f32 %v832, %v860
  %862 = vmatmul.f32.gmra.mxu0 %v694
  %v863 = vpop.f32.mrf.mxu0
  %v864 = vadd.f32 %v835, %v863
  %865 = vmatmul.f32.gmra.mxu0 %v701
  %v866 = vpop.f32.mrf.mxu0
  %v867 = vadd.f32 %v838, %v866
  %868 = vdwg.mxu0
  %869 = vmatpush.msra.mxu0 0.0
  %870 = vmatpush.msra.mxu0 0.0
  %871 = vmatpush.msra.mxu0 0.0
  %872 = vmatpush.msra.mxu0 %v801
  %873 = vmatpush.msra.mxu0 %v799
  %874 = vmatpush.msra.mxu0 %v797
  %875 = vmatpush.msra.mxu0 %v795
  %876 = vmatpush.msra.mxu0 %v793
  %877 = vmatpush.msra.mxu0 %v791
  %878 = vmatpush.msra.mxu0 %v789
  %879 = vmatpush.msra.mxu0 %v787
  %880 = vmatpush.msra.mxu0 %v785
  %881 = vmatpush.msra.mxu0 %v783
  %882 = vmatpush.msra.mxu0 %v781
  %883 = vmatpush.msra.mxu0 %v779
  %884 = vmatpush.msra.mxu0 %v777
  %885 = vmatmul.f32.gmra.mxu0 %v803
  %v886 = vpop.f32.mrf.mxu0
  %v887 = vadd.f32 %v858, %v886
  %888 = vmatmul.f32.gmra.mxu0 %v805
  %v889 = vpop.f32.mrf.mxu0
  %v890 = vadd.f32 %v861, %v889
  %891 = vmatmul.f32.gmra.mxu0 %v807
  %v892 = vpop.f32.mrf.mxu0
  %v893 = vadd.f32 %v864, %v892
  %894 = vmatmul.f32.gmra.mxu0 %v809
  %v895 = vpop.f32.mrf.mxu0
  %v896 = vadd.f32 %v867, %v895
  %897 = vdwg.mxu0
  %898 = vmatpush.msra.mxu0 %v744
  %899 = vmatpush.msra.mxu0 %v742
  %900 = vmatpush.msra.mxu0 %v740
  %901 = vmatpush.msra.mxu0 %v738
  %902 = vmatpush.msra.mxu0 %v736
  %903 = vmatpush.msra.mxu0 %v734
  %904 = vmatpush.msra.mxu0 %v732
  %905 = vmatpush.msra.mxu0 %v730
  %906 = vmatpush.msra.mxu0 %v728
  %907 = vmatpush.msra.mxu0 %v726
  %908 = vmatpush.msra.mxu0 %v724
  %909 = vmatpush.msra.mxu0 %v722
  %910 = vmatpush.msra.mxu0 %v720
  %911 = vmatpush.msra.mxu0 %v718
  %912 = vmatpush.msra.mxu0 %v716
  %913 = vmatpush.msra.mxu0 %v714
  %914 = vmatmul.f32.gmra.mxu0 %v676
  %v915 = vpop.f32.mrf.mxu0
  %v916 = vadd.f32 0.0, %v915
  %917 = vmatmul.f32.gmra.mxu0 %v684
  %v918 = vpop.f32.mrf.mxu0
  %v919 = vadd.f32 0.0, %v918
  %920 = vmatmul.f32.gmra.mxu0 %v691
  %v921 = vpop.f32.mrf.mxu0
  %v922 = vadd.f32 0.0, %v921
  %923 = vmatmul.f32.gmra.mxu0 %v699
  %v924 = vpop.f32.mrf.mxu0
  %v925 = vadd.f32 0.0, %v924
  %926 = vdwg.mxu0
  %927 = vmatpush.msra.mxu0 %v776
  %928 = vmatpush.msra.mxu0 %v774
  %929 = vmatpush.msra.mxu0 %v772
  %930 = vmatpush.msra.mxu0 %v770
  %931 = vmatpush.msra.mxu0 %v768
  %932 = vmatpush.msra.mxu0 %v766
  %933 = vmatpush.msra.mxu0 %v764
  %934 = vmatpush.msra.mxu0 %v762
  %935 = vmatpush.msra.mxu0 %v760
  %936 = vmatpush.msra.mxu0 %v758
  %937 = vmatpush.msra.mxu0 %v756
  %938 = vmatpush.msra.mxu0 %v754
  %939 = vmatpush.msra.mxu0 %v752
  %940 = vmatpush.msra.mxu0 %v750
  %941 = vmatpush.msra.mxu0 %v748
  %942 = vmatpush.msra.mxu0 %v746
  %943 = vmatmul.f32.gmra.mxu0 %v679
  %v944 = vpop.f32.mrf.mxu0
  %v945 = vadd.f32 %v916, %v944
  %946 = vmatmul.f32.gmra.mxu0 %v686
  %v947 = vpop.f32.mrf.mxu0
  %v948 = vadd.f32 %v919, %v947
  %949 = vmatmul.f32.gmra.mxu0 %v694
  %v950 = vpop.f32.mrf.mxu0
  %v951 = vadd.f32 %v922, %v950
  %952 = vmatmul.f32.gmra.mxu0 %v701
  %v953 = vpop.f32.mrf.mxu0
  %v954 = vadd.f32 %v925, %v953
  %955 = vdwg.mxu0
  %956 = vmatpush.msra.mxu0 0.0
  %957 = vmatpush.msra.mxu0 0.0
  %958 = vmatpush.msra.mxu0 0.0
  %959 = vmatpush.msra.mxu0 %v802
  %960 = vmatpush.msra.mxu0 %v800
  %961 = vmatpush.msra.mxu0 %v798
  %962 = vmatpush.msra.mxu0 %v796
  %963 = vmatpush.msra.mxu0 %v794
  %964 = vmatpush.msra.mxu0 %v792
  %965 = vmatpush.msra.mxu0 %v790
  %966 = vmatpush.msra.mxu0 %v788
  %967 = vmatpush.msra.mxu0 %v786
  %968 = vmatpush.msra.mxu0 %v784
  %969 = vmatpush.msra.mxu0 %v782
  %970 = vmatpush.msra.mxu0 %v780
  %971 = vmatpush.msra.mxu0 %v778
  %972 = vmatmul.f32.gmra.mxu0 %v803
  %v973 = vpop.f32.mrf.mxu0
  %v974 = vadd.f32 %v945, %v973
  %975 = vmatmul.f32.gmra.mxu0 %v805
  %v976 = vpop.f32.mrf.mxu0
  %v977 = vadd.f32 %v948, %v976
  %978 = vmatmul.f32.gmra.mxu0 %v807
  %v979 = vpop.f32.mrf.mxu0
  %v980 = vadd.f32 %v951, %v979
  %981 = vmatmul.f32.gmra.mxu0 %v809
  %v982 = vpop.f32.mrf.mxu0
  %v983 = vadd.f32 %v954, %v982
  %984 = vdwg.mxu0
  %v985 = vadd.f32 %v575, %v887
  %v986 = vadd.f32 %v662, %v974
  %v987 = vadd.f32 %v578, %v890
  %v988 = vadd.f32 %v665, %v977
  %v989 = vadd.f32 %v581, %v893
  %v990 = vadd.f32 %v668, %v980
  %v991 = vadd.f32 %v584, %v896
  %v992 = vadd.f32 %v671, %v983
  %v993 = vld [vmem:[%s2] sm:$0x3]
  %v995 = vperm.slane %v993, 0
  %v996 = vperm.slane %v993, 1
  %v999 = vadd.f32 %v985, %v995
  %v1000 = vadd.f32 %v986, %v996
  %v1001 = vadd.f32 %v987, %v995
  %v1002 = vadd.f32 %v988, %v996
  %v1003 = vadd.f32 %v989, %v995
  %v1004 = vadd.f32 %v990, %v996
  %v1005 = vadd.f32 %v991, %v995
  %v1006 = vadd.f32 %v992, %v996
  %v1015 = vrot.slane %v999, 1
  %v1016 = vrot.slane %v1001, 1
  %v1017 = vsel %vm178, %v1015, %v1016
  %v1018 = vrot.slane %v1000, 1
  %v1019 = vrot.slane %v1002, 1
  %v1020 = vsel %vm178, %v1018, %v1019
  %v1021 = vrot.slane %v1003, 1
  %v1022 = vsel %vm178, %v1016, %v1021
  %v1023 = vrot.slane %v1004, 1
  %v1024 = vsel %vm178, %v1019, %v1023
  %v1025 = vrot.slane %v1005, 1
  %v1026 = vsel %vm178, %v1021, %v1025
  %v1027 = vrot.slane %v1006, 1
  %v1028 = vsel %vm178, %v1023, %v1027
  %v1037 = vmax.f32 %v999, %v1017
  %v1038 = vmax.f32 %v1000, %v1020
  %v1039 = vmax.f32 %v1001, %v1022
  %v1040 = vmax.f32 %v1002, %v1024
  %v1041 = vmax.f32 %v1003, %v1026
  %v1042 = vmax.f32 %v1004, %v1028
  %v1043 = vmax.f32 %v1005, %v1025
  %v1044 = vmax.f32 %v1006, %v1027
  %v1045 = vld [vmem:[%s3] sm:$0xff]
  %v1046 = vld [vmem:[%s3 + $0x8] sm:$0xff]
  %v1047 = vld [vmem:[%s3 + $0x10] sm:$0xff]
  %v1048 = vld [vmem:[%s3 + $0x18] sm:$0xff]
  %v1049 = vld [vmem:[%s3 + $0x20] sm:$0xff]
  %v1050 = vld [vmem:[%s3 + $0x28] sm:$0xff]
  %v1051 = vld [vmem:[%s3 + $0x30] sm:$0xff]
  %v1052 = vld [vmem:[%s3 + $0x38] sm:$0xff]
  %v1053 = vld [vmem:[%s3 + $0x40] sm:$0xff]
  %v1054 = vld [vmem:[%s3 + $0x48] sm:$0xff]
  %v1055 = vld [vmem:[%s3 + $0x50] sm:$0xff]
  %v1056 = vld [vmem:[%s3 + $0x58] sm:$0xff]
  %v1057 = vld [vmem:[%s3 + $0x60] sm:$0xff]
  %v1058 = vld [vmem:[%s3 + $0x68] sm:$0xff]
  %v1059 = vld [vmem:[%s3 + $0x70] sm:$0xff]
  %v1060 = vld [vmem:[%s3 + $0x78] sm:$0xff]
  %v1061 = vld [vmem:[%s3 + $0x80] sm:$0xff]
  %v1062 = vld [vmem:[%s3 + $0x88] sm:$0xff]
  %v1063 = vld [vmem:[%s3 + $0x90] sm:$0xff]
  %v1064 = vld [vmem:[%s3 + $0x98] sm:$0xff]
  %v1065 = vld [vmem:[%s3 + $0xa0] sm:$0xff]
  %v1066 = vld [vmem:[%s3 + $0xa8] sm:$0xff]
  %v1067 = vld [vmem:[%s3 + $0xb0] sm:$0xff]
  %v1068 = vld [vmem:[%s3 + $0xb8] sm:$0xff]
  %v1069 = vld [vmem:[%s3 + $0xc0] sm:$0xff]
  %v1070 = vld [vmem:[%s3 + $0xc8] sm:$0xff]
  %v1071 = vld [vmem:[%s3 + $0xd0] sm:$0xff]
  %v1072 = vld [vmem:[%s3 + $0xd8] sm:$0xff]
  %v1073 = vld [vmem:[%s3 + $0xe0] sm:$0xff]
  %v1074 = vld [vmem:[%s3 + $0xe8] sm:$0xff]
  %v1075 = vld [vmem:[%s3 + $0xf0] sm:$0xff]
  %v1076 = vld [vmem:[%s3 + $0xf8] sm:$0xff]
  %v1077 = vld [vmem:[%s3 + $0x100] sm:$0xff]
  %v1078 = vld [vmem:[%s3 + $0x108] sm:$0xff]
  %v1079 = vld [vmem:[%s3 + $0x110] sm:$0xff]
  %v1080 = vld [vmem:[%s3 + $0x118] sm:$0xff]
  %v1081 = vld [vmem:[%s3 + $0x120] sm:$0xff]
  %v1082 = vld [vmem:[%s3 + $0x128] sm:$0xff]
  %v1083 = vld [vmem:[%s3 + $0x130] sm:$0xff]
  %v1084 = vld [vmem:[%s3 + $0x138] sm:$0xff]
  %vm1085 = vcmask 261120
  %v1087 = vsel %vm1085, %v1038, 0
  %v1090 = vsel %vm1085, %v1040, 0
  %v1093 = vsel %vm1085, %v1042, 0
  %v1096 = vsel %vm1085, %v1044, 0
  %1098 = vmatpush.msra.mxu0 %v1075
  %1099 = vmatpush.msra.mxu0 %v1073
  %1100 = vmatpush.msra.mxu0 %v1071
  %1101 = vmatpush.msra.mxu0 %v1069
  %1102 = vmatpush.msra.mxu0 %v1067
  %1103 = vmatpush.msra.mxu0 %v1065
  %1104 = vmatpush.msra.mxu0 %v1063
  %1105 = vmatpush.msra.mxu0 %v1061
  %1106 = vmatpush.msra.mxu0 %v1059
  %1107 = vmatpush.msra.mxu0 %v1057
  %1108 = vmatpush.msra.mxu0 %v1055
  %1109 = vmatpush.msra.mxu0 %v1053
  %1110 = vmatpush.msra.mxu0 %v1051
  %1111 = vmatpush.msra.mxu0 %v1049
  %1112 = vmatpush.msra.mxu0 %v1047
  %1113 = vmatpush.msra.mxu0 %v1045
  %1114 = vmatmul.f32.gmra.mxu0 %v1037
  %v1115 = vpop.f32.mrf.mxu0
  %v1116 = vadd.f32 0.0, %v1115
  %1117 = vmatmul.f32.gmra.mxu0 %v1039
  %v1118 = vpop.f32.mrf.mxu0
  %v1119 = vadd.f32 0.0, %v1118
  %1120 = vmatmul.f32.gmra.mxu0 %v1041
  %v1121 = vpop.f32.mrf.mxu0
  %v1122 = vadd.f32 0.0, %v1121
  %1123 = vmatmul.f32.gmra.mxu0 %v1043
  %v1124 = vpop.f32.mrf.mxu0
  %v1125 = vadd.f32 0.0, %v1124
  %1126 = vdwg.mxu0
  %1127 = vmatpush.msra.mxu0 0.0
  %1128 = vmatpush.msra.mxu0 0.0
  %1129 = vmatpush.msra.mxu0 0.0
  %1130 = vmatpush.msra.mxu0 0.0
  %1131 = vmatpush.msra.mxu0 0.0
  %1132 = vmatpush.msra.mxu0 0.0
  %1133 = vmatpush.msra.mxu0 0.0
  %1134 = vmatpush.msra.mxu0 0.0
  %1135 = vmatpush.msra.mxu0 0.0
  %1136 = vmatpush.msra.mxu0 0.0
  %1137 = vmatpush.msra.mxu0 0.0
  %1138 = vmatpush.msra.mxu0 0.0
  %1139 = vmatpush.msra.mxu0 %v1083
  %1140 = vmatpush.msra.mxu0 %v1081
  %1141 = vmatpush.msra.mxu0 %v1079
  %1142 = vmatpush.msra.mxu0 %v1077
  %1143 = vmatmul.f32.gmra.mxu0 %v1087
  %v1144 = vpop.f32.mrf.mxu0
  %v1145 = vadd.f32 %v1116, %v1144
  %1146 = vmatmul.f32.gmra.mxu0 %v1090
  %v1147 = vpop.f32.mrf.mxu0
  %v1148 = vadd.f32 %v1119, %v1147
  %1149 = vmatmul.f32.gmra.mxu0 %v1093
  %v1150 = vpop.f32.mrf.mxu0
  %v1151 = vadd.f32 %v1122, %v1150
  %1152 = vmatmul.f32.gmra.mxu0 %v1096
  %v1153 = vpop.f32.mrf.mxu0
  %v1154 = vadd.f32 %v1125, %v1153
  %1155 = vdwg.mxu0
  %1156 = vmatpush.msra.mxu0 %v1076
  %1157 = vmatpush.msra.mxu0 %v1074
  %1158 = vmatpush.msra.mxu0 %v1072
  %1159 = vmatpush.msra.mxu0 %v1070
  %1160 = vmatpush.msra.mxu0 %v1068
  %1161 = vmatpush.msra.mxu0 %v1066
  %1162 = vmatpush.msra.mxu0 %v1064
  %1163 = vmatpush.msra.mxu0 %v1062
  %1164 = vmatpush.msra.mxu0 %v1060
  %1165 = vmatpush.msra.mxu0 %v1058
  %1166 = vmatpush.msra.mxu0 %v1056
  %1167 = vmatpush.msra.mxu0 %v1054
  %1168 = vmatpush.msra.mxu0 %v1052
  %1169 = vmatpush.msra.mxu0 %v1050
  %1170 = vmatpush.msra.mxu0 %v1048
  %1171 = vmatpush.msra.mxu0 %v1046
  %1172 = vmatmul.f32.gmra.mxu0 %v1037
  %v1173 = vpop.f32.mrf.mxu0
  %v1174 = vadd.f32 0.0, %v1173
  %1175 = vmatmul.f32.gmra.mxu0 %v1039
  %v1176 = vpop.f32.mrf.mxu0
  %v1177 = vadd.f32 0.0, %v1176
  %1178 = vmatmul.f32.gmra.mxu0 %v1041
  %v1179 = vpop.f32.mrf.mxu0
  %v1180 = vadd.f32 0.0, %v1179
  %1181 = vmatmul.f32.gmra.mxu0 %v1043
  %v1182 = vpop.f32.mrf.mxu0
  %v1183 = vadd.f32 0.0, %v1182
  %1184 = vdwg.mxu0
  %1185 = vmatpush.msra.mxu0 0.0
  %1186 = vmatpush.msra.mxu0 0.0
  %1187 = vmatpush.msra.mxu0 0.0
  %1188 = vmatpush.msra.mxu0 0.0
  %1189 = vmatpush.msra.mxu0 0.0
  %1190 = vmatpush.msra.mxu0 0.0
  %1191 = vmatpush.msra.mxu0 0.0
  %1192 = vmatpush.msra.mxu0 0.0
  %1193 = vmatpush.msra.mxu0 0.0
  %1194 = vmatpush.msra.mxu0 0.0
  %1195 = vmatpush.msra.mxu0 0.0
  %1196 = vmatpush.msra.mxu0 0.0
  %1197 = vmatpush.msra.mxu0 %v1084
  %1198 = vmatpush.msra.mxu0 %v1082
  %1199 = vmatpush.msra.mxu0 %v1080
  %1200 = vmatpush.msra.mxu0 %v1078
  %1201 = vmatmul.f32.gmra.mxu0 %v1087
  %v1202 = vpop.f32.mrf.mxu0
  %v1203 = vadd.f32 %v1174, %v1202
  %1204 = vmatmul.f32.gmra.mxu0 %v1090
  %v1205 = vpop.f32.mrf.mxu0
  %v1206 = vadd.f32 %v1177, %v1205
  %1207 = vmatmul.f32.gmra.mxu0 %v1093
  %v1208 = vpop.f32.mrf.mxu0
  %v1209 = vadd.f32 %v1180, %v1208
  %1210 = vmatmul.f32.gmra.mxu0 %v1096
  %v1211 = vpop.f32.mrf.mxu0
  %v1212 = vadd.f32 %v1183, %v1211
  %1213 = vdwg.mxu0
  %v1214 = vmax.f32 %v1037, %v1145
  %v1215 = vmax.f32 %v1038, %v1203
  %v1216 = vmax.f32 %v1039, %v1148
  %v1217 = vmax.f32 %v1040, %v1206
  %v1218 = vmax.f32 %v1041, %v1151
  %v1219 = vmax.f32 %v1042, %v1209
  %v1220 = vmax.f32 %v1043, %v1154
  %v1221 = vmax.f32 %v1044, %v1212
  %v1222 = vld [vmem:[%s4] sm:$0xff]
  %v1223 = vld [vmem:[%s4 + $0x8] sm:$0xff]
  %v1224 = vld [vmem:[%s4 + $0x10] sm:$0xff]
  %v1225 = vld [vmem:[%s4 + $0x18] sm:$0x3f]
  %vm1226 = vcmask 252928
  %v1228 = vsel %vm1226, %v1222, 0
  %v1231 = vsel %vm1226, %v1223, 0
  %v1234 = vsel %vm1226, %v1224, 0
  %v1237 = vsel %vm1226, %v1225, 0
  %v1240 = vsel %vm178, %v1220, 0
  %v1243 = vsel %vm178, %v1221, 0
  %1245 = vmatpush.msra.mxu0 0.0
  %1246 = vmatpush.msra.mxu0 0.0
  %1247 = vmatpush.msra.mxu0 0.0
  %1248 = vmatpush.msra.mxu0 0.0
  %1249 = vmatpush.msra.mxu0 0.0
  %1250 = vmatpush.msra.mxu0 0.0
  %1251 = vmatpush.msra.mxu0 0.0
  %1252 = vmatpush.msra.mxu0 0.0
  %1253 = vmatpush.msra.mxu0 0.0
  %1254 = vmatpush.msra.mxu0 0.0
  %1255 = vmatpush.msra.mxu0 0.0
  %1256 = vmatpush.msra.mxu0 0.0
  %1257 = vmatpush.msra.mxu0 %v1240
  %1258 = vmatpush.msra.mxu0 %v1218
  %1259 = vmatpush.msra.mxu0 %v1216
  %1260 = vmatpush.msra.mxu0 %v1214
  %1261 = vmatmul.f32.gmra.mxu0 %v1228
  %v1262 = vpop.f32.mrf.mxu0
  %v1263 = vadd.f32 0.0, %v1262
  %1264 = vmatmul.f32.gmra.mxu0 %v1231
  %v1265 = vpop.f32.mrf.mxu0
  %v1266 = vadd.f32 0.0, %v1265
  %1267 = vmatmul.f32.gmra.mxu0 %v1234
  %v1268 = vpop.f32.mrf.mxu0
  %v1269 = vadd.f32 0.0, %v1268
  %1270 = vmatmul.f32.gmra.mxu0 %v1237
  %v1271 = vpop.f32.mrf.mxu0
  %v1272 = vadd.f32 0.0, %v1271
  %1273 = vdwg.mxu0
  %1274 = vmatpush.msra.mxu0 0.0
  %1275 = vmatpush.msra.mxu0 0.0
  %1276 = vmatpush.msra.mxu0 0.0
  %1277 = vmatpush.msra.mxu0 0.0
  %1278 = vmatpush.msra.mxu0 0.0
  %1279 = vmatpush.msra.mxu0 0.0
  %1280 = vmatpush.msra.mxu0 0.0
  %1281 = vmatpush.msra.mxu0 0.0
  %1282 = vmatpush.msra.mxu0 0.0
  %1283 = vmatpush.msra.mxu0 0.0
  %1284 = vmatpush.msra.mxu0 0.0
  %1285 = vmatpush.msra.mxu0 0.0
  %1286 = vmatpush.msra.mxu0 %v1243
  %1287 = vmatpush.msra.mxu0 %v1219
  %1288 = vmatpush.msra.mxu0 %v1217
  %1289 = vmatpush.msra.mxu0 %v1215
  %1290 = vmatmul.f32.gmra.mxu0 %v1228
  %v1291 = vpop.f32.mrf.mxu0
  %v1292 = vadd.f32 0.0, %v1291
  %1293 = vmatmul.f32.gmra.mxu0 %v1231
  %v1294 = vpop.f32.mrf.mxu0
  %v1295 = vadd.f32 0.0, %v1294
  %1296 = vmatmul.f32.gmra.mxu0 %v1234
  %v1297 = vpop.f32.mrf.mxu0
  %v1298 = vadd.f32 0.0, %v1297
  %1299 = vmatmul.f32.gmra.mxu0 %v1237
  %v1300 = vpop.f32.mrf.mxu0
  %v1301 = vadd.f32 0.0, %v1300
  %1302 = vdwg.mxu0
  %vm1303 = vcmask 244736
  %v1305 = vsel %vm1303, 1.0, 0
  %v1308 = vsel %vm673, %v1272, 0
  %v1311 = vsel %vm673, %v1301, 0
  %1313 = vmatpush.msra.mxu0 0.0
  %1314 = vmatpush.msra.mxu0 0.0
  %1315 = vmatpush.msra.mxu0 0.0
  %1316 = vmatpush.msra.mxu0 0.0
  %1317 = vmatpush.msra.mxu0 0.0
  %1318 = vmatpush.msra.mxu0 0.0
  %1319 = vmatpush.msra.mxu0 0.0
  %1320 = vmatpush.msra.mxu0 0.0
  %1321 = vmatpush.msra.mxu0 0.0
  %1322 = vmatpush.msra.mxu0 0.0
  %1323 = vmatpush.msra.mxu0 0.0
  %1324 = vmatpush.msra.mxu0 0.0
  %1325 = vmatpush.msra.mxu0 %v1308
  %1326 = vmatpush.msra.mxu0 %v1269
  %1327 = vmatpush.msra.mxu0 %v1266
  %1328 = vmatpush.msra.mxu0 %v1263
  %1329 = vmatmul.f32.gmra.mxu0 %v1305
  %v1330 = vpop.f32.mrf.mxu0
  %v1331 = vadd.f32 0.0, %v1330
  %1332 = vdwg.mxu0
  %1333 = vmatpush.msra.mxu0 0.0
  %1334 = vmatpush.msra.mxu0 0.0
  %1335 = vmatpush.msra.mxu0 0.0
  %1336 = vmatpush.msra.mxu0 0.0
  %1337 = vmatpush.msra.mxu0 0.0
  %1338 = vmatpush.msra.mxu0 0.0
  %1339 = vmatpush.msra.mxu0 0.0
  %1340 = vmatpush.msra.mxu0 0.0
  %1341 = vmatpush.msra.mxu0 0.0
  %1342 = vmatpush.msra.mxu0 0.0
  %1343 = vmatpush.msra.mxu0 0.0
  %1344 = vmatpush.msra.mxu0 0.0
  %1345 = vmatpush.msra.mxu0 %v1311
  %1346 = vmatpush.msra.mxu0 %v1298
  %1347 = vmatpush.msra.mxu0 %v1295
  %1348 = vmatpush.msra.mxu0 %v1292
  %1349 = vmatmul.f32.gmra.mxu0 %v1305
  %v1350 = vpop.f32.mrf.mxu0
  %v1351 = vadd.f32 0.0, %v1350
  %1352 = vdwg.mxu0
  %v1353 = vmul.f32 %v1263, %v1263
  %v1354 = vmul.f32 %v1292, %v1292
  %v1355 = vmul.f32 %v1266, %v1266
  %v1356 = vmul.f32 %v1295, %v1295
  %v1357 = vmul.f32 %v1269, %v1269
  %v1358 = vmul.f32 %v1298, %v1298
  %v1359 = vmul.f32 %v1272, %v1272
  %v1360 = vmul.f32 %v1301, %v1301
  %v1362 = vsel %vm673, %v1359, 0
  %v1365 = vsel %vm673, %v1360, 0
  %1367 = vmatpush.msra.mxu0 0.0
  %1368 = vmatpush.msra.mxu0 0.0
  %1369 = vmatpush.msra.mxu0 0.0
  %1370 = vmatpush.msra.mxu0 0.0
  %1371 = vmatpush.msra.mxu0 0.0
  %1372 = vmatpush.msra.mxu0 0.0
  %1373 = vmatpush.msra.mxu0 0.0
  %1374 = vmatpush.msra.mxu0 0.0
  %1375 = vmatpush.msra.mxu0 0.0
  %1376 = vmatpush.msra.mxu0 0.0
  %1377 = vmatpush.msra.mxu0 0.0
  %1378 = vmatpush.msra.mxu0 0.0
  %1379 = vmatpush.msra.mxu0 %v1362
  %1380 = vmatpush.msra.mxu0 %v1357
  %1381 = vmatpush.msra.mxu0 %v1355
  %1382 = vmatpush.msra.mxu0 %v1353
  %1383 = vmatmul.f32.gmra.mxu0 %v1305
  %v1384 = vpop.f32.mrf.mxu0
  %v1385 = vadd.f32 0.0, %v1384
  %1386 = vdwg.mxu0
  %1387 = vmatpush.msra.mxu0 0.0
  %1388 = vmatpush.msra.mxu0 0.0
  %1389 = vmatpush.msra.mxu0 0.0
  %1390 = vmatpush.msra.mxu0 0.0
  %1391 = vmatpush.msra.mxu0 0.0
  %1392 = vmatpush.msra.mxu0 0.0
  %1393 = vmatpush.msra.mxu0 0.0
  %1394 = vmatpush.msra.mxu0 0.0
  %1395 = vmatpush.msra.mxu0 0.0
  %1396 = vmatpush.msra.mxu0 0.0
  %1397 = vmatpush.msra.mxu0 0.0
  %1398 = vmatpush.msra.mxu0 0.0
  %1399 = vmatpush.msra.mxu0 %v1365
  %1400 = vmatpush.msra.mxu0 %v1358
  %1401 = vmatpush.msra.mxu0 %v1356
  %1402 = vmatpush.msra.mxu0 %v1354
  %1403 = vmatmul.f32.gmra.mxu0 %v1305
  %v1404 = vpop.f32.mrf.mxu0
  %v1405 = vadd.f32 0.0, %v1404
  %1406 = vdwg.mxu0
  %v1407 = vld [vmem:[%s5] sm:$0xff]
  %v1408 = vld [vmem:[%s5 + $0x8] sm:$0xff]
  %v1409 = vld [vmem:[%s5 + $0x10] sm:$0xff]
  %v1410 = vld [vmem:[%s5 + $0x18] sm:$0xff]
  %v1411 = vld [vmem:[%s5 + $0x20] sm:$0xff]
  %v1412 = vld [vmem:[%s5 + $0x28] sm:$0xff]
  %v1413 = vld [vmem:[%s5 + $0x30] sm:$0xff]
  %v1414 = vld [vmem:[%s5 + $0x38] sm:$0xff]
  %v1415 = vld [vmem:[%s5 + $0x40] sm:$0xff]
  %v1416 = vld [vmem:[%s5 + $0x48] sm:$0xff]
  %v1417 = vld [vmem:[%s5 + $0x50] sm:$0xff]
  %v1418 = vld [vmem:[%s5 + $0x58] sm:$0xff]
  %v1419 = vld [vmem:[%s5 + $0x60] sm:$0xff]
  %v1420 = vld [vmem:[%s5 + $0x68] sm:$0xff]
  %v1421 = vld [vmem:[%s5 + $0x70] sm:$0xff]
  %v1422 = vld [vmem:[%s5 + $0x78] sm:$0xff]
  %v1423 = vld [vmem:[%s5 + $0x80] sm:$0xff]
  %v1424 = vld [vmem:[%s5 + $0x88] sm:$0xff]
  %v1425 = vld [vmem:[%s5 + $0x90] sm:$0xff]
  %v1426 = vld [vmem:[%s5 + $0x98] sm:$0xff]
  %v1427 = vld [vmem:[%s5 + $0xa0] sm:$0xff]
  %v1428 = vld [vmem:[%s5 + $0xa8] sm:$0xff]
  %v1429 = vld [vmem:[%s5 + $0xb0] sm:$0xff]
  %v1430 = vld [vmem:[%s5 + $0xb8] sm:$0xff]
  %v1431 = vld [vmem:[%s5 + $0xc0] sm:$0xff]
  %v1432 = vld [vmem:[%s5 + $0xc8] sm:$0xff]
  %v1433 = vld [vmem:[%s5 + $0xd0] sm:$0xff]
  %v1434 = vld [vmem:[%s5 + $0xd8] sm:$0xff]
  %v1435 = vld [vmem:[%s5 + $0xe0] sm:$0xff]
  %v1436 = vld [vmem:[%s5 + $0xe8] sm:$0xff]
  %v1437 = vld [vmem:[%s5 + $0xf0] sm:$0xff]
  %v1438 = vld [vmem:[%s5 + $0xf8] sm:$0xff]
  %v1439 = vld [vmem:[%s5 + $0x100] sm:$0xff]
  %v1440 = vld [vmem:[%s5 + $0x108] sm:$0xff]
  %v1441 = vld [vmem:[%s5 + $0x110] sm:$0xff]
  %v1442 = vld [vmem:[%s5 + $0x118] sm:$0xff]
  %v1443 = vld [vmem:[%s5 + $0x120] sm:$0x3f]
  %v1444 = vld [vmem:[%s5 + $0x128] sm:$0x3f]
  %vm1445 = vcmask 179200
  %v1447 = vsel %vm1445, %v1351, 0
  %v1450 = vsel %vm673, %v1443, 0
  %v1453 = vsel %vm673, %v1444, 0
  %1455 = vmatpush.msra.mxu0 %v1437
  %1456 = vmatpush.msra.mxu0 %v1435
  %1457 = vmatpush.msra.mxu0 %v1433
  %1458 = vmatpush.msra.mxu0 %v1431
  %1459 = vmatpush.msra.mxu0 %v1429
  %1460 = vmatpush.msra.mxu0 %v1427
  %1461 = vmatpush.msra.mxu0 %v1425
  %1462 = vmatpush.msra.mxu0 %v1423
  %1463 = vmatpush.msra.mxu0 %v1421
  %1464 = vmatpush.msra.mxu0 %v1419
  %1465 = vmatpush.msra.mxu0 %v1417
  %1466 = vmatpush.msra.mxu0 %v1415
  %1467 = vmatpush.msra.mxu0 %v1413
  %1468 = vmatpush.msra.mxu0 %v1411
  %1469 = vmatpush.msra.mxu0 %v1409
  %1470 = vmatpush.msra.mxu0 %v1407
  %1471 = vmatmul.f32.gmra.mxu0 %v1331
  %v1472 = vpop.f32.mrf.mxu0
  %v1473 = vadd.f32 0.0, %v1472
  %1474 = vdwg.mxu0
  %1475 = vmatpush.msra.mxu0 0.0
  %1476 = vmatpush.msra.mxu0 0.0
  %1477 = vmatpush.msra.mxu0 0.0
  %1478 = vmatpush.msra.mxu0 0.0
  %1479 = vmatpush.msra.mxu0 0.0
  %1480 = vmatpush.msra.mxu0 0.0
  %1481 = vmatpush.msra.mxu0 0.0
  %1482 = vmatpush.msra.mxu0 0.0
  %1483 = vmatpush.msra.mxu0 0.0
  %1484 = vmatpush.msra.mxu0 0.0
  %1485 = vmatpush.msra.mxu0 0.0
  %1486 = vmatpush.msra.mxu0 0.0
  %1487 = vmatpush.msra.mxu0 0.0
  %1488 = vmatpush.msra.mxu0 %v1450
  %1489 = vmatpush.msra.mxu0 %v1441
  %1490 = vmatpush.msra.mxu0 %v1439
  %1491 = vmatmul.f32.gmra.mxu0 %v1447
  %v1492 = vpop.f32.mrf.mxu0
  %v1493 = vadd.f32 %v1473, %v1492
  %1494 = vdwg.mxu0
  %1495 = vmatpush.msra.mxu0 %v1438
  %1496 = vmatpush.msra.mxu0 %v1436
  %1497 = vmatpush.msra.mxu0 %v1434
  %1498 = vmatpush.msra.mxu0 %v1432
  %1499 = vmatpush.msra.mxu0 %v1430
  %1500 = vmatpush.msra.mxu0 %v1428
  %1501 = vmatpush.msra.mxu0 %v1426
  %1502 = vmatpush.msra.mxu0 %v1424
  %1503 = vmatpush.msra.mxu0 %v1422
  %1504 = vmatpush.msra.mxu0 %v1420
  %1505 = vmatpush.msra.mxu0 %v1418
  %1506 = vmatpush.msra.mxu0 %v1416
  %1507 = vmatpush.msra.mxu0 %v1414
  %1508 = vmatpush.msra.mxu0 %v1412
  %1509 = vmatpush.msra.mxu0 %v1410
  %1510 = vmatpush.msra.mxu0 %v1408
  %1511 = vmatmul.f32.gmra.mxu0 %v1331
  %v1512 = vpop.f32.mrf.mxu0
  %v1513 = vadd.f32 0.0, %v1512
  %1514 = vdwg.mxu0
  %1515 = vmatpush.msra.mxu0 0.0
  %1516 = vmatpush.msra.mxu0 0.0
  %1517 = vmatpush.msra.mxu0 0.0
  %1518 = vmatpush.msra.mxu0 0.0
  %1519 = vmatpush.msra.mxu0 0.0
  %1520 = vmatpush.msra.mxu0 0.0
  %1521 = vmatpush.msra.mxu0 0.0
  %1522 = vmatpush.msra.mxu0 0.0
  %1523 = vmatpush.msra.mxu0 0.0
  %1524 = vmatpush.msra.mxu0 0.0
  %1525 = vmatpush.msra.mxu0 0.0
  %1526 = vmatpush.msra.mxu0 0.0
  %1527 = vmatpush.msra.mxu0 0.0
  %1528 = vmatpush.msra.mxu0 %v1453
  %1529 = vmatpush.msra.mxu0 %v1442
  %1530 = vmatpush.msra.mxu0 %v1440
  %1531 = vmatmul.f32.gmra.mxu0 %v1447
  %v1532 = vpop.f32.mrf.mxu0
  %v1533 = vadd.f32 %v1513, %v1532
  %1534 = vdwg.mxu0
  %v1536 = vsel %vm1445, %v1405, 0
  %1538 = vmatpush.msra.mxu0 %v1437
  %1539 = vmatpush.msra.mxu0 %v1435
  %1540 = vmatpush.msra.mxu0 %v1433
  %1541 = vmatpush.msra.mxu0 %v1431
  %1542 = vmatpush.msra.mxu0 %v1429
  %1543 = vmatpush.msra.mxu0 %v1427
  %1544 = vmatpush.msra.mxu0 %v1425
  %1545 = vmatpush.msra.mxu0 %v1423
  %1546 = vmatpush.msra.mxu0 %v1421
  %1547 = vmatpush.msra.mxu0 %v1419
  %1548 = vmatpush.msra.mxu0 %v1417
  %1549 = vmatpush.msra.mxu0 %v1415
  %1550 = vmatpush.msra.mxu0 %v1413
  %1551 = vmatpush.msra.mxu0 %v1411
  %1552 = vmatpush.msra.mxu0 %v1409
  %1553 = vmatpush.msra.mxu0 %v1407
  %1554 = vmatmul.f32.gmra.mxu0 %v1385
  %v1555 = vpop.f32.mrf.mxu0
  %v1556 = vadd.f32 0.0, %v1555
  %1557 = vdwg.mxu0
  %1558 = vmatpush.msra.mxu0 0.0
  %1559 = vmatpush.msra.mxu0 0.0
  %1560 = vmatpush.msra.mxu0 0.0
  %1561 = vmatpush.msra.mxu0 0.0
  %1562 = vmatpush.msra.mxu0 0.0
  %1563 = vmatpush.msra.mxu0 0.0
  %1564 = vmatpush.msra.mxu0 0.0
  %1565 = vmatpush.msra.mxu0 0.0
  %1566 = vmatpush.msra.mxu0 0.0
  %1567 = vmatpush.msra.mxu0 0.0
  %1568 = vmatpush.msra.mxu0 0.0
  %1569 = vmatpush.msra.mxu0 0.0
  %1570 = vmatpush.msra.mxu0 0.0
  %1571 = vmatpush.msra.mxu0 %v1450
  %1572 = vmatpush.msra.mxu0 %v1441
  %1573 = vmatpush.msra.mxu0 %v1439
  %1574 = vmatmul.f32.gmra.mxu0 %v1536
  %v1575 = vpop.f32.mrf.mxu0
  %v1576 = vadd.f32 %v1556, %v1575
  %1577 = vdwg.mxu0
  %1578 = vmatpush.msra.mxu0 %v1438
  %1579 = vmatpush.msra.mxu0 %v1436
  %1580 = vmatpush.msra.mxu0 %v1434
  %1581 = vmatpush.msra.mxu0 %v1432
  %1582 = vmatpush.msra.mxu0 %v1430
  %1583 = vmatpush.msra.mxu0 %v1428
  %1584 = vmatpush.msra.mxu0 %v1426
  %1585 = vmatpush.msra.mxu0 %v1424
  %1586 = vmatpush.msra.mxu0 %v1422
  %1587 = vmatpush.msra.mxu0 %v1420
  %1588 = vmatpush.msra.mxu0 %v1418
  %1589 = vmatpush.msra.mxu0 %v1416
  %1590 = vmatpush.msra.mxu0 %v1414
  %1591 = vmatpush.msra.mxu0 %v1412
  %1592 = vmatpush.msra.mxu0 %v1410
  %1593 = vmatpush.msra.mxu0 %v1408
  %1594 = vmatmul.f32.gmra.mxu0 %v1385
  %v1595 = vpop.f32.mrf.mxu0
  %v1596 = vadd.f32 0.0, %v1595
  %1597 = vdwg.mxu0
  %1598 = vmatpush.msra.mxu0 0.0
  %1599 = vmatpush.msra.mxu0 0.0
  %1600 = vmatpush.msra.mxu0 0.0
  %1601 = vmatpush.msra.mxu0 0.0
  %1602 = vmatpush.msra.mxu0 0.0
  %1603 = vmatpush.msra.mxu0 0.0
  %1604 = vmatpush.msra.mxu0 0.0
  %1605 = vmatpush.msra.mxu0 0.0
  %1606 = vmatpush.msra.mxu0 0.0
  %1607 = vmatpush.msra.mxu0 0.0
  %1608 = vmatpush.msra.mxu0 0.0
  %1609 = vmatpush.msra.mxu0 0.0
  %1610 = vmatpush.msra.mxu0 0.0
  %1611 = vmatpush.msra.mxu0 %v1453
  %1612 = vmatpush.msra.mxu0 %v1442
  %1613 = vmatpush.msra.mxu0 %v1440
  %1614 = vmatmul.f32.gmra.mxu0 %v1536
  %v1615 = vpop.f32.mrf.mxu0
  %v1616 = vadd.f32 %v1596, %v1615
  %1617 = vdwg.mxu0
  %v1618 = vmul.f32 %v1493, %v1493
  %v1619 = vmul.f32 %v1533, %v1533
  %v1620 = vsub.f32 %v1576, %v1618
  %v1621 = vsub.f32 %v1616, %v1619
  %v1622 = vld [vmem:[%s6] sm:$0x3]
  %v1623 = vadd.f32 %v1620, 1e-05
  %v1624 = vadd.f32 %v1621, 1e-05
  %v1625 = vrsqrt.pop %v1623
  %v1626 = vmul.f32 %v1625, %v1623
  %v1627 = vmul.f32 %v1626, %v1625
  %v1628 = vmul.f32 0.5, %v1627
  %v1629 = vsub.f32 1.5, %v1628
  %v1630 = vmul.f32 %v1625, %v1629
  %vm1631 = vweird.f32 %v1623
  %vm1632 = vweird.f32 %v1625
  %vm1633 = vmor %vm1631, %vm1632
  %v1634 = vsel %vm1633, %v1625, %v1630
  %v1635 = vrsqrt.pop %v1624
  %v1636 = vmul.f32 %v1635, %v1624
  %v1637 = vmul.f32 %v1636, %v1635
  %v1638 = vmul.f32 0.5, %v1637
  %v1639 = vsub.f32 1.5, %v1638
  %v1640 = vmul.f32 %v1635, %v1639
  %vm1641 = vweird.f32 %v1624
  %vm1642 = vweird.f32 %v1635
  %vm1643 = vmor %vm1641, %vm1642
  %v1644 = vsel %vm1643, %v1635, %v1640
  %v1647 = vrot.slane %v1644, 7
  %vm1648 = vcmask 1040384
  %v1649 = vsel %vm1648, %v1634, %v1647
  %v1651 = vmul.f32 %v1622, %v1649
  %v1652 = vld [vmem:[%s7] sm:$0x3]
  %v1654 = vperm.slane %v1651, 0
  %v1655 = vperm.slane %v1651, 1
  %v1658 = vmul.f32 %v1493, %v1654
  %v1659 = vmul.f32 %v1533, %v1655
  %v1662 = vrot.slane %v1659, 7
  %v1663 = vsel %vm1648, %v1658, %v1662
  %v1665 = vsub.f32 %v1652, %v1663
  %v1666 = vmul.f32 %v1263, %v1654
  %v1667 = vmul.f32 %v1292, %v1655
  %v1668 = vmul.f32 %v1266, %v1654
  %v1669 = vmul.f32 %v1295, %v1655
  %v1670 = vmul.f32 %v1269, %v1654
  %v1671 = vmul.f32 %v1298, %v1655
  %v1672 = vmul.f32 %v1272, %v1654
  %v1673 = vmul.f32 %v1301, %v1655
  %v1675 = vperm.slane %v1665, 0
  %v1676 = vperm.slane %v1665, 1
  %v1679 = vadd.f32 %v1666, %v1675
  %v1680 = vadd.f32 %v1667, %v1676
  %v1681 = vadd.f32 %v1668, %v1675
  %v1682 = vadd.f32 %v1669, %v1676
  %v1683 = vadd.f32 %v1670, %v1675
  %v1684 = vadd.f32 %v1671, %v1676
  %v1685 = vadd.f32 %v1672, %v1675
  %v1686 = vadd.f32 %v1673, %v1676
  %v1687 = vmax.f32 %v1679, 0.0
  %v1688 = vmax.f32 %v1680, 0.0
  %v1689 = vmax.f32 %v1681, 0.0
  %v1690 = vmax.f32 %v1682, 0.0
  %v1691 = vmax.f32 %v1683, 0.0
  %v1692 = vmax.f32 %v1684, 0.0
  %v1693 = vmax.f32 %v1685, 0.0
  %v1694 = vmax.f32 %v1686, 0.0
  %v1695 = vld [vmem:[%s8] sm:$0xff]
  %v1696 = vld [vmem:[%s8 + $0x8] sm:$0xff]
  %v1697 = vld [vmem:[%s8 + $0x10] sm:$0xff]
  %v1698 = vld [vmem:[%s8 + $0x18] sm:$0xff]
  %v1699 = vld [vmem:[%s8 + $0x20] sm:$0xff]
  %v1700 = vld [vmem:[%s8 + $0x28] sm:$0xff]
  %v1701 = vld [vmem:[%s8 + $0x30] sm:$0xff]
  %v1702 = vld [vmem:[%s8 + $0x38] sm:$0xff]
  %v1703 = vld [vmem:[%s8 + $0x40] sm:$0xff]
  %v1704 = vld [vmem:[%s8 + $0x48] sm:$0xff]
  %v1705 = vld [vmem:[%s8 + $0x50] sm:$0xff]
  %v1706 = vld [vmem:[%s8 + $0x58] sm:$0xff]
  %v1707 = vld [vmem:[%s8 + $0x60] sm:$0xff]
  %v1708 = vld [vmem:[%s8 + $0x68] sm:$0xff]
  %v1709 = vld [vmem:[%s8 + $0x70] sm:$0xff]
  %v1710 = vld [vmem:[%s8 + $0x78] sm:$0xff]
  %v1711 = vld [vmem:[%s8 + $0x80] sm:$0xff]
  %v1712 = vld [vmem:[%s8 + $0x88] sm:$0xff]
  %v1713 = vld [vmem:[%s8 + $0x90] sm:$0x3f]
  %v1715 = vsel %vm1445, %v1688, 0
  %v1718 = vsel %vm1445, %v1690, 0
  %v1721 = vsel %vm1445, %v1692, 0
  %v1724 = vsel %vm1445, %v1694, 0
  %v1727 = vsel %vm673, %v1713, 0
  %1729 = vmatpush.msra.mxu0 %v1710
  %1730 = vmatpush.msra.mxu0 %v1709
  %1731 = vmatpush.msra.mxu0 %v1708
  %1732 = vmatpush.msra.mxu0 %v1707
  %1733 = vmatpush.msra.mxu0 %v1706
  %1734 = vmatpush.msra.mxu0 %v1705
  %1735 = vmatpush.msra.mxu0 %v1704
  %1736 = vmatpush.msra.mxu0 %v1703
  %1737 = vmatpush.msra.mxu0 %v1702
  %1738 = vmatpush.msra.mxu0 %v1701
  %1739 = vmatpush.msra.mxu0 %v1700
  %1740 = vmatpush.msra.mxu0 %v1699
  %1741 = vmatpush.msra.mxu0 %v1698
  %1742 = vmatpush.msra.mxu0 %v1697
  %1743 = vmatpush.msra.mxu0 %v1696
  %1744 = vmatpush.msra.mxu0 %v1695
  %1745 = vmatmul.f32.gmra.mxu0 %v1687
  %v1746 = vpop.f32.mrf.mxu0
  %v1747 = vadd.f32 0.0, %v1746
  %1748 = vmatmul.f32.gmra.mxu0 %v1689
  %v1749 = vpop.f32.mrf.mxu0
  %v1750 = vadd.f32 0.0, %v1749
  %1751 = vmatmul.f32.gmra.mxu0 %v1691
  %v1752 = vpop.f32.mrf.mxu0
  %v1753 = vadd.f32 0.0, %v1752
  %1754 = vmatmul.f32.gmra.mxu0 %v1693
  %v1755 = vpop.f32.mrf.mxu0
  %v1756 = vadd.f32 0.0, %v1755
  %1757 = vdwg.mxu0
  %1758 = vmatpush.msra.mxu0 0.0
  %1759 = vmatpush.msra.mxu0 0.0
  %1760 = vmatpush.msra.mxu0 0.0
  %1761 = vmatpush.msra.mxu0 0.0
  %1762 = vmatpush.msra.mxu0 0.0
  %1763 = vmatpush.msra.mxu0 0.0
  %1764 = vmatpush.msra.mxu0 0.0
  %1765 = vmatpush.msra.mxu0 0.0
  %1766 = vmatpush.msra.mxu0 0.0
  %1767 = vmatpush.msra.mxu0 0.0
  %1768 = vmatpush.msra.mxu0 0.0
  %1769 = vmatpush.msra.mxu0 0.0
  %1770 = vmatpush.msra.mxu0 0.0
  %1771 = vmatpush.msra.mxu0 %v1727
  %1772 = vmatpush.msra.mxu0 %v1712
  %1773 = vmatpush.msra.mxu0 %v1711
  %1774 = vmatmul.f32.gmra.mxu0 %v1715
  %v1775 = vpop.f32.mrf.mxu0
  %v1776 = vadd.f32 %v1747, %v1775
  %1777 = vmatmul.f32.gmra.mxu0 %v1718
  %v1778 = vpop.f32.mrf.mxu0
  %v1779 = vadd.f32 %v1750, %v1778
  %1780 = vmatmul.f32.gmra.mxu0 %v1721
  %v1781 = vpop.f32.mrf.mxu0
  %v1782 = vadd.f32 %v1753, %v1781
  %1783 = vmatmul.f32.gmra.mxu0 %v1724
  %v1784 = vpop.f32.mrf.mxu0
  %v1785 = vadd.f32 %v1756, %v1784
  %1786 = vdwg.mxu0
  %s1787 = scalar_lea.vmem %s8, 152
  %v1788 = vld [vmem:[%s1787] sm:$0xff]
  %v1789 = vld [vmem:[%s1787 + $0x8] sm:$0xff]
  %v1790 = vld [vmem:[%s1787 + $0x10] sm:$0xff]
  %v1791 = vld [vmem:[%s1787 + $0x18] sm:$0xff]
  %v1792 = vld [vmem:[%s1787 + $0x20] sm:$0xff]
  %v1793 = vld [vmem:[%s1787 + $0x28] sm:$0xff]
  %v1794 = vld [vmem:[%s1787 + $0x30] sm:$0xff]
  %v1795 = vld [vmem:[%s1787 + $0x38] sm:$0xff]
  %v1796 = vld [vmem:[%s1787 + $0x40] sm:$0xff]
  %v1797 = vld [vmem:[%s1787 + $0x48] sm:$0xff]
  %v1798 = vld [vmem:[%s1787 + $0x50] sm:$0xff]
  %v1799 = vld [vmem:[%s1787 + $0x58] sm:$0xff]
  %v1800 = vld [vmem:[%s1787 + $0x60] sm:$0xff]
  %v1801 = vld [vmem:[%s1787 + $0x68] sm:$0xff]
  %v1802 = vld [vmem:[%s1787 + $0x70] sm:$0xff]
  %v1803 = vld [vmem:[%s1787 + $0x78] sm:$0xff]
  %v1804 = vld [vmem:[%s1787 + $0x80] sm:$0xff]
  %v1805 = vld [vmem:[%s1787 + $0x88] sm:$0xff]
  %v1806 = vld [vmem:[%s1787 + $0x90] sm:$0x3f]
  %v1808 = vsel %vm673, %v1806, 0
  %1810 = vmatpush.msra.mxu0 %v1803
  %1811 = vmatpush.msra.mxu0 %v1802
  %1812 = vmatpush.msra.mxu0 %v1801
  %1813 = vmatpush.msra.mxu0 %v1800
  %1814 = vmatpush.msra.mxu0 %v1799
  %1815 = vmatpush.msra.mxu0 %v1798
  %1816 = vmatpush.msra.mxu0 %v1797
  %1817 = vmatpush.msra.mxu0 %v1796
  %1818 = vmatpush.msra.mxu0 %v1795
  %1819 = vmatpush.msra.mxu0 %v1794
  %1820 = vmatpush.msra.mxu0 %v1793
  %1821 = vmatpush.msra.mxu0 %v1792
  %1822 = vmatpush.msra.mxu0 %v1791
  %1823 = vmatpush.msra.mxu0 %v1790
  %1824 = vmatpush.msra.mxu0 %v1789
  %1825 = vmatpush.msra.mxu0 %v1788
  %1826 = vmatmul.f32.gmra.mxu0 %v1687
  %v1827 = vpop.f32.mrf.mxu0
  %v1828 = vadd.f32 0.0, %v1827
  %1829 = vmatmul.f32.gmra.mxu0 %v1689
  %v1830 = vpop.f32.mrf.mxu0
  %v1831 = vadd.f32 0.0, %v1830
  %1832 = vmatmul.f32.gmra.mxu0 %v1691
  %v1833 = vpop.f32.mrf.mxu0
  %v1834 = vadd.f32 0.0, %v1833
  %1835 = vmatmul.f32.gmra.mxu0 %v1693
  %v1836 = vpop.f32.mrf.mxu0
  %v1837 = vadd.f32 0.0, %v1836
  %1838 = vdwg.mxu0
  %1839 = vmatpush.msra.mxu0 0.0
  %1840 = vmatpush.msra.mxu0 0.0
  %1841 = vmatpush.msra.mxu0 0.0
  %1842 = vmatpush.msra.mxu0 0.0
  %1843 = vmatpush.msra.mxu0 0.0
  %1844 = vmatpush.msra.mxu0 0.0
  %1845 = vmatpush.msra.mxu0 0.0
  %1846 = vmatpush.msra.mxu0 0.0
  %1847 = vmatpush.msra.mxu0 0.0
  %1848 = vmatpush.msra.mxu0 0.0
  %1849 = vmatpush.msra.mxu0 0.0
  %1850 = vmatpush.msra.mxu0 0.0
  %1851 = vmatpush.msra.mxu0 0.0
  %1852 = vmatpush.msra.mxu0 %v1808
  %1853 = vmatpush.msra.mxu0 %v1805
  %1854 = vmatpush.msra.mxu0 %v1804
  %1855 = vmatmul.f32.gmra.mxu0 %v1715
  %v1856 = vpop.f32.mrf.mxu0
  %v1857 = vadd.f32 %v1828, %v1856
  %1858 = vmatmul.f32.gmra.mxu0 %v1718
  %v1859 = vpop.f32.mrf.mxu0
  %v1860 = vadd.f32 %v1831, %v1859
  %1861 = vmatmul.f32.gmra.mxu0 %v1721
  %v1862 = vpop.f32.mrf.mxu0
  %v1863 = vadd.f32 %v1834, %v1862
  %1864 = vmatmul.f32.gmra.mxu0 %v1724
  %v1865 = vpop.f32.mrf.mxu0
  %v1866 = vadd.f32 %v1837, %v1865
  %1867 = vdwg.mxu0
  %s1868 = scalar_lea.vmem %s8, 304
  %v1869 = vld [vmem:[%s1868] sm:$0xff]
  %v1870 = vld [vmem:[%s1868 + $0x8] sm:$0xff]
  %v1871 = vld [vmem:[%s1868 + $0x10] sm:$0xff]
  %v1872 = vld [vmem:[%s1868 + $0x18] sm:$0xff]
  %v1873 = vld [vmem:[%s1868 + $0x20] sm:$0xff]
  %v1874 = vld [vmem:[%s1868 + $0x28] sm:$0xff]
  %v1875 = vld [vmem:[%s1868 + $0x30] sm:$0xff]
  %v1876 = vld [vmem:[%s1868 + $0x38] sm:$0xff]
  %v1877 = vld [vmem:[%s1868 + $0x40] sm:$0xff]
  %v1878 = vld [vmem:[%s1868 + $0x48] sm:$0xff]
  %v1879 = vld [vmem:[%s1868 + $0x50] sm:$0xff]
  %v1880 = vld [vmem:[%s1868 + $0x58] sm:$0xff]
  %v1881 = vld [vmem:[%s1868 + $0x60] sm:$0xff]
  %v1882 = vld [vmem:[%s1868 + $0x68] sm:$0xff]
  %v1883 = vld [vmem:[%s1868 + $0x70] sm:$0xff]
  %v1884 = vld [vmem:[%s1868 + $0x78] sm:$0xff]
  %v1885 = vld [vmem:[%s1868 + $0x80] sm:$0xff]
  %v1886 = vld [vmem:[%s1868 + $0x88] sm:$0xff]
  %v1887 = vld [vmem:[%s1868 + $0x90] sm:$0x3f]
  %v1889 = vsel %vm673, %v1887, 0
  %1891 = vmatpush.msra.mxu0 %v1884
  %1892 = vmatpush.msra.mxu0 %v1883
  %1893 = vmatpush.msra.mxu0 %v1882
  %1894 = vmatpush.msra.mxu0 %v1881
  %1895 = vmatpush.msra.mxu0 %v1880
  %1896 = vmatpush.msra.mxu0 %v1879
  %1897 = vmatpush.msra.mxu0 %v1878
  %1898 = vmatpush.msra.mxu0 %v1877
  %1899 = vmatpush.msra.mxu0 %v1876
  %1900 = vmatpush.msra.mxu0 %v1875
  %1901 = vmatpush.msra.mxu0 %v1874
  %1902 = vmatpush.msra.mxu0 %v1873
  %1903 = vmatpush.msra.mxu0 %v1872
  %1904 = vmatpush.msra.mxu0 %v1871
  %1905 = vmatpush.msra.mxu0 %v1870
  %1906 = vmatpush.msra.mxu0 %v1869
  %1907 = vmatmul.f32.gmra.mxu0 %v1687
  %v1908 = vpop.f32.mrf.mxu0
  %v1909 = vadd.f32 0.0, %v1908
  %1910 = vmatmul.f32.gmra.mxu0 %v1689
  %v1911 = vpop.f32.mrf.mxu0
  %v1912 = vadd.f32 0.0, %v1911
  %1913 = vmatmul.f32.gmra.mxu0 %v1691
  %v1914 = vpop.f32.mrf.mxu0
  %v1915 = vadd.f32 0.0, %v1914
  %1916 = vmatmul.f32.gmra.mxu0 %v1693
  %v1917 = vpop.f32.mrf.mxu0
  %v1918 = vadd.f32 0.0, %v1917
  %1919 = vdwg.mxu0
  %1920 = vmatpush.msra.mxu0 0.0
  %1921 = vmatpush.msra.mxu0 0.0
  %1922 = vmatpush.msra.mxu0 0.0
  %1923 = vmatpush.msra.mxu0 0.0
  %1924 = vmatpush.msra.mxu0 0.0
  %1925 = vmatpush.msra.mxu0 0.0
  %1926 = vmatpush.msra.mxu0 0.0
  %1927 = vmatpush.msra.mxu0 0.0
  %1928 = vmatpush.msra.mxu0 0.0
  %1929 = vmatpush.msra.mxu0 0.0
  %1930 = vmatpush.msra.mxu0 0.0
  %1931 = vmatpush.msra.mxu0 0.0
  %1932 = vmatpush.msra.mxu0 0.0
  %1933 = vmatpush.msra.mxu0 %v1889
  %1934 = vmatpush.msra.mxu0 %v1886
  %1935 = vmatpush.msra.mxu0 %v1885
  %1936 = vmatmul.f32.gmra.mxu0 %v1715
  %v1937 = vpop.f32.mrf.mxu0
  %v1938 = vadd.f32 %v1909, %v1937
  %1939 = vmatmul.f32.gmra.mxu0 %v1718
  %v1940 = vpop.f32.mrf.mxu0
  %v1941 = vadd.f32 %v1912, %v1940
  %1942 = vmatmul.f32.gmra.mxu0 %v1721
  %v1943 = vpop.f32.mrf.mxu0
  %v1944 = vadd.f32 %v1915, %v1943
  %1945 = vmatmul.f32.gmra.mxu0 %v1724
  %v1946 = vpop.f32.mrf.mxu0
  %v1947 = vadd.f32 %v1918, %v1946
  %1948 = vdwg.mxu0
  %v1949 = vld [vmem:[%s9] sm:$0xff]
  %v1950 = vld [vmem:[%s9 + $0x8] sm:$0xff]
  %v1951 = vld [vmem:[%s9 + $0x10] sm:$0xff]
  %v1952 = vld [vmem:[%s9 + $0x18] sm:$0x3f]
  %v1954 = vsel %vm1303, %v1949, 0
  %v1957 = vsel %vm1303, %v1950, 0
  %v1960 = vsel %vm1303, %v1951, 0
  %v1963 = vsel %vm1303, %v1952, 0
  %v1966 = vsel %vm673, %v1785, 0
  %1968 = vmatpush.msra.mxu0 0.0
  %1969 = vmatpush.msra.mxu0 0.0
  %1970 = vmatpush.msra.mxu0 0.0
  %1971 = vmatpush.msra.mxu0 0.0
  %1972 = vmatpush.msra.mxu0 0.0
  %1973 = vmatpush.msra.mxu0 0.0
  %1974 = vmatpush.msra.mxu0 0.0
  %1975 = vmatpush.msra.mxu0 0.0
  %1976 = vmatpush.msra.mxu0 0.0
  %1977 = vmatpush.msra.mxu0 0.0
  %1978 = vmatpush.msra.mxu0 0.0
  %1979 = vmatpush.msra.mxu0 0.0
  %1980 = vmatpush.msra.mxu0 %v1966
  %1981 = vmatpush.msra.mxu0 %v1782
  %1982 = vmatpush.msra.mxu0 %v1779
  %1983 = vmatpush.msra.mxu0 %v1776
  %1984 = vmatmul.f32.gmra.mxu0 %v1954
  %v1985 = vpop.f32.mrf.mxu0
  %v1986 = vadd.f32 %v1857, %v1985
  %1987 = vmatmul.f32.gmra.mxu0 %v1957
  %v1988 = vpop.f32.mrf.mxu0
  %v1989 = vadd.f32 %v1860, %v1988
  %1990 = vmatmul.f32.gmra.mxu0 %v1960
  %v1991 = vpop.f32.mrf.mxu0
  %v1992 = vadd.f32 %v1863, %v1991
  %1993 = vmatmul.f32.gmra.mxu0 %v1963
  %v1994 = vpop.f32.mrf.mxu0
  %v1995 = vadd.f32 %v1866, %v1994
  %1996 = vdwg.mxu0
  %v1997 = vld [vmem:[%s10] sm:$0xff]
  %v1998 = vld [vmem:[%s10 + $0x8] sm:$0xff]
  %v1999 = vld [vmem:[%s10 + $0x10] sm:$0xff]
  %v2000 = vld [vmem:[%s10 + $0x18] sm:$0x3f]
  %v2002 = vsel %vm1303, %v1997, 0
  %v2005 = vsel %vm1303, %v1998, 0
  %v2008 = vsel %vm1303, %v1999, 0
  %v2011 = vsel %vm1303, %v2000, 0
  %v2014 = vsel %vm673, %v1947, 0
  %2016 = vmatpush.msra.mxu0 0.0
  %2017 = vmatpush.msra.mxu0 0.0
  %2018 = vmatpush.msra.mxu0 0.0
  %2019 = vmatpush.msra.mxu0 0.0
  %2020 = vmatpush.msra.mxu0 0.0
  %2021 = vmatpush.msra.mxu0 0.0
  %2022 = vmatpush.msra.mxu0 0.0
  %2023 = vmatpush.msra.mxu0 0.0
  %2024 = vmatpush.msra.mxu0 0.0
  %2025 = vmatpush.msra.mxu0 0.0
  %2026 = vmatpush.msra.mxu0 0.0
  %2027 = vmatpush.msra.mxu0 0.0
  %2028 = vmatpush.msra.mxu0 %v2014
  %2029 = vmatpush.msra.mxu0 %v1944
  %2030 = vmatpush.msra.mxu0 %v1941
  %2031 = vmatpush.msra.mxu0 %v1938
  %2032 = vmatmul.f32.gmra.mxu0 %v2002
  %v2033 = vpop.f32.mrf.mxu0
  %v2034 = vadd.f32 0.0, %v2033
  %2035 = vmatmul.f32.gmra.mxu0 %v2005
  %v2036 = vpop.f32.mrf.mxu0
  %v2037 = vadd.f32 0.0, %v2036
  %2038 = vmatmul.f32.gmra.mxu0 %v2008
  %v2039 = vpop.f32.mrf.mxu0
  %v2040 = vadd.f32 0.0, %v2039
  %2041 = vmatmul.f32.gmra.mxu0 %v2011
  %v2042 = vpop.f32.mrf.mxu0
  %v2043 = vadd.f32 0.0, %v2042
  %2044 = vdwg.mxu0
  %v2045 = vadd.f32 %v1986, %v2034
  %v2046 = vadd.f32 %v1989, %v2037
  %v2047 = vadd.f32 %v1992, %v2040
  %v2048 = vadd.f32 %v1995, %v2043
  %v2049 = vld [vmem:[#allocation2] sm:$0x1]
  %v2051 = vperm.slane %v2049, 0
  %2052 = vset.pattern.permute.xlu0 0
  %2053 = vperm.xlu0 %2052, %v2051
  %v2054 = vpop.permute.xlu0 %2053
  %v2056 = vadd.f32 %v2045, %v2054
  %v2057 = vadd.f32 %v2046, %v2054
  %v2058 = vadd.f32 %v2047, %v2054
  %v2059 = vadd.f32 %v2048, %v2054
  %v2064 = vrot.slane %v2056, 1
  %v2065 = vrot.slane %v2057, 1
  %v2066 = vsel %vm178, %v2064, %v2065
  %v2067 = vrot.slane %v2058, 1
  %v2068 = vsel %vm178, %v2065, %v2067
  %v2069 = vrot.slane %v2059, 1
  %v2070 = vsel %vm178, %v2067, %v2069
  %v2075 = vmax.f32 %v2056, %v2066
  %v2076 = vmax.f32 %v2057, %v2068
  %v2077 = vmax.f32 %v2058, %v2070
  %v2078 = vmax.f32 %v2059, %v2069
  %v2079 = vld [vmem:[%s12] sm:$0xff]
  %v2080 = vld [vmem:[%s12 + $0x8] sm:$0x7f]
  %vm2081 = vcmask 121856
  %v2083 = vsel %vm2081, %v2075, 0
  %v2086 = vsel %vm2081, %v2076, 0
  %v2089 = vsel %vm2081, %v2077, 0
  %v2092 = vsel %vm2081, %v2078, 0
  %v2095 = vsel %vm178, %v2080, 0
  %2097 = vmatpush.msra.mxu0 0.0
  %2098 = vmatpush.msra.mxu0 0.0
  %2099 = vmatpush.msra.mxu0 0.0
  %2100 = vmatpush.msra.mxu0 0.0
  %2101 = vmatpush.msra.mxu0 0.0
  %2102 = vmatpush.msra.mxu0 0.0
  %2103 = vmatpush.msra.mxu0 0.0
  %2104 = vmatpush.msra.mxu0 0.0
  %2105 = vmatpush.msra.mxu0 0.0
  %2106 = vmatpush.msra.mxu0 0.0
  %2107 = vmatpush.msra.mxu0 0.0
  %2108 = vmatpush.msra.mxu0 0.0
  %2109 = vmatpush.msra.mxu0 0.0
  %2110 = vmatpush.msra.mxu0 0.0
  %2111 = vmatpush.msra.mxu0 %v2095
  %2112 = vmatpush.msra.mxu0 %v2079
  %2113 = vmatmul.f32.gmra.mxu0 %v2083
  %v2114 = vpop.f32.mrf.mxu0
  %v2115 = vadd.f32 0.0, %v2114
  %2116 = vmatmul.f32.gmra.mxu0 %v2086
  %v2117 = vpop.f32.mrf.mxu0
  %v2118 = vadd.f32 0.0, %v2117
  %2119 = vmatmul.f32.gmra.mxu0 %v2089
  %v2120 = vpop.f32.mrf.mxu0
  %v2121 = vadd.f32 0.0, %v2120
  %2122 = vmatmul.f32.gmra.mxu0 %v2092
  %v2123 = vpop.f32.mrf.mxu0
  %v2124 = vadd.f32 0.0, %v2123
  %2125 = vdwg.mxu0
  %v2126 = vmax.f32 %v2075, %v2115
  %v2127 = vmax.f32 %v2076, %v2118
  %v2128 = vmax.f32 %v2077, %v2121
  %v2129 = vmax.f32 %v2078, %v2124
  %v2130 = vmax.f32 %v2126, 0.0
  %v2131 = vmax.f32 %v2127, 0.0
  %v2132 = vmax.f32 %v2128, 0.0
  %v2133 = vmax.f32 %v2129, 0.0
  %v2134 = vld [vmem:[%s13] sm:$0xff]
  %v2135 = vld [vmem:[%s13 + $0x8] sm:$0xff]
  %v2136 = vld [vmem:[%s13 + $0x10] sm:$0xff]
  %v2137 = vld [vmem:[%s13 + $0x18] sm:$0xff]
  %v2138 = vld [vmem:[%s13 + $0x20] sm:$0xff]
  %v2139 = vld [vmem:[%s13 + $0x28] sm:$0xff]
  %v2140 = vld [vmem:[%s13 + $0x30] sm:$0xff]
  %v2141 = vld [vmem:[%s13 + $0x38] sm:$0xff]
  %v2142 = vld [vmem:[%s13 + $0x40] sm:$0xff]
  %v2143 = vld [vmem:[%s13 + $0x48] sm:$0xff]
  %v2144 = vld [vmem:[%s13 + $0x50] sm:$0xff]
  %v2145 = vld [vmem:[%s13 + $0x58] sm:$0xff]
  %v2146 = vld [vmem:[%s13 + $0x60] sm:$0xff]
  %v2147 = vld [vmem:[%s13 + $0x68] sm:$0xff]
  %v2148 = vld [vmem:[%s13 + $0x70] sm:$0xff]
  %v2149 = vld [vmem:[%s13 + $0x78] sm:$0xff]
  %v2150 = vld [vmem:[%s13 + $0x80] sm:$0xff]
  %v2151 = vld [vmem:[%s13 + $0x88] sm:$0xff]
  %v2152 = vld [vmem:[%s13 + $0x90] sm:$0xff]
  %v2153 = vld [vmem:[%s13 + $0x98] sm:$0xff]
  %v2154 = vld [vmem:[%s13 + $0xa0] sm:$0xff]
  %v2155 = vld [vmem:[%s13 + $0xa8] sm:$0xff]
  %v2156 = vld [vmem:[%s13 + $0xb0] sm:$0xff]
  %v2157 = vld [vmem:[%s13 + $0xb8] sm:$0xff]
  %v2158 = vld [vmem:[%s13 + $0xc0] sm:$0xff]
  %v2159 = vld [vmem:[%s14] sm:$0xff]
  %v2160 = vld [vmem:[%s14 + $0x8] sm:$0xff]
  %v2161 = vld [vmem:[%s14 + $0x10] sm:$0x3f]
  %v2162 = vld [vmem:[%s14 + $0x18] sm:$0x3f]
  %vm2163 = vcmask 113664
  %v2165 = vsel %vm2163, %v2130, 0
  %v2168 = vsel %vm2163, %v2131, 0
  %v2171 = vsel %vm673, %v2161, 0
  %v2174 = vsel %vm673, %v2162, 0
  %2176 = vmatpush.msra.mxu0 0.0
  %2177 = vmatpush.msra.mxu0 0.0
  %2178 = vmatpush.msra.mxu0 0.0
  %2179 = vmatpush.msra.mxu0 0.0
  %2180 = vmatpush.msra.mxu0 0.0
  %2181 = vmatpush.msra.mxu0 0.0
  %2182 = vmatpush.msra.mxu0 0.0
  %2183 = vmatpush.msra.mxu0 0.0
  %2184 = vmatpush.msra.mxu0 0.0
  %2185 = vmatpush.msra.mxu0 0.0
  %2186 = vmatpush.msra.mxu0 0.0
  %2187 = vmatpush.msra.mxu0 0.0
  %2188 = vmatpush.msra.mxu0 0.0
  %2189 = vmatpush.msra.mxu0 0.0
  %2190 = vmatpush.msra.mxu0 %v2171
  %2191 = vmatpush.msra.mxu0 %v2159
  %2192 = vmatmul.f32.gmra.mxu0 %v2165
  %v2193 = vpop.f32.mrf.mxu0
  %v2194 = vadd.f32 0.0, %v2193
  %2195 = vmatmul.f32.gmra.mxu0 %v2168
  %v2196 = vpop.f32.mrf.mxu0
  %v2197 = vadd.f32 0.0, %v2196
  %2198 = vdwg.mxu0
  %2199 = vmatpush.msra.mxu0 0.0
  %2200 = vmatpush.msra.mxu0 0.0
  %2201 = vmatpush.msra.mxu0 0.0
  %2202 = vmatpush.msra.mxu0 0.0
  %2203 = vmatpush.msra.mxu0 0.0
  %2204 = vmatpush.msra.mxu0 0.0
  %2205 = vmatpush.msra.mxu0 0.0
  %2206 = vmatpush.msra.mxu0 0.0
  %2207 = vmatpush.msra.mxu0 0.0
  %2208 = vmatpush.msra.mxu0 0.0
  %2209 = vmatpush.msra.mxu0 0.0
  %2210 = vmatpush.msra.mxu0 0.0
  %2211 = vmatpush.msra.mxu0 0.0
  %2212 = vmatpush.msra.mxu0 0.0
  %2213 = vmatpush.msra.mxu0 %v2174
  %2214 = vmatpush.msra.mxu0 %v2160
  %2215 = vmatmul.f32.gmra.mxu0 %v2165
  %v2216 = vpop.f32.mrf.mxu0
  %v2217 = vadd.f32 0.0, %v2216
  %2218 = vmatmul.f32.gmra.mxu0 %v2168
  %v2219 = vpop.f32.mrf.mxu0
  %v2220 = vadd.f32 0.0, %v2219
  %2221 = vdwg.mxu0
  %v2223 = vsel %vm2163, %v2134, 0
  %v2226 = vsel %vm2163, %v2135, 0
  %v2229 = vsel %vm2163, %v2136, 0
  %v2232 = vsel %vm2163, %v2137, 0
  %v2235 = vsel %vm2163, %v2138, 0
  %v2238 = vsel %vm2163, %v2139, 0
  %v2241 = vsel %vm2163, %v2140, 0
  %v2244 = vsel %vm2163, %v2141, 0
  %v2247 = vsel %vm2163, %v2142, 0
  %v2250 = vsel %vm2163, %v2143, 0
  %v2253 = vsel %vm2163, %v2144, 0
  %v2256 = vsel %vm2163, %v2145, 0
  %v2259 = vsel %vm2163, %v2146, 0
  %v2262 = vsel %vm2163, %v2147, 0
  %v2265 = vsel %vm2163, %v2148, 0
  %v2268 = vsel %vm2163, %v2149, 0
  %v2271 = vsel %vm2163, %v2150, 0
  %v2274 = vsel %vm2163, %v2151, 0
  %v2277 = vsel %vm2163, %v2152, 0
  %v2280 = vsel %vm2163, %v2153, 0
  %v2283 = vsel %vm2163, %v2154, 0
  %v2286 = vsel %vm2163, %v2155, 0
  %v2289 = vsel %vm2163, %v2156, 0
  %v2292 = vsel %vm2163, %v2157, 0
  %v2295 = vsel %vm2163, %v2158, 0
  %v2298 = vsel %vm673, %v2197, 0
  %v2301 = vsel %vm673, %v2220, 0
  %2303 = vmatpush.msra.mxu0 0.0
  %2304 = vmatpush.msra.mxu0 0.0
  %2305 = vmatpush.msra.mxu0 0.0
  %2306 = vmatpush.msra.mxu0 0.0
  %2307 = vmatpush.msra.mxu0 0.0
  %2308 = vmatpush.msra.mxu0 0.0
  %2309 = vmatpush.msra.mxu0 0.0
  %2310 = vmatpush.msra.mxu0 0.0
  %2311 = vmatpush.msra.mxu0 0.0
  %2312 = vmatpush.msra.mxu0 0.0
  %2313 = vmatpush.msra.mxu0 0.0
  %2314 = vmatpush.msra.mxu0 0.0
  %2315 = vmatpush.msra.mxu0 0.0
  %2316 = vmatpush.msra.mxu0 0.0
  %2317 = vmatpush.msra.mxu0 %v2298
  %2318 = vmatpush.msra.mxu0 %v2194
  %2319 = vmatmul.f32.gmra.mxu0 %v2223
  %v2320 = vpop.f32.mrf.mxu0
  %v2321 = vadd.f32 0.0, %v2320
  %2322 = vmatmul.f32.gmra.mxu0 %v2226
  %v2323 = vpop.f32.mrf.mxu0
  %v2324 = vadd.f32 0.0, %v2323
  %2325 = vmatmul.f32.gmra.mxu0 %v2229
  %v2326 = vpop.f32.mrf.mxu0
  %v2327 = vadd.f32 0.0, %v2326
  %2328 = vmatmul.f32.gmra.mxu0 %v2232
  %v2329 = vpop.f32.mrf.mxu0
  %v2330 = vadd.f32 0.0, %v2329
  %2331 = vmatmul.f32.gmra.mxu0 %v2235
  %v2332 = vpop.f32.mrf.mxu0
  %v2333 = vadd.f32 0.0, %v2332
  %2334 = vmatmul.f32.gmra.mxu0 %v2238
  %v2335 = vpop.f32.mrf.mxu0
  %v2336 = vadd.f32 0.0, %v2335
  %2337 = vmatmul.f32.gmra.mxu0 %v2241
  %v2338 = vpop.f32.mrf.mxu0
  %v2339 = vadd.f32 0.0, %v2338
  %2340 = vmatmul.f32.gmra.mxu0 %v2244
  %v2341 = vpop.f32.mrf.mxu0
  %v2342 = vadd.f32 0.0, %v2341
  %2343 = vmatmul.f32.gmra.mxu0 %v2247
  %v2344 = vpop.f32.mrf.mxu0
  %v2345 = vadd.f32 0.0, %v2344
  %2346 = vmatmul.f32.gmra.mxu0 %v2250
  %v2347 = vpop.f32.mrf.mxu0
  %v2348 = vadd.f32 0.0, %v2347
  %2349 = vmatmul.f32.gmra.mxu0 %v2253
  %v2350 = vpop.f32.mrf.mxu0
  %v2351 = vadd.f32 0.0, %v2350
  %2352 = vmatmul.f32.gmra.mxu0 %v2256
  %v2353 = vpop.f32.mrf.mxu0
  %v2354 = vadd.f32 0.0, %v2353
  %2355 = vmatmul.f32.gmra.mxu0 %v2259
  %v2356 = vpop.f32.mrf.mxu0
  %v2357 = vadd.f32 0.0, %v2356
  %2358 = vmatmul.f32.gmra.mxu0 %v2262
  %v2359 = vpop.f32.mrf.mxu0
  %v2360 = vadd.f32 0.0, %v2359
  %2361 = vmatmul.f32.gmra.mxu0 %v2265
  %v2362 = vpop.f32.mrf.mxu0
  %v2363 = vadd.f32 0.0, %v2362
  %2364 = vmatmul.f32.gmra.mxu0 %v2268
  %v2365 = vpop.f32.mrf.mxu0
  %v2366 = vadd.f32 0.0, %v2365
  %2367 = vmatmul.f32.gmra.mxu0 %v2271
  %v2368 = vpop.f32.mrf.mxu0
  %v2369 = vadd.f32 0.0, %v2368
  %2370 = vmatmul.f32.gmra.mxu0 %v2274
  %v2371 = vpop.f32.mrf.mxu0
  %v2372 = vadd.f32 0.0, %v2371
  %2373 = vmatmul.f32.gmra.mxu0 %v2277
  %v2374 = vpop.f32.mrf.mxu0
  %v2375 = vadd.f32 0.0, %v2374
  %2376 = vmatmul.f32.gmra.mxu0 %v2280
  %v2377 = vpop.f32.mrf.mxu0
  %v2378 = vadd.f32 0.0, %v2377
  %2379 = vmatmul.f32.gmra.mxu0 %v2283
  %v2380 = vpop.f32.mrf.mxu0
  %v2381 = vadd.f32 0.0, %v2380
  %2382 = vmatmul.f32.gmra.mxu0 %v2286
  %v2383 = vpop.f32.mrf.mxu0
  %v2384 = vadd.f32 0.0, %v2383
  %2385 = vmatmul.f32.gmra.mxu0 %v2289
  %v2386 = vpop.f32.mrf.mxu0
  %v2387 = vadd.f32 0.0, %v2386
  %2388 = vmatmul.f32.gmra.mxu0 %v2292
  %v2389 = vpop.f32.mrf.mxu0
  %v2390 = vadd.f32 0.0, %v2389
  %2391 = vmatmul.f32.gmra.mxu0 %v2295
  %v2392 = vpop.f32.mrf.mxu0
  %v2393 = vadd.f32 0.0, %v2392
  %2394 = vdwg.mxu0
  %2395 = vmatpush.msra.mxu0 0.0
  %2396 = vmatpush.msra.mxu0 0.0
  %2397 = vmatpush.msra.mxu0 0.0
  %2398 = vmatpush.msra.mxu0 0.0
  %2399 = vmatpush.msra.mxu0 0.0
  %2400 = vmatpush.msra.mxu0 0.0
  %2401 = vmatpush.msra.mxu0 0.0
  %2402 = vmatpush.msra.mxu0 0.0
  %2403 = vmatpush.msra.mxu0 0.0
  %2404 = vmatpush.msra.mxu0 0.0
  %2405 = vmatpush.msra.mxu0 0.0
  %2406 = vmatpush.msra.mxu0 0.0
  %2407 = vmatpush.msra.mxu0 0.0
  %2408 = vmatpush.msra.mxu0 0.0
  %2409 = vmatpush.msra.mxu0 %v2301
  %2410 = vmatpush.msra.mxu0 %v2217
  %2411 = vmatmul.f32.gmra.mxu0 %v2223
  %v2412 = vpop.f32.mrf.mxu0
  %v2413 = vadd.f32 0.0, %v2412
  %2414 = vmatmul.f32.gmra.mxu0 %v2226
  %v2415 = vpop.f32.mrf.mxu0
  %v2416 = vadd.f32 0.0, %v2415
  %2417 = vmatmul.f32.gmra.mxu0 %v2229
  %v2418 = vpop.f32.mrf.mxu0
  %v2419 = vadd.f32 0.0, %v2418
  %2420 = vmatmul.f32.gmra.mxu0 %v2232
  %v2421 = vpop.f32.mrf.mxu0
  %v2422 = vadd.f32 0.0, %v2421
  %2423 = vmatmul.f32.gmra.mxu0 %v2235
  %v2424 = vpop.f32.mrf.mxu0
  %v2425 = vadd.f32 0.0, %v2424
  %2426 = vmatmul.f32.gmra.mxu0 %v2238
  %v2427 = vpop.f32.mrf.mxu0
  %v2428 = vadd.f32 0.0, %v2427
  %2429 = vmatmul.f32.gmra.mxu0 %v2241
  %v2430 = vpop.f32.mrf.mxu0
  %v2431 = vadd.f32 0.0, %v2430
  %2432 = vmatmul.f32.gmra.mxu0 %v2244
  %v2433 = vpop.f32.mrf.mxu0
  %v2434 = vadd.f32 0.0, %v2433
  %2435 = vmatmul.f32.gmra.mxu0 %v2247
  %v2436 = vpop.f32.mrf.mxu0
  %v2437 = vadd.f32 0.0, %v2436
  %2438 = vmatmul.f32.gmra.mxu0 %v2250
  %v2439 = vpop.f32.mrf.mxu0
  %v2440 = vadd.f32 0.0, %v2439
  %2441 = vmatmul.f32.gmra.mxu0 %v2253
  %v2442 = vpop.f32.mrf.mxu0
  %v2443 = vadd.f32 0.0, %v2442
  %2444 = vmatmul.f32.gmra.mxu0 %v2256
  %v2445 = vpop.f32.mrf.mxu0
  %v2446 = vadd.f32 0.0, %v2445
  %2447 = vmatmul.f32.gmra.mxu0 %v2259
  %v2448 = vpop.f32.mrf.mxu0
  %v2449 = vadd.f32 0.0, %v2448
  %2450 = vmatmul.f32.gmra.mxu0 %v2262
  %v2451 = vpop.f32.mrf.mxu0
  %v2452 = vadd.f32 0.0, %v2451
  %2453 = vmatmul.f32.gmra.mxu0 %v2265
  %v2454 = vpop.f32.mrf.mxu0
  %v2455 = vadd.f32 0.0, %v2454
  %2456 = vmatmul.f32.gmra.mxu0 %v2268
  %v2457 = vpop.f32.mrf.mxu0
  %v2458 = vadd.f32 0.0, %v2457
  %2459 = vmatmul.f32.gmra.mxu0 %v2271
  %v2460 = vpop.f32.mrf.mxu0
  %v2461 = vadd.f32 0.0, %v2460
  %2462 = vmatmul.f32.gmra.mxu0 %v2274
  %v2463 = vpop.f32.mrf.mxu0
  %v2464 = vadd.f32 0.0, %v2463
  %2465 = vmatmul.f32.gmra.mxu0 %v2277
  %v2466 = vpop.f32.mrf.mxu0
  %v2467 = vadd.f32 0.0, %v2466
  %2468 = vmatmul.f32.gmra.mxu0 %v2280
  %v2469 = vpop.f32.mrf.mxu0
  %v2470 = vadd.f32 0.0, %v2469
  %2471 = vmatmul.f32.gmra.mxu0 %v2283
  %v2472 = vpop.f32.mrf.mxu0
  %v2473 = vadd.f32 0.0, %v2472
  %2474 = vmatmul.f32.gmra.mxu0 %v2286
  %v2475 = vpop.f32.mrf.mxu0
  %v2476 = vadd.f32 0.0, %v2475
  %2477 = vmatmul.f32.gmra.mxu0 %v2289
  %v2478 = vpop.f32.mrf.mxu0
  %v2479 = vadd.f32 0.0, %v2478
  %2480 = vmatmul.f32.gmra.mxu0 %v2292
  %v2481 = vpop.f32.mrf.mxu0
  %v2482 = vadd.f32 0.0, %v2481
  %2483 = vmatmul.f32.gmra.mxu0 %v2295
  %v2484 = vpop.f32.mrf.mxu0
  %v2485 = vadd.f32 0.0, %v2484
  %2486 = vdwg.mxu0
  %v2487 = vmax.f32 %v2321, %v2413
  %v2488 = vmax.f32 %v2324, %v2416
  %v2489 = vmax.f32 %v2327, %v2419
  %v2490 = vmax.f32 %v2330, %v2422
  %v2491 = vmax.f32 %v2333, %v2425
  %v2492 = vmax.f32 %v2336, %v2428
  %v2493 = vmax.f32 %v2339, %v2431
  %v2494 = vmax.f32 %v2342, %v2434
  %v2495 = vmax.f32 %v2345, %v2437
  %v2496 = vmax.f32 %v2348, %v2440
  %v2497 = vmax.f32 %v2351, %v2443
  %v2498 = vmax.f32 %v2354, %v2446
  %v2499 = vmax.f32 %v2357, %v2449
  %v2500 = vmax.f32 %v2360, %v2452
  %v2501 = vmax.f32 %v2363, %v2455
  %v2502 = vmax.f32 %v2366, %v2458
  %v2503 = vmax.f32 %v2369, %v2461
  %v2504 = vmax.f32 %v2372, %v2464
  %v2505 = vmax.f32 %v2375, %v2467
  %v2506 = vmax.f32 %v2378, %v2470
  %v2507 = vmax.f32 %v2381, %v2473
  %v2508 = vmax.f32 %v2384, %v2476
  %v2509 = vmax.f32 %v2387, %v2479
  %v2510 = vmax.f32 %v2390, %v2482
  %v2511 = vmax.f32 %v2393, %v2485
  %vm2525 = vcmask 1043456
  %v2526 = vrot.slane %v2499, 4
  %v2527 = vrot.slane %v2500, 4
  %v2528 = vsel %vm2525, %v2526, %v2527
  %v2529 = vrot.slane %v2501, 4
  %v2530 = vsel %vm2525, %v2527, %v2529
  %v2531 = vrot.slane %v2502, 4
  %v2532 = vsel %vm2525, %v2529, %v2531
  %v2533 = vrot.slane %v2503, 4
  %v2534 = vsel %vm2525, %v2531, %v2533
  %v2535 = vrot.slane %v2504, 4
  %v2536 = vsel %vm2525, %v2533, %v2535
  %v2537 = vrot.slane %v2505, 4
  %v2538 = vsel %vm2525, %v2535, %v2537
  %v2539 = vrot.slane %v2506, 4
  %v2540 = vsel %vm2525, %v2537, %v2539
  %v2541 = vrot.slane %v2507, 4
  %v2542 = vsel %vm2525, %v2539, %v2541
  %v2543 = vrot.slane %v2508, 4
  %v2544 = vsel %vm2525, %v2541, %v2543
  %v2545 = vrot.slane %v2509, 4
  %v2546 = vsel %vm2525, %v2543, %v2545
  %v2547 = vrot.slane %v2510, 4
  %v2548 = vsel %vm2525, %v2545, %v2547
  %v2549 = vrot.slane %v2511, 4
  %v2550 = vsel %vm2525, %v2547, %v2549
  %v2564 = vmax.f32 %v2487, %v2528
  %v2565 = vmax.f32 %v2488, %v2530
  %v2566 = vmax.f32 %v2489, %v2532
  %v2567 = vmax.f32 %v2490, %v2534
  %v2568 = vmax.f32 %v2491, %v2536
  %v2569 = vmax.f32 %v2492, %v2538
  %v2570 = vmax.f32 %v2493, %v2540
  %v2571 = vmax.f32 %v2494, %v2542
  %v2572 = vmax.f32 %v2495, %v2544
  %v2573 = vmax.f32 %v2496, %v2546
  %v2574 = vmax.f32 %v2497, %v2548
  %v2575 = vmax.f32 %v2498, %v2550
  %v2576 = vmax.f32 %v2499, %v2549
  %2577 = vst [vmem:[%s15] sm:$0xff] %v2564
  %2578 = vst [vmem:[%s15 + $0x8] sm:$0xff] %v2565
  %2579 = vst [vmem:[%s15 + $0x10] sm:$0xff] %v2566
  %2580 = vst [vmem:[%s15 + $0x18] sm:$0xff] %v2567
  %2581 = vst [vmem:[%s15 + $0x20] sm:$0xff] %v2568
  %2582 = vst [vmem:[%s15 + $0x28] sm:$0xff] %v2569
  %2583 = vst [vmem:[%s15 + $0x30] sm:$0xff] %v2570
  %2584 = vst [vmem:[%s15 + $0x38] sm:$0xff] %v2571
  %2585 = vst [vmem:[%s15 + $0x40] sm:$0xff] %v2572
  %2586 = vst [vmem:[%s15 + $0x48] sm:$0xff] %v2573
  %2587 = vst [vmem:[%s15 + $0x50] sm:$0xff] %v2574
  %2588 = vst [vmem:[%s15 + $0x58] sm:$0xff] %v2575
  %2589 = vst [vmem:[%s15 + $0x60] sm:$0xf] %v2576
  %v2592 = vrot.slane %v2131, 7
  %v2593 = vrot.slane %v2132, 7
  %v2594 = vsel %vm1648, %v2592, %v2593
  %v2595 = vrot.slane %v2133, 7
  %v2596 = vsel %vm1648, %v2593, %v2595
  %v2597 = vsel %vm2163, %v2594, 0
  %v2599 = vsel %vm2163, %v2596, 0
  %2601 = vmatpush.msra.mxu0 0.0
  %2602 = vmatpush.msra.mxu0 0.0
  %2603 = vmatpush.msra.mxu0 0.0
  %2604 = vmatpush.msra.mxu0 0.0
  %2605 = vmatpush.msra.mxu0 0.0
  %2606 = vmatpush.msra.mxu0 0.0
  %2607 = vmatpush.msra.mxu0 0.0
  %2608 = vmatpush.msra.mxu0 0.0
  %2609 = vmatpush.msra.mxu0 0.0
  %2610 = vmatpush.msra.mxu0 0.0
  %2611 = vmatpush.msra.mxu0 0.0
  %2612 = vmatpush.msra.mxu0 0.0
  %2613 = vmatpush.msra.mxu0 0.0
  %2614 = vmatpush.msra.mxu0 0.0
  %2615 = vmatpush.msra.mxu0 %v2171
  %2616 = vmatpush.msra.mxu0 %v2159
  %2617 = vmatmul.f32.gmra.mxu0 %v2597
  %v2618 = vpop.f32.mrf.mxu0
  %v2619 = vadd.f32 0.0, %v2618
  %2620 = vmatmul.f32.gmra.mxu0 %v2599
  %v2621 = vpop.f32.mrf.mxu0
  %v2622 = vadd.f32 0.0, %v2621
  %2623 = vdwg.mxu0
  %2624 = vmatpush.msra.mxu0 0.0
  %2625 = vmatpush.msra.mxu0 0.0
  %2626 = vmatpush.msra.mxu0 0.0
  %2627 = vmatpush.msra.mxu0 0.0
  %2628 = vmatpush.msra.mxu0 0.0
  %2629 = vmatpush.msra.mxu0 0.0
  %2630 = vmatpush.msra.mxu0 0.0
  %2631 = vmatpush.msra.mxu0 0.0
  %2632 = vmatpush.msra.mxu0 0.0
  %2633 = vmatpush.msra.mxu0 0.0
  %2634 = vmatpush.msra.mxu0 0.0
  %2635 = vmatpush.msra.mxu0 0.0
  %2636 = vmatpush.msra.mxu0 0.0
  %2637 = vmatpush.msra.mxu0 0.0
  %2638 = vmatpush.msra.mxu0 %v2174
  %2639 = vmatpush.msra.mxu0 %v2160
  %2640 = vmatmul.f32.gmra.mxu0 %v2597
  %v2641 = vpop.f32.mrf.mxu0
  %v2642 = vadd.f32 0.0, %v2641
  %2643 = vmatmul.f32.gmra.mxu0 %v2599
  %v2644 = vpop.f32.mrf.mxu0
  %v2645 = vadd.f32 0.0, %v2644
  %2646 = vdwg.mxu0
  %v2648 = vsel %vm673, %v2622, 0
  %v2651 = vsel %vm673, %v2645, 0
  %2653 = vmatpush.msra.mxu0 0.0
  %2654 = vmatpush.msra.mxu0 0.0
  %2655 = vmatpush.msra.mxu0 0.0
  %2656 = vmatpush.msra.mxu0 0.0
  %2657 = vmatpush.msra.mxu0 0.0
  %2658 = vmatpush.msra.mxu0 0.0
  %2659 = vmatpush.msra.mxu0 0.0
  %2660 = vmatpush.msra.mxu0 0.0
  %2661 = vmatpush.msra.mxu0 0.0
  %2662 = vmatpush.msra.mxu0 0.0
  %2663 = vmatpush.msra.mxu0 0.0
  %2664 = vmatpush.msra.mxu0 0.0
  %2665 = vmatpush.msra.mxu0 0.0
  %2666 = vmatpush.msra.mxu0 0.0
  %2667 = vmatpush.msra.mxu0 %v2648
  %2668 = vmatpush.msra.mxu0 %v2619
  %2669 = vmatmul.f32.gmra.mxu0 %v2223
  %v2670 = vpop.f32.mrf.mxu0
  %v2671 = vadd.f32 0.0, %v2670
  %2672 = vmatmul.f32.gmra.mxu0 %v2226
  %v2673 = vpop.f32.mrf.mxu0
  %v2674 = vadd.f32 0.0, %v2673
  %2675 = vmatmul.f32.gmra.mxu0 %v2229
  %v2676 = vpop.f32.mrf.mxu0
  %v2677 = vadd.f32 0.0, %v2676
  %2678 = vmatmul.f32.gmra.mxu0 %v2232
  %v2679 = vpop.f32.mrf.mxu0
  %v2680 = vadd.f32 0.0, %v2679
  %2681 = vmatmul.f32.gmra.mxu0 %v2235
  %v2682 = vpop.f32.mrf.mxu0
  %v2683 = vadd.f32 0.0, %v2682
  %2684 = vmatmul.f32.gmra.mxu0 %v2238
  %v2685 = vpop.f32.mrf.mxu0
  %v2686 = vadd.f32 0.0, %v2685
  %2687 = vmatmul.f32.gmra.mxu0 %v2241
  %v2688 = vpop.f32.mrf.mxu0
  %v2689 = vadd.f32 0.0, %v2688
  %2690 = vmatmul.f32.gmra.mxu0 %v2244
  %v2691 = vpop.f32.mrf.mxu0
  %v2692 = vadd.f32 0.0, %v2691
  %2693 = vmatmul.f32.gmra.mxu0 %v2247
  %v2694 = vpop.f32.mrf.mxu0
  %v2695 = vadd.f32 0.0, %v2694
  %2696 = vmatmul.f32.gmra.mxu0 %v2250
  %v2697 = vpop.f32.mrf.mxu0
  %v2698 = vadd.f32 0.0, %v2697
  %2699 = vmatmul.f32.gmra.mxu0 %v2253
  %v2700 = vpop.f32.mrf.mxu0
  %v2701 = vadd.f32 0.0, %v2700
  %2702 = vmatmul.f32.gmra.mxu0 %v2256
  %v2703 = vpop.f32.mrf.mxu0
  %v2704 = vadd.f32 0.0, %v2703
  %2705 = vmatmul.f32.gmra.mxu0 %v2259
  %v2706 = vpop.f32.mrf.mxu0
  %v2707 = vadd.f32 0.0, %v2706
  %2708 = vmatmul.f32.gmra.mxu0 %v2262
  %v2709 = vpop.f32.mrf.mxu0
  %v2710 = vadd.f32 0.0, %v2709
  %2711 = vmatmul.f32.gmra.mxu0 %v2265
  %v2712 = vpop.f32.mrf.mxu0
  %v2713 = vadd.f32 0.0, %v2712
  %2714 = vmatmul.f32.gmra.mxu0 %v2268
  %v2715 = vpop.f32.mrf.mxu0
  %v2716 = vadd.f32 0.0, %v2715
  %2717 = vmatmul.f32.gmra.mxu0 %v2271
  %v2718 = vpop.f32.mrf.mxu0
  %v2719 = vadd.f32 0.0, %v2718
  %2720 = vmatmul.f32.gmra.mxu0 %v2274
  %v2721 = vpop.f32.mrf.mxu0
  %v2722 = vadd.f32 0.0, %v2721
  %2723 = vmatmul.f32.gmra.mxu0 %v2277
  %v2724 = vpop.f32.mrf.mxu0
  %v2725 = vadd.f32 0.0, %v2724
  %2726 = vmatmul.f32.gmra.mxu0 %v2280
  %v2727 = vpop.f32.mrf.mxu0
  %v2728 = vadd.f32 0.0, %v2727
  %2729 = vmatmul.f32.gmra.mxu0 %v2283
  %v2730 = vpop.f32.mrf.mxu0
  %v2731 = vadd.f32 0.0, %v2730
  %2732 = vmatmul.f32.gmra.mxu0 %v2286
  %v2733 = vpop.f32.mrf.mxu0
  %v2734 = vadd.f32 0.0, %v2733
  %2735 = vmatmul.f32.gmra.mxu0 %v2289
  %v2736 = vpop.f32.mrf.mxu0
  %v2737 = vadd.f32 0.0, %v2736
  %2738 = vmatmul.f32.gmra.mxu0 %v2292
  %v2739 = vpop.f32.mrf.mxu0
  %v2740 = vadd.f32 0.0, %v2739
  %2741 = vmatmul.f32.gmra.mxu0 %v2295
  %v2742 = vpop.f32.mrf.mxu0
  %v2743 = vadd.f32 0.0, %v2742
  %2744 = vdwg.mxu0
  %2745 = vmatpush.msra.mxu0 0.0
  %2746 = vmatpush.msra.mxu0 0.0
  %2747 = vmatpush.msra.mxu0 0.0
  %2748 = vmatpush.msra.mxu0 0.0
  %2749 = vmatpush.msra.mxu0 0.0
  %2750 = vmatpush.msra.mxu0 0.0
  %2751 = vmatpush.msra.mxu0 0.0
  %2752 = vmatpush.msra.mxu0 0.0
  %2753 = vmatpush.msra.mxu0 0.0
  %2754 = vmatpush.msra.mxu0 0.0
  %2755 = vmatpush.msra.mxu0 0.0
  %2756 = vmatpush.msra.mxu0 0.0
  %2757 = vmatpush.msra.mxu0 0.0
  %2758 = vmatpush.msra.mxu0 0.0
  %2759 = vmatpush.msra.mxu0 %v2651
  %2760 = vmatpush.msra.mxu0 %v2642
  %2761 = vmatmul.f32.gmra.mxu0 %v2223
  %v2762 = vpop.f32.mrf.mxu0
  %v2763 = vadd.f32 0.0, %v2762
  %2764 = vmatmul.f32.gmra.mxu0 %v2226
  %v2765 = vpop.f32.mrf.mxu0
  %v2766 = vadd.f32 0.0, %v2765
  %2767 = vmatmul.f32.gmra.mxu0 %v2229
  %v2768 = vpop.f32.mrf.mxu0
  %v2769 = vadd.f32 0.0, %v2768
  %2770 = vmatmul.f32.gmra.mxu0 %v2232
  %v2771 = vpop.f32.mrf.mxu0
  %v2772 = vadd.f32 0.0, %v2771
  %2773 = vmatmul.f32.gmra.mxu0 %v2235
  %v2774 = vpop.f32.mrf.mxu0
  %v2775 = vadd.f32 0.0, %v2774
  %2776 = vmatmul.f32.gmra.mxu0 %v2238
  %v2777 = vpop.f32.mrf.mxu0
  %v2778 = vadd.f32 0.0, %v2777
  %2779 = vmatmul.f32.gmra.mxu0 %v2241
  %v2780 = vpop.f32.mrf.mxu0
  %v2781 = vadd.f32 0.0, %v2780
  %2782 = vmatmul.f32.gmra.mxu0 %v2244
  %v2783 = vpop.f32.mrf.mxu0
  %v2784 = vadd.f32 0.0, %v2783
  %2785 = vmatmul.f32.gmra.mxu0 %v2247
  %v2786 = vpop.f32.mrf.mxu0
  %v2787 = vadd.f32 0.0, %v2786
  %2788 = vmatmul.f32.gmra.mxu0 %v2250
  %v2789 = vpop.f32.mrf.mxu0
  %v2790 = vadd.f32 0.0, %v2789
  %2791 = vmatmul.f32.gmra.mxu0 %v2253
  %v2792 = vpop.f32.mrf.mxu0
  %v2793 = vadd.f32 0.0, %v2792
  %2794 = vmatmul.f32.gmra.mxu0 %v2256
  %v2795 = vpop.f32.mrf.mxu0
  %v2796 = vadd.f32 0.0, %v2795
  %2797 = vmatmul.f32.gmra.mxu0 %v2259
  %v2798 = vpop.f32.mrf.mxu0
  %v2799 = vadd.f32 0.0, %v2798
  %2800 = vmatmul.f32.gmra.mxu0 %v2262
  %v2801 = vpop.f32.mrf.mxu0
  %v2802 = vadd.f32 0.0, %v2801
  %2803 = vmatmul.f32.gmra.mxu0 %v2265
  %v2804 = vpop.f32.mrf.mxu0
  %v2805 = vadd.f32 0.0, %v2804
  %2806 = vmatmul.f32.gmra.mxu0 %v2268
  %v2807 = vpop.f32.mrf.mxu0
  %v2808 = vadd.f32 0.0, %v2807
  %2809 = vmatmul.f32.gmra.mxu0 %v2271
  %v2810 = vpop.f32.mrf.mxu0
  %v2811 = vadd.f32 0.0, %v2810
  %2812 = vmatmul.f32.gmra.mxu0 %v2274
  %v2813 = vpop.f32.mrf.mxu0
  %v2814 = vadd.f32 0.0, %v2813
  %2815 = vmatmul.f32.gmra.mxu0 %v2277
  %v2816 = vpop.f32.mrf.mxu0
  %v2817 = vadd.f32 0.0, %v2816
  %2818 = vmatmul.f32.gmra.mxu0 %v2280
  %v2819 = vpop.f32.mrf.mxu0
  %v2820 = vadd.f32 0.0, %v2819
  %2821 = vmatmul.f32.gmra.mxu0 %v2283
  %v2822 = vpop.f32.mrf.mxu0
  %v2823 = vadd.f32 0.0, %v2822
  %2824 = vmatmul.f32.gmra.mxu0 %v2286
  %v2825 = vpop.f32.mrf.mxu0
  %v2826 = vadd.f32 0.0, %v2825
  %2827 = vmatmul.f32.gmra.mxu0 %v2289
  %v2828 = vpop.f32.mrf.mxu0
  %v2829 = vadd.f32 0.0, %v2828
  %2830 = vmatmul.f32.gmra.mxu0 %v2292
  %v2831 = vpop.f32.mrf.mxu0
  %v2832 = vadd.f32 0.0, %v2831
  %2833 = vmatmul.f32.gmra.mxu0 %v2295
  %v2834 = vpop.f32.mrf.mxu0
  %v2835 = vadd.f32 0.0, %v2834
  %2836 = vdwg.mxu0
  %v2837 = vmax.f32 %v2671, %v2763
  %v2838 = vmax.f32 %v2674, %v2766
  %v2839 = vmax.f32 %v2677, %v2769
  %v2840 = vmax.f32 %v2680, %v2772
  %v2841 = vmax.f32 %v2683, %v2775
  %v2842 = vmax.f32 %v2686, %v2778
  %v2843 = vmax.f32 %v2689, %v2781
  %v2844 = vmax.f32 %v2692, %v2784
  %v2845 = vmax.f32 %v2695, %v2787
  %v2846 = vmax.f32 %v2698, %v2790
  %v2847 = vmax.f32 %v2701, %v2793
  %v2848 = vmax.f32 %v2704, %v2796
  %v2849 = vmax.f32 %v2707, %v2799
  %v2850 = vmax.f32 %v2710, %v2802
  %v2851 = vmax.f32 %v2713, %v2805
  %v2852 = vmax.f32 %v2716, %v2808
  %v2853 = vmax.f32 %v2719, %v2811
  %v2854 = vmax.f32 %v2722, %v2814
  %v2855 = vmax.f32 %v2725, %v2817
  %v2856 = vmax.f32 %v2728, %v2820
  %v2857 = vmax.f32 %v2731, %v2823
  %v2858 = vmax.f32 %v2734, %v2826
  %v2859 = vmax.f32 %v2737, %v2829
  %v2860 = vmax.f32 %v2740, %v2832
  %v2861 = vmax.f32 %v2743, %v2835
  %v2875 = vrot.slane %v2849, 4
  %v2876 = vrot.slane %v2850, 4
  %v2877 = vsel %vm2525, %v2875, %v2876
  %v2878 = vrot.slane %v2851, 4
  %v2879 = vsel %vm2525, %v2876, %v2878
  %v2880 = vrot.slane %v2852, 4
  %v2881 = vsel %vm2525, %v2878, %v2880
  %v2882 = vrot.slane %v2853, 4
  %v2883 = vsel %vm2525, %v2880, %v2882
  %v2884 = vrot.slane %v2854, 4
  %v2885 = vsel %vm2525, %v2882, %v2884
  %v2886 = vrot.slane %v2855, 4
  %v2887 = vsel %vm2525, %v2884, %v2886
  %v2888 = vrot.slane %v2856, 4
  %v2889 = vsel %vm2525, %v2886, %v2888
  %v2890 = vrot.slane %v2857, 4
  %v2891 = vsel %vm2525, %v2888, %v2890
  %v2892 = vrot.slane %v2858, 4
  %v2893 = vsel %vm2525, %v2890, %v2892
  %v2894 = vrot.slane %v2859, 4
  %v2895 = vsel %vm2525, %v2892, %v2894
  %v2896 = vrot.slane %v2860, 4
  %v2897 = vsel %vm2525, %v2894, %v2896
  %v2898 = vrot.slane %v2861, 4
  %v2899 = vsel %vm2525, %v2896, %v2898
  %v2913 = vmax.f32 %v2837, %v2877
  %v2914 = vmax.f32 %v2838, %v2879
  %v2915 = vmax.f32 %v2839, %v2881
  %v2916 = vmax.f32 %v2840, %v2883
  %v2917 = vmax.f32 %v2841, %v2885
  %v2918 = vmax.f32 %v2842, %v2887
  %v2919 = vmax.f32 %v2843, %v2889
  %v2920 = vmax.f32 %v2844, %v2891
  %v2921 = vmax.f32 %v2845, %v2893
  %v2922 = vmax.f32 %v2846, %v2895
  %v2923 = vmax.f32 %v2847, %v2897
  %v2924 = vmax.f32 %v2848, %v2899
  %v2925 = vmax.f32 %v2849, %v2898
  %s2926 = scalar_lea.vmem %s15, 104
  %2927 = vst [vmem:[%s2926] sm:$0xff] %v2913
  %2928 = vst [vmem:[%s2926 + $0x8] sm:$0xff] %v2914
  %2929 = vst [vmem:[%s2926 + $0x10] sm:$0xff] %v2915
  %2930 = vst [vmem:[%s2926 + $0x18] sm:$0xff] %v2916
  %2931 = vst [vmem:[%s2926 + $0x20] sm:$0xff] %v2917
  %2932 = vst [vmem:[%s2926 + $0x28] sm:$0xff] %v2918
  %2933 = vst [vmem:[%s2926 + $0x30] sm:$0xff] %v2919
  %2934 = vst [vmem:[%s2926 + $0x38] sm:$0xff] %v2920
  %2935 = vst [vmem:[%s2926 + $0x40] sm:$0xff] %v2921
  %2936 = vst [vmem:[%s2926 + $0x48] sm:$0xff] %v2922
  %2937 = vst [vmem:[%s2926 + $0x50] sm:$0xff] %v2923
  %2938 = vst [vmem:[%s2926 + $0x58] sm:$0xff] %v2924
  %2939 = vst [vmem:[%s2926 + $0x60] sm:$0xf] %v2925
  // Predicated region
  $region62: #{tpu_custom_call.1} parent=0 // pred_check
    _
  $region63: #{tpu_custom_call.1} parent=0 // pred_check_branch
    %2941 = sbr.rel (0) target = $region65
  $region64: #{tpu_custom_call.1} parent=0 // pred_region
    _
  $region65: #{tpu_custom_call.1} parent=0 // pred_fallthru
    _
  // Predicated region
  $region66: #{tpu_custom_call.1} parent=0 // pred_check
    _
  $region67: #{tpu_custom_call.1} parent=0 // pred_check_branch
    %2943 = sbr.rel (0) target = $region69
  $region68: #{tpu_custom_call.1} parent=0 // pred_region
    _
  $region69: #{tpu_custom_call.1} parent=0 // pred_fallthru
    _

</llo_original>
